<compile_context>
chip_gen: v7x
topology: tpu7x:2x2x1
jax: 0.10.0
libtpu: 0.0.40
codegen_flags: <defaults>
</compile_context>

<pallas_src>
import jax
import jax.numpy as jnp
from jax.experimental import pallas as pl
from jax.experimental.pallas import tpu as pltpu


def transition_kernel(x_ref, scale_ref, shift_ref, w_ref, p_ref, o_ref):
    # x_ref:     (1, Cin, R, W)       one row-tile of one batch element (NCHW)
    # scale_ref: (Cin, 1)             folded BN scale  = gamma / sqrt(var + eps)
    # shift_ref: (Cin, 1)             folded BN shift  = beta - mean * scale
    # w_ref:     (Cout, Cin)          1x1 conv weight, 2x2-average 0.25 factor folded in
    # p_ref:     (W, W//2)            0/1 lane-pairing matrix (W-pool done on the MXU)
    # o_ref:     (1, Cout, R//2, W//2)
    rh = x_ref.shape[2] // 2

    scale = scale_ref[...]              # (Cin, 1)   elementwise dtype
    shift = shift_ref[...]
    wmat = w_ref[...]                   # (Cout, Cin) MXU dtype
    pmat = p_ref[...]                   # (W, Wh)     MXU dtype
    ew = scale.dtype

    for r in range(rh):                 # unrolled; rh bounded by the wrapper's tile choice
        x0 = x_ref[0, :, 2 * r, :].astype(ew)        # (Cin, W)  even input row
        x1 = x_ref[0, :, 2 * r + 1, :].astype(ew)    # (Cin, W)  odd  input row
        # BatchNorm (folded affine, per-sublane broadcast) + ReLU, then H-pool (row-pair sum).
        y = (jnp.maximum(x0 * scale + shift, 0.0)
             + jnp.maximum(x1 * scale + shift, 0.0))                       # (Cin, W)
        # W-pool on the MXU: adjacent-lane pairs summed via the 0/1 pairing matrix.
        yp = jnp.dot(y.astype(pmat.dtype), pmat,
                     preferred_element_type=jnp.float32)                   # (Cin, Wh)
        # 1x1 conv == channel-mixing matmul; the /4 average is already folded into wmat.
        z = jnp.dot(wmat, yp.astype(wmat.dtype),
                    preferred_element_type=jnp.float32)                    # (Cout, Wh)
        o_ref[0, :, r, :] = z.astype(o_ref.dtype)


def _pick_row_tile(H, W, Cin, itemsize, batch):
    """Largest legal row tile under a ~6 MiB input-tile budget (safe on v7x's 64 MiB VMEM
    with double buffering), with the (8,128) block rule satisfied, the unrolled per-row
    loop bounded, and >= 2 total grid programs so both v7x TensorCores get work."""
    budget = 6 * 1024 * 1024
    max_out_rows = 64
    cands = []
    for rt in range(2, H + 1, 2):
        if H % rt:
            continue
        if rt != H and rt % 16:
            continue                    # keeps (rt, W) and (rt//2, Wh) block dims /8-aligned
        if rt // 2 > max_out_rows:
            continue
        cands.append(rt)
    if not cands:
        cands = [H]                     # full-extent blocks are always legal
    fitting = [rt for rt in cands if rt * W * Cin * itemsize <= budget]
    rt = max(fitting) if fitting else min(cands)
    if batch * (H // rt) < 2:           # v7x megacore: don't leave a TensorCore idle
        smaller = [c for c in cands if c < rt]
        if smaller:
            rt = max(smaller)
    return rt


def transition_layer(x, gamma, beta, running_mean, running_var, conv_w, eps=1e-5):
    """x: (B, Cin, H, W) NCHW; conv_w: (Cout, Cin, 1, 1). Returns (B, Cout, H//2, W//2) NCHW."""
    B, Cin, H, W = x.shape
    Cout = conv_w.shape[0]
    # TODO(synk): PyTorch AvgPool2d(2,2) silently truncates odd trailing rows/cols; we require even.
    assert H % 2 == 0 and W % 2 == 0, "AvgPool2d(2,2) tiling assumes even H and W"
    Hh, Wh = H // 2, W // 2

    # Elementwise (BN/ReLU/pool-sum) dtype: bf16 inputs stay bf16 (native VALU on v6e/v7x),
    # everything else runs in f32. MXU accumulation is always f32.
    ew_dtype = jnp.bfloat16 if x.dtype == jnp.bfloat16 else jnp.float32
    mxu_dtype = ew_dtype

    # Inference-mode BN folded to per-channel scale/shift (applied per-sublane in-kernel).
    inv_std = 1.0 / jnp.sqrt(running_var.astype(jnp.float32) + eps)
    scale_f32 = gamma.astype(jnp.float32) * inv_std
    shift_f32 = beta.astype(jnp.float32) - running_mean.astype(jnp.float32) * scale_f32
    scale = scale_f32.reshape(Cin, 1).astype(ew_dtype)
    shift = shift_f32.reshape(Cin, 1).astype(ew_dtype)

    # 1x1 conv weight as (Cout, Cin) with the 2x2-average 0.25 factor folded in.
    w = (conv_w.reshape(Cout, Cin).astype(jnp.float32) * 0.25).astype(mxu_dtype)

    # 0/1 lane-pairing matrix: the W-pool becomes a matmul (exact in any MXU dtype).
    cols = jnp.arange(Wh)
    pool = jnp.zeros((W, Wh), jnp.float32)
    pool = pool.at[2 * cols, cols].set(1.0).at[2 * cols + 1, cols].set(1.0)
    pool = pool.astype(mxu_dtype)

    itemsize = jnp.dtype(x.dtype).itemsize
    row_tile = _pick_row_tile(H, W, Cin, itemsize, B)
    n_row_tiles = H // row_tile

    # VMEM ceiling re-derived from the actual consumers (2x in + 2x out buffers + params),
    # kept well under v7x's 64 MiB per-TensorCore VMEM.
    in_tile_bytes = row_tile * W * Cin * itemsize
    out_tile_bytes = (row_tile // 2) * Wh * Cout * itemsize
    vmem_limit = min(48 * 1024 * 1024,
                     max(16 * 1024 * 1024,
                         2 * in_tile_bytes + 2 * out_tile_bytes + (8 << 20)))

    cost = pl.CostEstimate(
        flops=int(2 * B * Hh * Cin * W * Wh          # W-pool matmul
                  + 2 * B * Hh * Wh * Cin * Cout     # 1x1 conv matmul
                  + 4 * B * Cin * H * W),            # BN / ReLU / H-pool elementwise
        transcendentals=0,
        bytes_accessed=int((B * Cin * H * W + B * Cout * Hh * Wh) * itemsize),
    )

    return pl.pallas_call(
        transition_kernel,
        out_shape=jax.ShapeDtypeStruct((B, Cout, Hh, Wh), x.dtype),
        grid_spec=pltpu.PrefetchScalarGridSpec(
            num_scalar_prefetch=0,
            grid=(B, n_row_tiles),
            in_specs=[
                pl.BlockSpec((1, Cin, row_tile, W), lambda b, r: (b, 0, r, 0)),
                # BN params / weights / pooling matrix: constant index maps -> VMEM-resident.
                pl.BlockSpec((Cin, 1), lambda b, r: (0, 0)),
                pl.BlockSpec((Cin, 1), lambda b, r: (0, 0)),
                pl.BlockSpec((Cout, Cin), lambda b, r: (0, 0)),
                pl.BlockSpec((W, Wh), lambda b, r: (0, 0)),
            ],
            out_specs=pl.BlockSpec((1, Cout, row_tile // 2, Wh),
                                   lambda b, r: (b, 0, r, 0)),
        ),
        compiler_params=pltpu.CompilerParams(
            dimension_semantics=("parallel", "parallel"),
            vmem_limit_bytes=int(vmem_limit)),
        cost_estimate=cost,
    )(x, scale, shift, w, pool)


def reference(x, gamma, beta, mean, var, conv_w, eps=1e-5):
    """Plain-JAX reference of the PyTorch forward (NCHW, eval-mode BN)."""
    B, Cin, H, W = x.shape
    Cout = conv_w.shape[0]
    y = (x - mean[None, :, None, None]) / jnp.sqrt(var + eps)[None, :, None, None]
    y = y * gamma[None, :, None, None] + beta[None, :, None, None]
    y = jnp.maximum(y, 0.0)
    z = jnp.einsum('bchw,oc->bohw', y, conv_w.reshape(Cout, Cin))
    return z.reshape(B, Cout, H // 2, 2, W // 2, 2).mean(axis=(3, 5))


if __name__ == "__main__":
    B, Cin, Cout, H, W = 2, 16, 8, 16, 16

    key = jax.random.PRNGKey(0)
    kx, kg, kb, km, kv, kw = jax.random.split(key, 6)

    x = jax.random.normal(kx, (B, Cin, H, W), dtype=jnp.float32)
    gamma = 1.0 + 0.1 * jax.random.normal(kg, (Cin,), dtype=jnp.float32)
    beta = 0.1 * jax.random.normal(kb, (Cin,), dtype=jnp.float32)
    running_mean = 0.1 * jax.random.normal(km, (Cin,), dtype=jnp.float32)
    running_var = jax.random.uniform(kv, (Cin,), dtype=jnp.float32,
                                     minval=0.5, maxval=1.5)
    conv_w = jax.random.normal(kw, (Cout, Cin, 1, 1), dtype=jnp.float32) / jnp.sqrt(Cin)

    out = transition_layer(x, gamma, beta, running_mean, running_var, conv_w)
    out = jax.block_until_ready(out)

    ref = reference(x, gamma, beta, running_mean, running_var, conv_w)
    assert out.shape == (B, Cout, H // 2, W // 2), out.shape
    assert jnp.allclose(out, ref, atol=1e-4, rtol=1e-4), \
        float(jnp.max(jnp.abs(out - ref)))

    print("KERNEL_OK")
</pallas_src>

<mosaic_0001>
module attributes {stable_mosaic.version = 11 : i64} {
  func.func @transition_kernel(%arg0: i32, %arg1: i32, %arg2: memref<1x16x16x16xf32, #tpu.memory_space<vmem>>, %arg3: memref<16x1xf32, #tpu.memory_space<vmem>>, %arg4: memref<16x1xf32, #tpu.memory_space<vmem>>, %arg5: memref<8x16xf32, #tpu.memory_space<vmem>>, %arg6: memref<16x8xf32, #tpu.memory_space<vmem>>, %arg7: memref<1x8x8x8xf32, #tpu.memory_space<vmem>>) attributes {dimension_semantics = [#tpu.dimension_semantics<parallel>, #tpu.dimension_semantics<parallel>], iteration_bounds = array<i64: 2, 1>, scalar_prefetch = 0 : i64, scratch_operands = 0 : i64, tpu.core_type = #tpu.core_type<tc>, window_params = [{transform_indices = @transform_0, window_bounds = array<i64: 1, 16, 16, 16>}, {pipeline_mode = #tpu.pipeline_mode<synchronous>, transform_indices = @transform_1, window_bounds = array<i64: 16, 1>}, {pipeline_mode = #tpu.pipeline_mode<synchronous>, transform_indices = @transform_2, window_bounds = array<i64: 16, 1>}, {pipeline_mode = #tpu.pipeline_mode<synchronous>, transform_indices = @transform_3, window_bounds = array<i64: 8, 16>}, {pipeline_mode = #tpu.pipeline_mode<synchronous>, transform_indices = @transform_4, window_bounds = array<i64: 16, 8>}, {transform_indices = @transform_5, window_bounds = array<i64: 1, 8, 8, 8>}]} {
    %c0 = arith.constant 0 : index
    %c0_0 = arith.constant 0 : index
    %0 = vector.load %arg3[%c0, %c0_0] : memref<16x1xf32, #tpu.memory_space<vmem>>, vector<16x1xf32>
    %c0_1 = arith.constant 0 : index
    %c0_2 = arith.constant 0 : index
    %1 = vector.load %arg4[%c0_1, %c0_2] : memref<16x1xf32, #tpu.memory_space<vmem>>, vector<16x1xf32>
    %c0_3 = arith.constant 0 : index
    %c0_4 = arith.constant 0 : index
    %2 = vector.load %arg5[%c0_3, %c0_4] : memref<8x16xf32, #tpu.memory_space<vmem>>, vector<8x16xf32>
    %c0_5 = arith.constant 0 : index
    %c0_6 = arith.constant 0 : index
    %3 = vector.load %arg6[%c0_5, %c0_6] : memref<16x8xf32, #tpu.memory_space<vmem>>, vector<16x8xf32>
    %c0_7 = arith.constant 0 : index
    %c0_8 = arith.constant 0 : index
    %c0_9 = arith.constant 0 : index
    %c0_10 = arith.constant 0 : index
    %4 = vector.load %arg2[%c0_7, %c0_8, %c0_9, %c0_10] : memref<1x16x16x16xf32, #tpu.memory_space<vmem>>, vector<1x16x1x16xf32>
    %5 = vector.shape_cast %4 : vector<1x16x1x16xf32> to vector<16x16xf32>
    %c0_11 = arith.constant 0 : index
    %c0_12 = arith.constant 0 : index
    %c1 = arith.constant 1 : index
    %c0_13 = arith.constant 0 : index
    %6 = vector.load %arg2[%c0_11, %c0_12, %c1, %c0_13] : memref<1x16x16x16xf32, #tpu.memory_space<vmem>>, vector<1x16x1x16xf32>
    %7 = vector.shape_cast %6 : vector<1x16x1x16xf32> to vector<16x16xf32>
    %8 = vector.broadcast %0 : vector<16x1xf32> to vector<16x16xf32>
    %9 = arith.mulf %5, %8 : vector<16x16xf32>
    %10 = vector.broadcast %1 : vector<16x1xf32> to vector<16x16xf32>
    %11 = arith.addf %9, %10 : vector<16x16xf32>
    %cst = arith.constant 0.000000e+00 : f32
    %12 = vector.broadcast %cst : f32 to vector<16x16xf32>
    %13 = arith.maximumf %11, %12 : vector<16x16xf32>
    %14 = vector.broadcast %0 : vector<16x1xf32> to vector<16x16xf32>
    %15 = arith.mulf %7, %14 : vector<16x16xf32>
    %16 = vector.broadcast %1 : vector<16x1xf32> to vector<16x16xf32>
    %17 = arith.addf %15, %16 : vector<16x16xf32>
    %cst_14 = arith.constant 0.000000e+00 : f32
    %18 = vector.broadcast %cst_14 : f32 to vector<16x16xf32>
    %19 = arith.maximumf %17, %18 : vector<16x16xf32>
    %20 = arith.addf %13, %19 : vector<16x16xf32>
    %cst_15 = arith.constant dense<0.000000e+00> : vector<16x8xf32>
    %21 = tpu.matmul %20, %3, %cst_15 {dimension_numbers = #tpu.dot_dimension_numbers<[1], [0], [0], [1], [0, 0, 1, 1], [], []>} : vector<16x16xf32>, vector<16x8xf32>, vector<16x8xf32> -> vector<16x8xf32>
    %cst_16 = arith.constant dense<0.000000e+00> : vector<8x8xf32>
    %22 = tpu.matmul %2, %21, %cst_16 {dimension_numbers = #tpu.dot_dimension_numbers<[1], [0], [0], [1], [0, 0, 1, 1], [], []>} : vector<8x16xf32>, vector<16x8xf32>, vector<8x8xf32> -> vector<8x8xf32>
    %c0_17 = arith.constant 0 : index
    %c0_18 = arith.constant 0 : index
    %c0_19 = arith.constant 0 : index
    %c0_20 = arith.constant 0 : index
    %23 = vector.load %arg7[%c0_17, %c0_18, %c0_19, %c0_20] : memref<1x8x8x8xf32, #tpu.memory_space<vmem>>, vector<1x8x1x8xf32>
    %24 = vector.shape_cast %23 : vector<1x8x1x8xf32> to vector<8x8xf32>
    %25 = vector.shape_cast %22 : vector<8x8xf32> to vector<1x8x1x8xf32>
    tpu.vector_store %arg7[%c0_17, %c0_18, %c0_19, %c0_20], %25 {strides = array<i32>} : memref<1x8x8x8xf32, #tpu.memory_space<vmem>>, vector<1x8x1x8xf32>,
    %c0_21 = arith.constant 0 : index
    %c0_22 = arith.constant 0 : index
    %c2 = arith.constant 2 : index
    %c0_23 = arith.constant 0 : index
    %26 = vector.load %arg2[%c0_21, %c0_22, %c2, %c0_23] : memref<1x16x16x16xf32, #tpu.memory_space<vmem>>, vector<1x16x1x16xf32>
    %27 = vector.shape_cast %26 : vector<1x16x1x16xf32> to vector<16x16xf32>
    %c0_24 = arith.constant 0 : index
    %c0_25 = arith.constant 0 : index
    %c3 = arith.constant 3 : index
    %c0_26 = arith.constant 0 : index
    %28 = vector.load %arg2[%c0_24, %c0_25, %c3, %c0_26] : memref<1x16x16x16xf32, #tpu.memory_space<vmem>>, vector<1x16x1x16xf32>
    %29 = vector.shape_cast %28 : vector<1x16x1x16xf32> to vector<16x16xf32>
    %30 = vector.broadcast %0 : vector<16x1xf32> to vector<16x16xf32>
    %31 = arith.mulf %27, %30 : vector<16x16xf32>
    %32 = vector.broadcast %1 : vector<16x1xf32> to vector<16x16xf32>
    %33 = arith.addf %31, %32 : vector<16x16xf32>
    %cst_27 = arith.constant 0.000000e+00 : f32
    %34 = vector.broadcast %cst_27 : f32 to vector<16x16xf32>
    %35 = arith.maximumf %33, %34 : vector<16x16xf32>
    %36 = vector.broadcast %0 : vector<16x1xf32> to vector<16x16xf32>
    %37 = arith.mulf %29, %36 : vector<16x16xf32>
    %38 = vector.broadcast %1 : vector<16x1xf32> to vector<16x16xf32>
    %39 = arith.addf %37, %38 : vector<16x16xf32>
    %cst_28 = arith.constant 0.000000e+00 : f32
    %40 = vector.broadcast %cst_28 : f32 to vector<16x16xf32>
    %41 = arith.maximumf %39, %40 : vector<16x16xf32>
    %42 = arith.addf %35, %41 : vector<16x16xf32>
    %cst_29 = arith.constant dense<0.000000e+00> : vector<16x8xf32>
    %43 = tpu.matmul %42, %3, %cst_29 {dimension_numbers = #tpu.dot_dimension_numbers<[1], [0], [0], [1], [0, 0, 1, 1], [], []>} : vector<16x16xf32>, vector<16x8xf32>, vector<16x8xf32> -> vector<16x8xf32>
    %cst_30 = arith.constant dense<0.000000e+00> : vector<8x8xf32>
    %44 = tpu.matmul %2, %43, %cst_30 {dimension_numbers = #tpu.dot_dimension_numbers<[1], [0], [0], [1], [0, 0, 1, 1], [], []>} : vector<8x16xf32>, vector<16x8xf32>, vector<8x8xf32> -> vector<8x8xf32>
    %c0_31 = arith.constant 0 : index
    %c0_32 = arith.constant 0 : index
    %c1_33 = arith.constant 1 : index
    %c0_34 = arith.constant 0 : index
    %45 = vector.load %arg7[%c0_31, %c0_32, %c1_33, %c0_34] : memref<1x8x8x8xf32, #tpu.memory_space<vmem>>, vector<1x8x1x8xf32>
    %46 = vector.shape_cast %45 : vector<1x8x1x8xf32> to vector<8x8xf32>
    %47 = vector.shape_cast %44 : vector<8x8xf32> to vector<1x8x1x8xf32>
    tpu.vector_store %arg7[%c0_31, %c0_32, %c1_33, %c0_34], %47 {strides = array<i32>} : memref<1x8x8x8xf32, #tpu.memory_space<vmem>>, vector<1x8x1x8xf32>,
    %c0_35 = arith.constant 0 : index
    %c0_36 = arith.constant 0 : index
    %c4 = arith.constant 4 : index
    %c0_37 = arith.constant 0 : index
    %48 = vector.load %arg2[%c0_35, %c0_36, %c4, %c0_37] : memref<1x16x16x16xf32, #tpu.memory_space<vmem>>, vector<1x16x1x16xf32>
    %49 = vector.shape_cast %48 : vector<1x16x1x16xf32> to vector<16x16xf32>
    %c0_38 = arith.constant 0 : index
    %c0_39 = arith.constant 0 : index
    %c5 = arith.constant 5 : index
    %c0_40 = arith.constant 0 : index
    %50 = vector.load %arg2[%c0_38, %c0_39, %c5, %c0_40] : memref<1x16x16x16xf32, #tpu.memory_space<vmem>>, vector<1x16x1x16xf32>
    %51 = vector.shape_cast %50 : vector<1x16x1x16xf32> to vector<16x16xf32>
    %52 = vector.broadcast %0 : vector<16x1xf32> to vector<16x16xf32>
    %53 = arith.mulf %49, %52 : vector<16x16xf32>
    %54 = vector.broadcast %1 : vector<16x1xf32> to vector<16x16xf32>
    %55 = arith.addf %53, %54 : vector<16x16xf32>
    %cst_41 = arith.constant 0.000000e+00 : f32
    %56 = vector.broadcast %cst_41 : f32 to vector<16x16xf32>
    %57 = arith.maximumf %55, %56 : vector<16x16xf32>
    %58 = vector.broadcast %0 : vector<16x1xf32> to vector<16x16xf32>
    %59 = arith.mulf %51, %58 : vector<16x16xf32>
    %60 = vector.broadcast %1 : vector<16x1xf32> to vector<16x16xf32>
    %61 = arith.addf %59, %60 : vector<16x16xf32>
    %cst_42 = arith.constant 0.000000e+00 : f32
    %62 = vector.broadcast %cst_42 : f32 to vector<16x16xf32>
    %63 = arith.maximumf %61, %62 : vector<16x16xf32>
    %64 = arith.addf %57, %63 : vector<16x16xf32>
    %cst_43 = arith.constant dense<0.000000e+00> : vector<16x8xf32>
    %65 = tpu.matmul %64, %3, %cst_43 {dimension_numbers = #tpu.dot_dimension_numbers<[1], [0], [0], [1], [0, 0, 1, 1], [], []>} : vector<16x16xf32>, vector<16x8xf32>, vector<16x8xf32> -> vector<16x8xf32>
    %cst_44 = arith.constant dense<0.000000e+00> : vector<8x8xf32>
    %66 = tpu.matmul %2, %65, %cst_44 {dimension_numbers = #tpu.dot_dimension_numbers<[1], [0], [0], [1], [0, 0, 1, 1], [], []>} : vector<8x16xf32>, vector<16x8xf32>, vector<8x8xf32> -> vector<8x8xf32>
    %c0_45 = arith.constant 0 : index
    %c0_46 = arith.constant 0 : index
    %c2_47 = arith.constant 2 : index
    %c0_48 = arith.constant 0 : index
    %67 = vector.load %arg7[%c0_45, %c0_46, %c2_47, %c0_48] : memref<1x8x8x8xf32, #tpu.memory_space<vmem>>, vector<1x8x1x8xf32>
    %68 = vector.shape_cast %67 : vector<1x8x1x8xf32> to vector<8x8xf32>
    %69 = vector.shape_cast %66 : vector<8x8xf32> to vector<1x8x1x8xf32>
    tpu.vector_store %arg7[%c0_45, %c0_46, %c2_47, %c0_48], %69 {strides = array<i32>} : memref<1x8x8x8xf32, #tpu.memory_space<vmem>>, vector<1x8x1x8xf32>,
    %c0_49 = arith.constant 0 : index
    %c0_50 = arith.constant 0 : index
    %c6 = arith.constant 6 : index
    %c0_51 = arith.constant 0 : index
    %70 = vector.load %arg2[%c0_49, %c0_50, %c6, %c0_51] : memref<1x16x16x16xf32, #tpu.memory_space<vmem>>, vector<1x16x1x16xf32>
    %71 = vector.shape_cast %70 : vector<1x16x1x16xf32> to vector<16x16xf32>
    %c0_52 = arith.constant 0 : index
    %c0_53 = arith.constant 0 : index
    %c7 = arith.constant 7 : index
    %c0_54 = arith.constant 0 : index
    %72 = vector.load %arg2[%c0_52, %c0_53, %c7, %c0_54] : memref<1x16x16x16xf32, #tpu.memory_space<vmem>>, vector<1x16x1x16xf32>
    %73 = vector.shape_cast %72 : vector<1x16x1x16xf32> to vector<16x16xf32>
    %74 = vector.broadcast %0 : vector<16x1xf32> to vector<16x16xf32>
    %75 = arith.mulf %71, %74 : vector<16x16xf32>
    %76 = vector.broadcast %1 : vector<16x1xf32> to vector<16x16xf32>
    %77 = arith.addf %75, %76 : vector<16x16xf32>
    %cst_55 = arith.constant 0.000000e+00 : f32
    %78 = vector.broadcast %cst_55 : f32 to vector<16x16xf32>
    %79 = arith.maximumf %77, %78 : vector<16x16xf32>
    %80 = vector.broadcast %0 : vector<16x1xf32> to vector<16x16xf32>
    %81 = arith.mulf %73, %80 : vector<16x16xf32>
    %82 = vector.broadcast %1 : vector<16x1xf32> to vector<16x16xf32>
    %83 = arith.addf %81, %82 : vector<16x16xf32>
    %cst_56 = arith.constant 0.000000e+00 : f32
    %84 = vector.broadcast %cst_56 : f32 to vector<16x16xf32>
    %85 = arith.maximumf %83, %84 : vector<16x16xf32>
    %86 = arith.addf %79, %85 : vector<16x16xf32>
    %cst_57 = arith.constant dense<0.000000e+00> : vector<16x8xf32>
    %87 = tpu.matmul %86, %3, %cst_57 {dimension_numbers = #tpu.dot_dimension_numbers<[1], [0], [0], [1], [0, 0, 1, 1], [], []>} : vector<16x16xf32>, vector<16x8xf32>, vector<16x8xf32> -> vector<16x8xf32>
    %cst_58 = arith.constant dense<0.000000e+00> : vector<8x8xf32>
    %88 = tpu.matmul %2, %87, %cst_58 {dimension_numbers = #tpu.dot_dimension_numbers<[1], [0], [0], [1], [0, 0, 1, 1], [], []>} : vector<8x16xf32>, vector<16x8xf32>, vector<8x8xf32> -> vector<8x8xf32>
    %c0_59 = arith.constant 0 : index
    %c0_60 = arith.constant 0 : index
    %c3_61 = arith.constant 3 : index
    %c0_62 = arith.constant 0 : index
    %89 = vector.load %arg7[%c0_59, %c0_60, %c3_61, %c0_62] : memref<1x8x8x8xf32, #tpu.memory_space<vmem>>, vector<1x8x1x8xf32>
    %90 = vector.shape_cast %89 : vector<1x8x1x8xf32> to vector<8x8xf32>
    %91 = vector.shape_cast %88 : vector<8x8xf32> to vector<1x8x1x8xf32>
    tpu.vector_store %arg7[%c0_59, %c0_60, %c3_61, %c0_62], %91 {strides = array<i32>} : memref<1x8x8x8xf32, #tpu.memory_space<vmem>>, vector<1x8x1x8xf32>,
    %c0_63 = arith.constant 0 : index
    %c0_64 = arith.constant 0 : index
    %c8 = arith.constant 8 : index
    %c0_65 = arith.constant 0 : index
    %92 = vector.load %arg2[%c0_63, %c0_64, %c8, %c0_65] : memref<1x16x16x16xf32, #tpu.memory_space<vmem>>, vector<1x16x1x16xf32>
    %93 = vector.shape_cast %92 : vector<1x16x1x16xf32> to vector<16x16xf32>
    %c0_66 = arith.constant 0 : index
    %c0_67 = arith.constant 0 : index
    %c9 = arith.constant 9 : index
    %c0_68 = arith.constant 0 : index
    %94 = vector.load %arg2[%c0_66, %c0_67, %c9, %c0_68] : memref<1x16x16x16xf32, #tpu.memory_space<vmem>>, vector<1x16x1x16xf32>
    %95 = vector.shape_cast %94 : vector<1x16x1x16xf32> to vector<16x16xf32>
    %96 = vector.broadcast %0 : vector<16x1xf32> to vector<16x16xf32>
    %97 = arith.mulf %93, %96 : vector<16x16xf32>
    %98 = vector.broadcast %1 : vector<16x1xf32> to vector<16x16xf32>
    %99 = arith.addf %97, %98 : vector<16x16xf32>
    %cst_69 = arith.constant 0.000000e+00 : f32
    %100 = vector.broadcast %cst_69 : f32 to vector<16x16xf32>
    %101 = arith.maximumf %99, %100 : vector<16x16xf32>
    %102 = vector.broadcast %0 : vector<16x1xf32> to vector<16x16xf32>
    %103 = arith.mulf %95, %102 : vector<16x16xf32>
    %104 = vector.broadcast %1 : vector<16x1xf32> to vector<16x16xf32>
    %105 = arith.addf %103, %104 : vector<16x16xf32>
    %cst_70 = arith.constant 0.000000e+00 : f32
    %106 = vector.broadcast %cst_70 : f32 to vector<16x16xf32>
    %107 = arith.maximumf %105, %106 : vector<16x16xf32>
    %108 = arith.addf %101, %107 : vector<16x16xf32>
    %cst_71 = arith.constant dense<0.000000e+00> : vector<16x8xf32>
    %109 = tpu.matmul %108, %3, %cst_71 {dimension_numbers = #tpu.dot_dimension_numbers<[1], [0], [0], [1], [0, 0, 1, 1], [], []>} : vector<16x16xf32>, vector<16x8xf32>, vector<16x8xf32> -> vector<16x8xf32>
    %cst_72 = arith.constant dense<0.000000e+00> : vector<8x8xf32>
    %110 = tpu.matmul %2, %109, %cst_72 {dimension_numbers = #tpu.dot_dimension_numbers<[1], [0], [0], [1], [0, 0, 1, 1], [], []>} : vector<8x16xf32>, vector<16x8xf32>, vector<8x8xf32> -> vector<8x8xf32>
    %c0_73 = arith.constant 0 : index
    %c0_74 = arith.constant 0 : index
    %c4_75 = arith.constant 4 : index
    %c0_76 = arith.constant 0 : index
    %111 = vector.load %arg7[%c0_73, %c0_74, %c4_75, %c0_76] : memref<1x8x8x8xf32, #tpu.memory_space<vmem>>, vector<1x8x1x8xf32>
    %112 = vector.shape_cast %111 : vector<1x8x1x8xf32> to vector<8x8xf32>
    %113 = vector.shape_cast %110 : vector<8x8xf32> to vector<1x8x1x8xf32>
    tpu.vector_store %arg7[%c0_73, %c0_74, %c4_75, %c0_76], %113 {strides = array<i32>} : memref<1x8x8x8xf32, #tpu.memory_space<vmem>>, vector<1x8x1x8xf32>,
    %c0_77 = arith.constant 0 : index
    %c0_78 = arith.constant 0 : index
    %c10 = arith.constant 10 : index
    %c0_79 = arith.constant 0 : index
    %114 = vector.load %arg2[%c0_77, %c0_78, %c10, %c0_79] : memref<1x16x16x16xf32, #tpu.memory_space<vmem>>, vector<1x16x1x16xf32>
    %115 = vector.shape_cast %114 : vector<1x16x1x16xf32> to vector<16x16xf32>
    %c0_80 = arith.constant 0 : index
    %c0_81 = arith.constant 0 : index
    %c11 = arith.constant 11 : index
    %c0_82 = arith.constant 0 : index
    %116 = vector.load %arg2[%c0_80, %c0_81, %c11, %c0_82] : memref<1x16x16x16xf32, #tpu.memory_space<vmem>>, vector<1x16x1x16xf32>
    %117 = vector.shape_cast %116 : vector<1x16x1x16xf32> to vector<16x16xf32>
    %118 = vector.broadcast %0 : vector<16x1xf32> to vector<16x16xf32>
    %119 = arith.mulf %115, %118 : vector<16x16xf32>
    %120 = vector.broadcast %1 : vector<16x1xf32> to vector<16x16xf32>
    %121 = arith.addf %119, %120 : vector<16x16xf32>
    %cst_83 = arith.constant 0.000000e+00 : f32
    %122 = vector.broadcast %cst_83 : f32 to vector<16x16xf32>
    %123 = arith.maximumf %121, %122 : vector<16x16xf32>
    %124 = vector.broadcast %0 : vector<16x1xf32> to vector<16x16xf32>
    %125 = arith.mulf %117, %124 : vector<16x16xf32>
    %126 = vector.broadcast %1 : vector<16x1xf32> to vector<16x16xf32>
    %127 = arith.addf %125, %126 : vector<16x16xf32>
    %cst_84 = arith.constant 0.000000e+00 : f32
    %128 = vector.broadcast %cst_84 : f32 to vector<16x16xf32>
    %129 = arith.maximumf %127, %128 : vector<16x16xf32>
    %130 = arith.addf %123, %129 : vector<16x16xf32>
    %cst_85 = arith.constant dense<0.000000e+00> : vector<16x8xf32>
    %131 = tpu.matmul %130, %3, %cst_85 {dimension_numbers = #tpu.dot_dimension_numbers<[1], [0], [0], [1], [0, 0, 1, 1], [], []>} : vector<16x16xf32>, vector<16x8xf32>, vector<16x8xf32> -> vector<16x8xf32>
    %cst_86 = arith.constant dense<0.000000e+00> : vector<8x8xf32>
    %132 = tpu.matmul %2, %131, %cst_86 {dimension_numbers = #tpu.dot_dimension_numbers<[1], [0], [0], [1], [0, 0, 1, 1], [], []>} : vector<8x16xf32>, vector<16x8xf32>, vector<8x8xf32> -> vector<8x8xf32>
    %c0_87 = arith.constant 0 : index
    %c0_88 = arith.constant 0 : index
    %c5_89 = arith.constant 5 : index
    %c0_90 = arith.constant 0 : index
    %133 = vector.load %arg7[%c0_87, %c0_88, %c5_89, %c0_90] : memref<1x8x8x8xf32, #tpu.memory_space<vmem>>, vector<1x8x1x8xf32>
    %134 = vector.shape_cast %133 : vector<1x8x1x8xf32> to vector<8x8xf32>
    %135 = vector.shape_cast %132 : vector<8x8xf32> to vector<1x8x1x8xf32>
    tpu.vector_store %arg7[%c0_87, %c0_88, %c5_89, %c0_90], %135 {strides = array<i32>} : memref<1x8x8x8xf32, #tpu.memory_space<vmem>>, vector<1x8x1x8xf32>,
    %c0_91 = arith.constant 0 : index
    %c0_92 = arith.constant 0 : index
    %c12 = arith.constant 12 : index
    %c0_93 = arith.constant 0 : index
    %136 = vector.load %arg2[%c0_91, %c0_92, %c12, %c0_93] : memref<1x16x16x16xf32, #tpu.memory_space<vmem>>, vector<1x16x1x16xf32>
    %137 = vector.shape_cast %136 : vector<1x16x1x16xf32> to vector<16x16xf32>
    %c0_94 = arith.constant 0 : index
    %c0_95 = arith.constant 0 : index
    %c13 = arith.constant 13 : index
    %c0_96 = arith.constant 0 : index
    %138 = vector.load %arg2[%c0_94, %c0_95, %c13, %c0_96] : memref<1x16x16x16xf32, #tpu.memory_space<vmem>>, vector<1x16x1x16xf32>
    %139 = vector.shape_cast %138 : vector<1x16x1x16xf32> to vector<16x16xf32>
    %140 = vector.broadcast %0 : vector<16x1xf32> to vector<16x16xf32>
    %141 = arith.mulf %137, %140 : vector<16x16xf32>
    %142 = vector.broadcast %1 : vector<16x1xf32> to vector<16x16xf32>
    %143 = arith.addf %141, %142 : vector<16x16xf32>
    %cst_97 = arith.constant 0.000000e+00 : f32
    %144 = vector.broadcast %cst_97 : f32 to vector<16x16xf32>
    %145 = arith.maximumf %143, %144 : vector<16x16xf32>
    %146 = vector.broadcast %0 : vector<16x1xf32> to vector<16x16xf32>
    %147 = arith.mulf %139, %146 : vector<16x16xf32>
    %148 = vector.broadcast %1 : vector<16x1xf32> to vector<16x16xf32>
    %149 = arith.addf %147, %148 : vector<16x16xf32>
    %cst_98 = arith.constant 0.000000e+00 : f32
    %150 = vector.broadcast %cst_98 : f32 to vector<16x16xf32>
    %151 = arith.maximumf %149, %150 : vector<16x16xf32>
    %152 = arith.addf %145, %151 : vector<16x16xf32>
    %cst_99 = arith.constant dense<0.000000e+00> : vector<16x8xf32>
    %153 = tpu.matmul %152, %3, %cst_99 {dimension_numbers = #tpu.dot_dimension_numbers<[1], [0], [0], [1], [0, 0, 1, 1], [], []>} : vector<16x16xf32>, vector<16x8xf32>, vector<16x8xf32> -> vector<16x8xf32>
    %cst_100 = arith.constant dense<0.000000e+00> : vector<8x8xf32>
    %154 = tpu.matmul %2, %153, %cst_100 {dimension_numbers = #tpu.dot_dimension_numbers<[1], [0], [0], [1], [0, 0, 1, 1], [], []>} : vector<8x16xf32>, vector<16x8xf32>, vector<8x8xf32> -> vector<8x8xf32>
    %c0_101 = arith.constant 0 : index
    %c0_102 = arith.constant 0 : index
    %c6_103 = arith.constant 6 : index
    %c0_104 = arith.constant 0 : index
    %155 = vector.load %arg7[%c0_101, %c0_102, %c6_103, %c0_104] : memref<1x8x8x8xf32, #tpu.memory_space<vmem>>, vector<1x8x1x8xf32>
    %156 = vector.shape_cast %155 : vector<1x8x1x8xf32> to vector<8x8xf32>
    %157 = vector.shape_cast %154 : vector<8x8xf32> to vector<1x8x1x8xf32>
    tpu.vector_store %arg7[%c0_101, %c0_102, %c6_103, %c0_104], %157 {strides = array<i32>} : memref<1x8x8x8xf32, #tpu.memory_space<vmem>>, vector<1x8x1x8xf32>,
    %c0_105 = arith.constant 0 : index
    %c0_106 = arith.constant 0 : index
    %c14 = arith.constant 14 : index
    %c0_107 = arith.constant 0 : index
    %158 = vector.load %arg2[%c0_105, %c0_106, %c14, %c0_107] : memref<1x16x16x16xf32, #tpu.memory_space<vmem>>, vector<1x16x1x16xf32>
    %159 = vector.shape_cast %158 : vector<1x16x1x16xf32> to vector<16x16xf32>
    %c0_108 = arith.constant 0 : index
    %c0_109 = arith.constant 0 : index
    %c15 = arith.constant 15 : index
    %c0_110 = arith.constant 0 : index
    %160 = vector.load %arg2[%c0_108, %c0_109, %c15, %c0_110] : memref<1x16x16x16xf32, #tpu.memory_space<vmem>>, vector<1x16x1x16xf32>
    %161 = vector.shape_cast %160 : vector<1x16x1x16xf32> to vector<16x16xf32>
    %162 = vector.broadcast %0 : vector<16x1xf32> to vector<16x16xf32>
    %163 = arith.mulf %159, %162 : vector<16x16xf32>
    %164 = vector.broadcast %1 : vector<16x1xf32> to vector<16x16xf32>
    %165 = arith.addf %163, %164 : vector<16x16xf32>
    %cst_111 = arith.constant 0.000000e+00 : f32
    %166 = vector.broadcast %cst_111 : f32 to vector<16x16xf32>
    %167 = arith.maximumf %165, %166 : vector<16x16xf32>
    %168 = vector.broadcast %0 : vector<16x1xf32> to vector<16x16xf32>
    %169 = arith.mulf %161, %168 : vector<16x16xf32>
    %170 = vector.broadcast %1 : vector<16x1xf32> to vector<16x16xf32>
    %171 = arith.addf %169, %170 : vector<16x16xf32>
    %cst_112 = arith.constant 0.000000e+00 : f32
    %172 = vector.broadcast %cst_112 : f32 to vector<16x16xf32>
    %173 = arith.maximumf %171, %172 : vector<16x16xf32>
    %174 = arith.addf %167, %173 : vector<16x16xf32>
    %cst_113 = arith.constant dense<0.000000e+00> : vector<16x8xf32>
    %175 = tpu.matmul %174, %3, %cst_113 {dimension_numbers = #tpu.dot_dimension_numbers<[1], [0], [0], [1], [0, 0, 1, 1], [], []>} : vector<16x16xf32>, vector<16x8xf32>, vector<16x8xf32> -> vector<16x8xf32>
    %cst_114 = arith.constant dense<0.000000e+00> : vector<8x8xf32>
    %176 = tpu.matmul %2, %175, %cst_114 {dimension_numbers = #tpu.dot_dimension_numbers<[1], [0], [0], [1], [0, 0, 1, 1], [], []>} : vector<8x16xf32>, vector<16x8xf32>, vector<8x8xf32> -> vector<8x8xf32>
    %c0_115 = arith.constant 0 : index
    %c0_116 = arith.constant 0 : index
    %c7_117 = arith.constant 7 : index
    %c0_118 = arith.constant 0 : index
    %177 = vector.load %arg7[%c0_115, %c0_116, %c7_117, %c0_118] : memref<1x8x8x8xf32, #tpu.memory_space<vmem>>, vector<1x8x1x8xf32>
    %178 = vector.shape_cast %177 : vector<1x8x1x8xf32> to vector<8x8xf32>
    %179 = vector.shape_cast %176 : vector<8x8xf32> to vector<1x8x1x8xf32>
    tpu.vector_store %arg7[%c0_115, %c0_116, %c7_117, %c0_118], %179 {strides = array<i32>} : memref<1x8x8x8xf32, #tpu.memory_space<vmem>>, vector<1x8x1x8xf32>,
    return
  }
  func.func @transform_0(%arg0: i32, %arg1: i32) -> (i32, i32, i32, i32) {
    %c0_i32 = arith.constant 0 : i32
    %c0_i32_0 = arith.constant 0 : i32
    %c0_i32_1 = arith.constant 0 : i32
    return %arg0, %c0_i32, %arg1, %c0_i32_0 : i32, i32, i32, i32
  }
  func.func @transform_1(%arg0: i32, %arg1: i32) -> (i32, i32) {
    %c0_i32 = arith.constant 0 : i32
    %c0_i32_0 = arith.constant 0 : i32
    %c0_i32_1 = arith.constant 0 : i32
    return %c0_i32, %c0_i32_0 : i32, i32
  }
  func.func @transform_2(%arg0: i32, %arg1: i32) -> (i32, i32) {
    %c0_i32 = arith.constant 0 : i32
    %c0_i32_0 = arith.constant 0 : i32
    %c0_i32_1 = arith.constant 0 : i32
    return %c0_i32, %c0_i32_0 : i32, i32
  }
  func.func @transform_3(%arg0: i32, %arg1: i32) -> (i32, i32) {
    %c0_i32 = arith.constant 0 : i32
    %c0_i32_0 = arith.constant 0 : i32
    %c0_i32_1 = arith.constant 0 : i32
    return %c0_i32, %c0_i32_0 : i32, i32
  }
  func.func @transform_4(%arg0: i32, %arg1: i32) -> (i32, i32) {
    %c0_i32 = arith.constant 0 : i32
    %c0_i32_0 = arith.constant 0 : i32
    %c0_i32_1 = arith.constant 0 : i32
    return %c0_i32, %c0_i32_0 : i32, i32
  }
  func.func @transform_5(%arg0: i32, %arg1: i32) -> (i32, i32, i32, i32) {
    %c0_i32 = arith.constant 0 : i32
    %c0_i32_0 = arith.constant 0 : i32
    %c0_i32_1 = arith.constant 0 : i32
    return %arg0, %c0_i32, %arg1, %c0_i32_0 : i32, i32, i32, i32
  }
}

</mosaic_0001>

<llo_original>
// kernel: tpu_custom_call.1
$region0: #{tpu_custom_call.1}
  #allocation0 [shape = 'u32[]', space=smem, size = 0x4, offset = 0x4, fixed_abs, tag = 'smem constant byte address 0x4 - core index']
  #allocation1 [shape = 'u32[144,128]{1,0:T(1,128)}', space=vmem, size = 0x12000, scoped, tag = 'internal scratch']
  %s0 = inlined_call_operand.hbm [shape: f32[2,16,16,16], index: 0, kind: input, shape index: {}]
  %s1 = inlined_call_operand.vmem [shape: f32[16,1], index: 1, kind: input, shape index: {}]
  %s2 = inlined_call_operand.vmem [shape: f32[16,1], index: 2, kind: input, shape index: {}]
  %s3 = inlined_call_operand.vmem [shape: f32[8,16], index: 3, kind: input, shape index: {}]
  %s4 = inlined_call_operand.vmem [shape: f32[16,8], index: 4, kind: input, shape index: {}]
  %s5 = inlined_call_operand.hbm [shape: f32[2,8,8,8], index: 5, kind: output, shape index: {}]
  %s6 = sld [smem:[#allocation0]]
  $region57: #{tpu_custom_call.1} parent=0
    _
  %s8 = ssub.s32 1, %s6
  %s9 = scalar_select 0, %s8, %s6
  $region1: #{tpu_custom_call.1} parent=0
    #allocation2 [shape = 'u8[262144]{0}', space=vmem, size = 0x40000, scoped, tag = 'input window, operand 0']
    #allocation3 [shape = 's32[2]{0}', space=sflag, size = 0x8, scoped, tag = 'scoped memory for tpu_custom_call.1']
    #allocation4 [shape = 's32[2]{0}', space=sflag, size = 0x8, scoped, tag = 'scoped memory for tpu_custom_call.1']
    #allocation5 [shape = 'u8[65536]{0}', space=vmem, size = 0x10000, scoped, tag = 'output window, operand 0']
    %10 = vsyncpa [#allocation3], 0
    %s11 = scalar_lea.sflag [#allocation3], 1
    %12 = vsyncpa %s11, 0
    %13 = vsyncpa [#allocation4], 0
    %s14 = scalar_lea.sflag [#allocation4], 1
    %15 = vsyncpa %s14, 0
    loop: start=0, step=1, limit=4
    $region2: #{tpu_custom_call.1} parent=1 // loop_pre_header
      _
    $region3: #{tpu_custom_call.1} parent=1 // loop_header
      %s17 = sphi 0, %s21
      %p18 = scmp.ge.s32.totalorder %s17, 4
      %s24 = sphi 0, %s36
      %s25 = sphi 0, %s32
      %s26 = sphi 0, %s24
      %s27 = sphi 0, %s25
      %s28 = sphi 0, %s26
      %s29 = sphi 0, %s27
      %s41 = sphi 0, %s43
      %s44 = sphi 0, %s41
      %s45 = sphi 0, %s44
      %s61 = sphi 0, %s45
      %s65 = sphi 0, %s65
      %s67 = sphi 0, %s65
      %s68 = sphi 0, %s67
      %s82 = sphi 0, %s68
      %s86 = sphi 0, %s86
      %s88 = sphi 0, %s86
      %s89 = sphi 0, %s88
      %s103 = sphi 0, %s89
      %s107 = sphi 0, %s107
      %s109 = sphi 0, %s107
      %s110 = sphi 0, %s109
      %s124 = sphi 0, %s110
      %s128 = sphi 0, %s128
      %s130 = sphi 0, %s128
      %s131 = sphi 0, %s130
      %s145 = sphi 0, %s131
      %s153 = sphi 0, %s155
      %s156 = sphi 0, %s153
      %s157 = sphi 0, %s156
      %s173 = sphi 0, %s157
    $region4: #{tpu_custom_call.1} parent=1 // loop_header_branch
      %20 = sbr.rel (%p18) target = $region8
    $region5: #{tpu_custom_call.1} parent=1 // loop_body
      %s22 = ssub.s32 %s17, 1
      %s23 = ssub.s32 %s17, 2
      %s30 = sadd.s32 1, %s25
      %p31 = scmp.ge.s32.totalorder %s30, 1
      %s32 = scalar_select %p31, 0, %s30
      %s33 = sadd.s32 1, %s24
      %s34 = scalar_select %p31, %s33, %s24
      %p35 = scmp.ge.s32.totalorder %s34, 2
      %s36 = scalar_select %p35, 0, %s34
      %s37 = ssub.s32 %s24, %s36
      %s38 = ssub.s32 %s25, %s32
      %s39 = sor.u32 %s37, %s38
      %p40 = scmp.eq.s32.totalorder %s39, 0
      %s42 = sadd.s32 %s41, 1
      %s43 = scalar_select %p40, %s41, %s42
      %p46 = pneg %p40
      %p47 = scmp.eq.s32.totalorder %s17, 1
      %p48 = por %p46, %p47
      %p49 = scmp.ne.s32.totalorder %s41, %s44
      %p50 = scmp.eq.s32.totalorder %s17, 0
      %p51 = por %p49, %p50
      %p52 = scmp.ne.s32.totalorder %s41, %s44
      %p53 = scmp.eq.s32.totalorder %s22, 1
      %p54 = por %p52, %p53
      %p55 = scmp.ne.s32.totalorder %s44, %s45
      %p56 = scmp.eq.s32.totalorder %s22, 0
      %p57 = por %p55, %p56
      %p58 = scmp.ne.s32.totalorder %s44, %s45
      %p59 = scmp.eq.s32.totalorder %s23, 1
      %p60 = por %p58, %p59
      %p62 = scmp.ne.s32.totalorder %s45, %s61
      %p63 = scmp.eq.s32.totalorder %s23, 0
      %p64 = por %p62, %p63
      %s66 = sadd.s32 %s65, 1
      %p69 = scmp.eq.s32.totalorder %s17, 1
      %p70 = scmp.ne.s32.totalorder %s65, %s67
      %p71 = scmp.eq.s32.totalorder %s17, 0
      %p72 = por %p70, %p71
      %p73 = scmp.ne.s32.totalorder %s65, %s67
      %p74 = scmp.eq.s32.totalorder %s22, 1
      %p75 = por %p73, %p74
      %p76 = scmp.ne.s32.totalorder %s67, %s68
      %p77 = scmp.eq.s32.totalorder %s22, 0
      %p78 = por %p76, %p77
      %p79 = scmp.ne.s32.totalorder %s67, %s68
      %p80 = scmp.eq.s32.totalorder %s23, 1
      %p81 = por %p79, %p80
      %p83 = scmp.ne.s32.totalorder %s68, %s82
      %p84 = scmp.eq.s32.totalorder %s23, 0
      %p85 = por %p83, %p84
      %s87 = sadd.s32 %s86, 1
      %p90 = scmp.eq.s32.totalorder %s17, 1
      %p91 = scmp.ne.s32.totalorder %s86, %s88
      %p92 = scmp.eq.s32.totalorder %s17, 0
      %p93 = por %p91, %p92
      %p94 = scmp.ne.s32.totalorder %s86, %s88
      %p95 = scmp.eq.s32.totalorder %s22, 1
      %p96 = por %p94, %p95
      %p97 = scmp.ne.s32.totalorder %s88, %s89
      %p98 = scmp.eq.s32.totalorder %s22, 0
      %p99 = por %p97, %p98
      %p100 = scmp.ne.s32.totalorder %s88, %s89
      %p101 = scmp.eq.s32.totalorder %s23, 1
      %p102 = por %p100, %p101
      %p104 = scmp.ne.s32.totalorder %s89, %s103
      %p105 = scmp.eq.s32.totalorder %s23, 0
      %p106 = por %p104, %p105
      %s108 = sadd.s32 %s107, 1
      %p111 = scmp.eq.s32.totalorder %s17, 1
      %p112 = scmp.ne.s32.totalorder %s107, %s109
      %p113 = scmp.eq.s32.totalorder %s17, 0
      %p114 = por %p112, %p113
      %p115 = scmp.ne.s32.totalorder %s107, %s109
      %p116 = scmp.eq.s32.totalorder %s22, 1
      %p117 = por %p115, %p116
      %p118 = scmp.ne.s32.totalorder %s109, %s110
      %p119 = scmp.eq.s32.totalorder %s22, 0
      %p120 = por %p118, %p119
      %p121 = scmp.ne.s32.totalorder %s109, %s110
      %p122 = scmp.eq.s32.totalorder %s23, 1
      %p123 = por %p121, %p122
      %p125 = scmp.ne.s32.totalorder %s110, %s124
      %p126 = scmp.eq.s32.totalorder %s23, 0
      %p127 = por %p125, %p126
      %s129 = sadd.s32 %s128, 1
      %p132 = scmp.eq.s32.totalorder %s17, 1
      %p133 = scmp.ne.s32.totalorder %s128, %s130
      %p134 = scmp.eq.s32.totalorder %s17, 0
      %p135 = por %p133, %p134
      %p136 = scmp.ne.s32.totalorder %s128, %s130
      %p137 = scmp.eq.s32.totalorder %s22, 1
      %p138 = por %p136, %p137
      %p139 = scmp.ne.s32.totalorder %s130, %s131
      %p140 = scmp.eq.s32.totalorder %s22, 0
      %p141 = por %p139, %p140
      %p142 = scmp.ne.s32.totalorder %s130, %s131
      %p143 = scmp.eq.s32.totalorder %s23, 1
      %p144 = por %p142, %p143
      %p146 = scmp.ne.s32.totalorder %s131, %s145
      %p147 = scmp.eq.s32.totalorder %s23, 0
      %p148 = por %p146, %p147
      %s149 = ssub.s32 %s24, %s36
      %s150 = ssub.s32 %s25, %s32
      %s151 = sor.u32 %s149, %s150
      %p152 = scmp.eq.s32.totalorder %s151, 0
      %s154 = sadd.s32 %s153, 1
      %s155 = scalar_select %p152, %s153, %s154
      %p158 = pneg %p152
      %p159 = scmp.eq.s32.totalorder %s17, 1
      %p160 = por %p158, %p159
      %p161 = scmp.ne.s32.totalorder %s153, %s156
      %p162 = scmp.eq.s32.totalorder %s17, 0
      %p163 = por %p161, %p162
      %p164 = scmp.ne.s32.totalorder %s153, %s156
      %p165 = scmp.eq.s32.totalorder %s22, 1
      %p166 = por %p164, %p165
      %p167 = scmp.ne.s32.totalorder %s156, %s157
      %p168 = scmp.eq.s32.totalorder %s22, 0
      %p169 = por %p167, %p168
      %p170 = scmp.ne.s32.totalorder %s156, %s157
      %p171 = scmp.eq.s32.totalorder %s23, 1
      %p172 = por %p170, %p171
      %p174 = scmp.ne.s32.totalorder %s157, %s173
      %p175 = scmp.eq.s32.totalorder %s23, 0
      %p176 = por %p174, %p175
      %p177 = scmp.le.s32.totalorder 1, %s17
      %p178 = scmp.lt.s32.totalorder %s17, 3
      %p179 = pnand %p177, %p178
      %p180 = pneg %p179
      // Predicated region
      $region9: #{tpu_custom_call.1} parent=5 // pred_check
        _
      $region10: #{tpu_custom_call.1} parent=5 // pred_check_branch
        %182 = sbr.rel (%p179) target = $region12
      $region11: #{tpu_custom_call.1} parent=5 // pred_region
        %s183 = ssub.s32 %s17, 1
        // Predicated region
        $region13: #{tpu_custom_call.1} parent=11 // pred_check
          %p184 = pneg %p78
        $region14: #{tpu_custom_call.1} parent=11 // pred_check_branch
          %186 = sbr.rel (%p184) target = $region16
        $region15: #{tpu_custom_call.1} parent=11 // pred_region
          _
        $region16: #{tpu_custom_call.1} parent=11 // pred_fallthru
          _
        // Predicated region
        $region17: #{tpu_custom_call.1} parent=11 // pred_check
          %p187 = pneg %p99
        $region18: #{tpu_custom_call.1} parent=11 // pred_check_branch
          %189 = sbr.rel (%p187) target = $region20
        $region19: #{tpu_custom_call.1} parent=11 // pred_region
          _
        $region20: #{tpu_custom_call.1} parent=11 // pred_fallthru
          _
        // Predicated region
        $region21: #{tpu_custom_call.1} parent=11 // pred_check
          %p190 = pneg %p120
        $region22: #{tpu_custom_call.1} parent=11 // pred_check_branch
          %192 = sbr.rel (%p190) target = $region24
        $region23: #{tpu_custom_call.1} parent=11 // pred_region
          _
        $region24: #{tpu_custom_call.1} parent=11 // pred_fallthru
          _
        // Predicated region
        $region25: #{tpu_custom_call.1} parent=11 // pred_check
          %p193 = pneg %p141
        $region26: #{tpu_custom_call.1} parent=11 // pred_check_branch
          %195 = sbr.rel (%p193) target = $region28
        $region27: #{tpu_custom_call.1} parent=11 // pred_region
          _
        $region28: #{tpu_custom_call.1} parent=11 // pred_fallthru
          _
      $region12: #{tpu_custom_call.1} parent=5 // pred_fallthru
        _
      %p196 = scmp.lt.s32.totalorder %s17, 2
      // Predicated region
      $region29: #{tpu_custom_call.1} parent=5 // pred_check
        %p197 = pneg %p196
      $region30: #{tpu_custom_call.1} parent=5 // pred_check_branch
        %199 = sbr.rel (%p197) target = $region32
      $region31: #{tpu_custom_call.1} parent=5 // pred_region
        // Predicated region
        $region33: #{tpu_custom_call.1} parent=31 // pred_check
          %p200 = pneg %p51
        $region34: #{tpu_custom_call.1} parent=31 // pred_check_branch
          %202 = sbr.rel (%p200) target = $region36
        $region35: #{tpu_custom_call.1} parent=31 // pred_region
          %s203 = sand.u32 %s41, 1
          %s204 = scalar_lea.sflag [#allocation3], %s203
          %s205 = sand.u32 %s41, 1
          %s206 = smul.addr %s205, 256
          %s207 = scalar_lea.vmem [#allocation2], %s206
          %s208 = smul.u32 2, %s25
          %s210 = ssub.s32 4096, 4096
          %211 = vsyncadd %s204, %s210
          %s212 = smul.addr %s24, 32
          %s213 = sadd.s32 %s208, %s212
          %s214 = smul.addr %s213, 128
          %s215 = scalar_lea.hbm %s0, %s214
          %s216 = sshll.u32 %s207, 4
          %s217 = int_to_ptr.vmem [resolvable:$true] %s216
          %222 = dma.hbm_to_vmem [thread:$0]  %s215, 4096, %s217, %s204, 128, 128, 8
        $region36: #{tpu_custom_call.1} parent=31 // pred_fallthru
          _
      $region32: #{tpu_custom_call.1} parent=5 // pred_fallthru
        _
      %p223 = scmp.le.s32.totalorder 1, %s17
      %p224 = scmp.lt.s32.totalorder %s17, 3
      %p225 = pnand %p223, %p224
      %p226 = pneg %p225
      // Predicated region
      $region37: #{tpu_custom_call.1} parent=5 // pred_check
        _
      $region38: #{tpu_custom_call.1} parent=5 // pred_check_branch
        %228 = sbr.rel (%p225) target = $region40
      $region39: #{tpu_custom_call.1} parent=5 // pred_region
        %s229 = ssub.s32 %s17, 1
        %s230 = sand.u32 %s44, 1
        %s231 = scalar_lea.sflag [#allocation3], %s230
        %s232 = sand.u32 %s44, 1
        %s233 = smul.addr %s232, 256
        %s234 = scalar_lea.vmem [#allocation2], %s233
        // Predicated region
        $region41: #{tpu_custom_call.1} parent=39 // pred_check
          %p235 = pneg %p57
        $region42: #{tpu_custom_call.1} parent=39 // pred_check_branch
          %237 = sbr.rel (%p235) target = $region44
        $region43: #{tpu_custom_call.1} parent=39 // pred_region
          %238 = dma.done %s231, 4096
        $region44: #{tpu_custom_call.1} parent=39 // pred_fallthru
          _
        %s239 = sand.u32 %s44, 1
        %s240 = scalar_lea.sflag [#allocation3], %s239
        %s241 = sand.u32 %s44, 1
        %s242 = smul.addr %s241, 256
        %s243 = scalar_lea.vmem [#allocation2], %s242
        %p244 = pneg %p57
        %p245 = pneg %p54
        %p246 = pneg %p78
        %p247 = pneg %p75
        %p248 = pneg %p99
        %p249 = pneg %p96
        %p250 = pneg %p120
        %p251 = pneg %p117
        %p252 = pneg %p141
        %p253 = pneg %p138
        %p254 = pneg %p169
        %p255 = pneg %p166
        %s256 = sand.u32 %s156, 1
        %s257 = scalar_lea.sflag [#allocation4], %s256
        %s258 = sand.u32 %s156, 1
        %s259 = smul.addr %s258, 64
        %s260 = scalar_lea.vmem [#allocation5], %s259
        %s261 = smul.u32 2, %s27
        %v262 = vld [vmem:[%s1] sm:$0xff]
        %v263 = vld [vmem:[%s1 + $0x8] sm:$0xff]
        %v264 = vld [vmem:[%s2] sm:$0xff]
        %v265 = vld [vmem:[%s2 + $0x8] sm:$0xff]
        %v266 = vld [vmem:[%s3] sm:$0xff]
        %v267 = vld [vmem:[%s4] sm:$0xff]
        %v268 = vld [vmem:[%s4 + $0x8] sm:$0xff]
        %v269 = vld [vmem:[%s234] sm:$0x1]
        %v270 = vld [vmem:[%s234 + $0x10] sm:$0x1]
        %v271 = vld [vmem:[%s234 + $0x20] sm:$0x1]
        %v272 = vld [vmem:[%s234 + $0x30] sm:$0x1]
        %v273 = vld [vmem:[%s234 + $0x40] sm:$0x1]
        %v274 = vld [vmem:[%s234 + $0x50] sm:$0x1]
        %v275 = vld [vmem:[%s234 + $0x60] sm:$0x1]
        %v276 = vld [vmem:[%s234 + $0x70] sm:$0x1]
        %v277 = vld [vmem:[%s234 + $0x80] sm:$0x1]
        %v278 = vld [vmem:[%s234 + $0x90] sm:$0x1]
        %v279 = vld [vmem:[%s234 + $0xa0] sm:$0x1]
        %v280 = vld [vmem:[%s234 + $0xb0] sm:$0x1]
        %v281 = vld [vmem:[%s234 + $0xc0] sm:$0x1]
        %v282 = vld [vmem:[%s234 + $0xd0] sm:$0x1]
        %v283 = vld [vmem:[%s234 + $0xe0] sm:$0x1]
        %v284 = vld [vmem:[%s234 + $0xf0] sm:$0x1]
        %v285 = vld [vmem:[%s234 + $0x1] sm:$0x1]
        %v286 = vld [vmem:[%s234 + $0x11] sm:$0x1]
        %v287 = vld [vmem:[%s234 + $0x21] sm:$0x1]
        %v288 = vld [vmem:[%s234 + $0x31] sm:$0x1]
        %v289 = vld [vmem:[%s234 + $0x41] sm:$0x1]
        %v290 = vld [vmem:[%s234 + $0x51] sm:$0x1]
        %v291 = vld [vmem:[%s234 + $0x61] sm:$0x1]
        %v292 = vld [vmem:[%s234 + $0x71] sm:$0x1]
        %v293 = vld [vmem:[%s234 + $0x81] sm:$0x1]
        %v294 = vld [vmem:[%s234 + $0x91] sm:$0x1]
        %v295 = vld [vmem:[%s234 + $0xa1] sm:$0x1]
        %v296 = vld [vmem:[%s234 + $0xb1] sm:$0x1]
        %v297 = vld [vmem:[%s234 + $0xc1] sm:$0x1]
        %v298 = vld [vmem:[%s234 + $0xd1] sm:$0x1]
        %v299 = vld [vmem:[%s234 + $0xe1] sm:$0x1]
        %v300 = vld [vmem:[%s234 + $0xf1] sm:$0x1]
        %302 = vset.pattern.permute.xlu0 0
        %303 = vperm.xlu0 %302, %v262
        %v304 = vpop.permute.xlu0 %303
        %306 = vset.pattern.permute.xlu0 0
        %307 = vperm.xlu0 %306, %v263
        %v308 = vpop.permute.xlu0 %307
        %v309 = vrot.slane %v304, 1
        %v310 = vrot.slane %v304, 2
        %v311 = vrot.slane %v304, 3
        %v312 = vrot.slane %v304, 4
        %v313 = vrot.slane %v304, 5
        %v314 = vrot.slane %v304, 6
        %v315 = vrot.slane %v304, 7
        %v316 = vrot.slane %v308, 1
        %v317 = vrot.slane %v308, 2
        %v318 = vrot.slane %v308, 3
        %v319 = vrot.slane %v308, 4
        %v320 = vrot.slane %v308, 5
        %v321 = vrot.slane %v308, 6
        %v322 = vrot.slane %v308, 7
        %v339 = vmul.f32 %v269, %v304
        %v340 = vmul.f32 %v270, %v309
        %v341 = vmul.f32 %v271, %v310
        %v342 = vmul.f32 %v272, %v311
        %v343 = vmul.f32 %v273, %v312
        %v344 = vmul.f32 %v274, %v313
        %v345 = vmul.f32 %v275, %v314
        %v346 = vmul.f32 %v276, %v315
        %v347 = vmul.f32 %v277, %v308
        %v348 = vmul.f32 %v278, %v316
        %v349 = vmul.f32 %v279, %v317
        %v350 = vmul.f32 %v280, %v318
        %v351 = vmul.f32 %v281, %v319
        %v352 = vmul.f32 %v282, %v320
        %v353 = vmul.f32 %v283, %v321
        %v354 = vmul.f32 %v284, %v322
        %356 = vset.pattern.permute.xlu0 0
        %357 = vperm.xlu0 %356, %v264
        %v358 = vpop.permute.xlu0 %357
        %360 = vset.pattern.permute.xlu0 0
        %361 = vperm.xlu0 %360, %v265
        %v362 = vpop.permute.xlu0 %361
        %v363 = vrot.slane %v358, 1
        %v364 = vrot.slane %v358, 2
        %v365 = vrot.slane %v358, 3
        %v366 = vrot.slane %v358, 4
        %v367 = vrot.slane %v358, 5
        %v368 = vrot.slane %v358, 6
        %v369 = vrot.slane %v358, 7
        %v370 = vrot.slane %v362, 1
        %v371 = vrot.slane %v362, 2
        %v372 = vrot.slane %v362, 3
        %v373 = vrot.slane %v362, 4
        %v374 = vrot.slane %v362, 5
        %v375 = vrot.slane %v362, 6
        %v376 = vrot.slane %v362, 7
        %v393 = vadd.f32 %v339, %v358
        %v394 = vadd.f32 %v340, %v363
        %v395 = vadd.f32 %v341, %v364
        %v396 = vadd.f32 %v342, %v365
        %v397 = vadd.f32 %v343, %v366
        %v398 = vadd.f32 %v344, %v367
        %v399 = vadd.f32 %v345, %v368
        %v400 = vadd.f32 %v346, %v369
        %v401 = vadd.f32 %v347, %v362
        %v402 = vadd.f32 %v348, %v370
        %v403 = vadd.f32 %v349, %v371
        %v404 = vadd.f32 %v350, %v372
        %v405 = vadd.f32 %v351, %v373
        %v406 = vadd.f32 %v352, %v374
        %v407 = vadd.f32 %v353, %v375
        %v408 = vadd.f32 %v354, %v376
        %v409 = vmax.f32 %v393, 0.0
        %v410 = vmax.f32 %v394, 0.0
        %v411 = vmax.f32 %v395, 0.0
        %v412 = vmax.f32 %v396, 0.0
        %v413 = vmax.f32 %v397, 0.0
        %v414 = vmax.f32 %v398, 0.0
        %v415 = vmax.f32 %v399, 0.0
        %v416 = vmax.f32 %v400, 0.0
        %v417 = vmax.f32 %v401, 0.0
        %v418 = vmax.f32 %v402, 0.0
        %v419 = vmax.f32 %v403, 0.0
        %v420 = vmax.f32 %v404, 0.0
        %v421 = vmax.f32 %v405, 0.0
        %v422 = vmax.f32 %v406, 0.0
        %v423 = vmax.f32 %v407, 0.0
        %v424 = vmax.f32 %v408, 0.0
        %v425 = vmul.f32 %v285, %v304
        %v426 = vmul.f32 %v286, %v309
        %v427 = vmul.f32 %v287, %v310
        %v428 = vmul.f32 %v288, %v311
        %v429 = vmul.f32 %v289, %v312
        %v430 = vmul.f32 %v290, %v313
        %v431 = vmul.f32 %v291, %v314
        %v432 = vmul.f32 %v292, %v315
        %v433 = vmul.f32 %v293, %v308
        %v434 = vmul.f32 %v294, %v316
        %v435 = vmul.f32 %v295, %v317
        %v436 = vmul.f32 %v296, %v318
        %v437 = vmul.f32 %v297, %v319
        %v438 = vmul.f32 %v298, %v320
        %v439 = vmul.f32 %v299, %v321
        %v440 = vmul.f32 %v300, %v322
        %v441 = vadd.f32 %v425, %v358
        %v442 = vadd.f32 %v426, %v363
        %v443 = vadd.f32 %v427, %v364
        %v444 = vadd.f32 %v428, %v365
        %v445 = vadd.f32 %v429, %v366
        %v446 = vadd.f32 %v430, %v367
        %v447 = vadd.f32 %v431, %v368
        %v448 = vadd.f32 %v432, %v369
        %v449 = vadd.f32 %v433, %v362
        %v450 = vadd.f32 %v434, %v370
        %v451 = vadd.f32 %v435, %v371
        %v452 = vadd.f32 %v436, %v372
        %v453 = vadd.f32 %v437, %v373
        %v454 = vadd.f32 %v438, %v374
        %v455 = vadd.f32 %v439, %v375
        %v456 = vadd.f32 %v440, %v376
        %v457 = vmax.f32 %v441, 0.0
        %v458 = vmax.f32 %v442, 0.0
        %v459 = vmax.f32 %v443, 0.0
        %v460 = vmax.f32 %v444, 0.0
        %v461 = vmax.f32 %v445, 0.0
        %v462 = vmax.f32 %v446, 0.0
        %v463 = vmax.f32 %v447, 0.0
        %v464 = vmax.f32 %v448, 0.0
        %v465 = vmax.f32 %v449, 0.0
        %v466 = vmax.f32 %v450, 0.0
        %v467 = vmax.f32 %v451, 0.0
        %v468 = vmax.f32 %v452, 0.0
        %v469 = vmax.f32 %v453, 0.0
        %v470 = vmax.f32 %v454, 0.0
        %v471 = vmax.f32 %v455, 0.0
        %v472 = vmax.f32 %v456, 0.0
        %v473 = vadd.f32 %v409, %v457
        %v474 = vadd.f32 %v410, %v458
        %v475 = vadd.f32 %v411, %v459
        %v476 = vadd.f32 %v412, %v460
        %v477 = vadd.f32 %v413, %v461
        %v478 = vadd.f32 %v414, %v462
        %v479 = vadd.f32 %v415, %v463
        %v480 = vadd.f32 %v416, %v464
        %v481 = vadd.f32 %v417, %v465
        %v482 = vadd.f32 %v418, %v466
        %v483 = vadd.f32 %v419, %v467
        %v484 = vadd.f32 %v420, %v468
        %v485 = vadd.f32 %v421, %v469
        %v486 = vadd.f32 %v422, %v470
        %v487 = vadd.f32 %v423, %v471
        %v488 = vadd.f32 %v424, %v472
        %v505 = vrot.slane %v474, 7
        %vm506 = vcmask 1041409
        %v507 = vsel %vm506, %v505, %v473
        %v508 = vrot.slane %v475, 6
        %vm509 = vcmask 1042434
        %v510 = vsel %vm509, %v508, %v507
        %v511 = vrot.slane %v476, 5
        %vm512 = vcmask 1043459
        %v513 = vsel %vm512, %v511, %v510
        %v514 = vrot.slane %v477, 4
        %vm515 = vcmask 1044484
        %v516 = vsel %vm515, %v514, %v513
        %v517 = vrot.slane %v478, 3
        %vm518 = vcmask 1045509
        %v519 = vsel %vm518, %v517, %v516
        %v520 = vrot.slane %v479, 2
        %vm521 = vcmask 1046534
        %v522 = vsel %vm521, %v520, %v519
        %v523 = vrot.slane %v480, 1
        %vm524 = vcmask 1047559
        %v525 = vsel %vm524, %v523, %v522
        %v526 = vrot.slane %v482, 7
        %v527 = vsel %vm506, %v526, %v481
        %v528 = vrot.slane %v483, 6
        %v529 = vsel %vm509, %v528, %v527
        %v530 = vrot.slane %v484, 5
        %v531 = vsel %vm512, %v530, %v529
        %v532 = vrot.slane %v485, 4
        %v533 = vsel %vm515, %v532, %v531
        %v534 = vrot.slane %v486, 3
        %v535 = vsel %vm518, %v534, %v533
        %v536 = vrot.slane %v487, 2
        %v537 = vsel %vm521, %v536, %v535
        %v538 = vrot.slane %v488, 1
        %v539 = vsel %vm524, %v538, %v537
        %vm540 = vcmask 130048
        %v541 = vsel %vm540, %v525, 0
        %v543 = vsel %vm540, %v539, 0
        %545 = vmatprep.subr.mxu0 0.0
        %546 = vmatpush1.msra.mxu0 %v267
        %547 = vmatprep.subr.mxu0 0.0
        %548 = vmatpush1.msra.mxu0 %v268
        %549 = vmatprep.subr.mxu0 0.0
        %550 = vmatpush1.msra.mxu0 0.0
        %551 = vmatprep.subr.mxu0 0.0
        %552 = vmatpush1.msra.mxu0 0.0
        %553 = vmatprep.subr.mxu0 0.0
        %554 = vmatpush1.msra.mxu0 0.0
        %555 = vmatprep.subr.mxu0 0.0
        %556 = vmatpush1.msra.mxu0 0.0
        %557 = vmatprep.subr.mxu0 0.0
        %558 = vmatpush1.msra.mxu0 0.0
        %559 = vmatprep.subr.mxu0 0.0
        %560 = vmatpush1.msra.mxu0 0.0
        %561 = vmatprep.subr.mxu0 0.0
        %562 = vmatpush1.msra.mxu0 0.0
        %563 = vmatprep.subr.mxu0 0.0
        %564 = vmatpush1.msra.mxu0 0.0
        %565 = vmatprep.subr.mxu0 0.0
        %566 = vmatpush1.msra.mxu0 0.0
        %567 = vmatprep.subr.mxu0 0.0
        %568 = vmatpush1.msra.mxu0 0.0
        %569 = vmatprep.subr.mxu0 0.0
        %570 = vmatpush1.msra.mxu0 0.0
        %571 = vmatprep.subr.mxu0 0.0
        %572 = vmatpush1.msra.mxu0 0.0
        %573 = vmatprep.subr.mxu0 0.0
        %574 = vmatpush1.msra.mxu0 0.0
        %575 = vmatprep.subr.mxu0 0.0
        %576 = vmatpush1.msra.mxu0 0.0
        %577 = vmatprep.subr.mxu0 0.0
        %578 = vmatpush1.msra.mxu0 0.0
        %579 = vmatprep.subr.mxu0 0.0
        %580 = vmatpush1.msra.mxu0 0.0
        %581 = vmatprep.subr.mxu0 0.0
        %582 = vmatpush1.msra.mxu0 0.0
        %583 = vmatprep.subr.mxu0 0.0
        %584 = vmatpush1.msra.mxu0 0.0
        %585 = vmatprep.subr.mxu0 0.0
        %586 = vmatpush1.msra.mxu0 0.0
        %587 = vmatprep.subr.mxu0 0.0
        %588 = vmatpush1.msra.mxu0 0.0
        %589 = vmatprep.subr.mxu0 0.0
        %590 = vmatpush1.msra.mxu0 0.0
        %591 = vmatprep.subr.mxu0 0.0
        %592 = vmatpush1.msra.mxu0 0.0
        %593 = vmatprep.subr.mxu0 0.0
        %594 = vmatpush1.msra.mxu0 0.0
        %595 = vmatprep.subr.mxu0 0.0
        %596 = vmatpush1.msra.mxu0 0.0
        %597 = vmatprep.subr.mxu0 0.0
        %598 = vmatpush1.msra.mxu0 0.0
        %599 = vmatprep.subr.mxu0 0.0
        %600 = vmatpush1.msra.mxu0 0.0
        %601 = vmatprep.subr.mxu0 0.0
        %602 = vmatpush1.msra.mxu0 0.0
        %603 = vmatprep.subr.mxu0 0.0
        %604 = vmatpush1.msra.mxu0 0.0
        %605 = vmatprep.subr.mxu0 0.0
        %606 = vmatpush1.msra.mxu0 0.0
        %607 = vmatprep.subr.mxu0 0.0
        %608 = vmatpush1.msra.mxu0 0.0
        %609 = vmatprep.mubr.f32.mxu0 0.0
        %610 = vmatmul.mubr.f32.gmra.mrb[0].mxu0 %v541
        %v611 = vpop.f32.mrb[0].mxu0
        %v612 = vadd.f32 0.0, %v611
        %v613 = vpop.f32.mrb[0].mxu0
        %614 = vmatprep.mubr.f32.mxu0 0.0
        %615 = vmatmul.mubr.f32.gmra.mrb[0].mxu0 %v543
        %v616 = vpop.f32.mrb[0].mxu0
        %v617 = vadd.f32 0.0, %v616
        %v618 = vpop.f32.mrb[0].mxu0
        %619 = vdwg.mxu0
        %v621 = vsel %vm540, %v266, 0
        %623 = vmatprep.subr.mxu0 0.0
        %624 = vmatpush1.msra.mxu0 %v612
        %625 = vmatprep.subr.mxu0 0.0
        %626 = vmatpush1.msra.mxu0 %v617
        %627 = vmatprep.subr.mxu0 0.0
        %628 = vmatpush1.msra.mxu0 0.0
        %629 = vmatprep.subr.mxu0 0.0
        %630 = vmatpush1.msra.mxu0 0.0
        %631 = vmatprep.subr.mxu0 0.0
        %632 = vmatpush1.msra.mxu0 0.0
        %633 = vmatprep.subr.mxu0 0.0
        %634 = vmatpush1.msra.mxu0 0.0
        %635 = vmatprep.subr.mxu0 0.0
        %636 = vmatpush1.msra.mxu0 0.0
        %637 = vmatprep.subr.mxu0 0.0
        %638 = vmatpush1.msra.mxu0 0.0
        %639 = vmatprep.subr.mxu0 0.0
        %640 = vmatpush1.msra.mxu0 0.0
        %641 = vmatprep.subr.mxu0 0.0
        %642 = vmatpush1.msra.mxu0 0.0
        %643 = vmatprep.subr.mxu0 0.0
        %644 = vmatpush1.msra.mxu0 0.0
        %645 = vmatprep.subr.mxu0 0.0
        %646 = vmatpush1.msra.mxu0 0.0
        %647 = vmatprep.subr.mxu0 0.0
        %648 = vmatpush1.msra.mxu0 0.0
        %649 = vmatprep.subr.mxu0 0.0
        %650 = vmatpush1.msra.mxu0 0.0
        %651 = vmatprep.subr.mxu0 0.0
        %652 = vmatpush1.msra.mxu0 0.0
        %653 = vmatprep.subr.mxu0 0.0
        %654 = vmatpush1.msra.mxu0 0.0
        %655 = vmatprep.subr.mxu0 0.0
        %656 = vmatpush1.msra.mxu0 0.0
        %657 = vmatprep.subr.mxu0 0.0
        %658 = vmatpush1.msra.mxu0 0.0
        %659 = vmatprep.subr.mxu0 0.0
        %660 = vmatpush1.msra.mxu0 0.0
        %661 = vmatprep.subr.mxu0 0.0
        %662 = vmatpush1.msra.mxu0 0.0
        %663 = vmatprep.subr.mxu0 0.0
        %664 = vmatpush1.msra.mxu0 0.0
        %665 = vmatprep.subr.mxu0 0.0
        %666 = vmatpush1.msra.mxu0 0.0
        %667 = vmatprep.subr.mxu0 0.0
        %668 = vmatpush1.msra.mxu0 0.0
        %669 = vmatprep.subr.mxu0 0.0
        %670 = vmatpush1.msra.mxu0 0.0
        %671 = vmatprep.subr.mxu0 0.0
        %672 = vmatpush1.msra.mxu0 0.0
        %673 = vmatprep.subr.mxu0 0.0
        %674 = vmatpush1.msra.mxu0 0.0
        %675 = vmatprep.subr.mxu0 0.0
        %676 = vmatpush1.msra.mxu0 0.0
        %677 = vmatprep.subr.mxu0 0.0
        %678 = vmatpush1.msra.mxu0 0.0
        %679 = vmatprep.subr.mxu0 0.0
        %680 = vmatpush1.msra.mxu0 0.0
        %681 = vmatprep.subr.mxu0 0.0
        %682 = vmatpush1.msra.mxu0 0.0
        %683 = vmatprep.subr.mxu0 0.0
        %684 = vmatpush1.msra.mxu0 0.0
        %685 = vmatprep.subr.mxu0 0.0
        %686 = vmatpush1.msra.mxu0 0.0
        %687 = vmatprep.mubr.f32.mxu0 0.0
        %688 = vmatmul.mubr.f32.gmra.mrb[0].mxu0 %v621
        %v689 = vpop.f32.mrb[0].mxu0
        %v690 = vadd.f32 0.0, %v689
        %v691 = vpop.f32.mrb[0].mxu0
        %692 = vdwg.mxu0
        %v694 = vcombine.high %v690, %v690
        %v696 = vunpack.c.l.s4 1966171168
        %v697 = vunpack.c.0.s8 %v696
        %v698 = vlaneseq
        %v699 = vshrl.u32 %v698, 7
        %v700 = vsub.s32 %v697, %v699
        %v701 = vrot.slane %v690, %v700
        %v703 = vunpack.c.l.s4 1966171168
        %v704 = vunpack.c.0.s8 %v703
        %v705 = vlaneseq
        %v706 = vshrl.u32 %v705, 7
        %v707 = vsub.s32 %v704, %v706
        %v708 = vrot.slane %v694, %v707
        %v709 = vcombine.high %v701, %v701
        %v710 = vcombine.high %v708, %v708
        %v712 = vunpack.c.l.s4 1966171168
        %v713 = vunpack.c.0.s8 %v712
        %v714 = vlaneseq
        %v715 = vshrl.u32 %v714, 7
        %v716 = vsub.s32 %v713, %v715
        %v717 = vrot.slane %v701, %v716
        %v719 = vunpack.c.l.s4 1966171168
        %v720 = vunpack.c.0.s8 %v719
        %v721 = vlaneseq
        %v722 = vshrl.u32 %v721, 7
        %v723 = vsub.s32 %v720, %v722
        %v724 = vrot.slane %v708, %v723
        %v726 = vunpack.c.l.s4 1966171168
        %v727 = vunpack.c.0.s8 %v726
        %v728 = vlaneseq
        %v729 = vshrl.u32 %v728, 7
        %v730 = vsub.s32 %v727, %v729
        %v731 = vrot.slane %v709, %v730
        %v733 = vunpack.c.l.s4 1966171168
        %v734 = vunpack.c.0.s8 %v733
        %v735 = vlaneseq
        %v736 = vshrl.u32 %v735, 7
        %v737 = vsub.s32 %v734, %v736
        %v738 = vrot.slane %v710, %v737
        %v739 = vcombine.high %v717, %v717
        %v740 = vcombine.high %v724, %v724
        %v741 = vcombine.high %v731, %v731
        %v742 = vcombine.high %v738, %v738
        %vm751 = vcmask 57344
        %752 = vst.msk [vmem:[%s260] sm:$0x1] %vm751, %v717
        %753 = vst.msk [vmem:[%s260 + $0x8] sm:$0x1] %vm751, %v731
        %754 = vst.msk [vmem:[%s260 + $0x10] sm:$0x1] %vm751, %v739
        %755 = vst.msk [vmem:[%s260 + $0x18] sm:$0x1] %vm751, %v741
        %756 = vst.msk [vmem:[%s260 + $0x20] sm:$0x1] %vm751, %v724
        %757 = vst.msk [vmem:[%s260 + $0x28] sm:$0x1] %vm751, %v738
        %758 = vst.msk [vmem:[%s260 + $0x30] sm:$0x1] %vm751, %v740
        %759 = vst.msk [vmem:[%s260 + $0x38] sm:$0x1] %vm751, %v742
        %v760 = vld [vmem:[%s234 + $0x2] sm:$0x1]
        %v761 = vld [vmem:[%s234 + $0x12] sm:$0x1]
        %v762 = vld [vmem:[%s234 + $0x22] sm:$0x1]
        %v763 = vld [vmem:[%s234 + $0x32] sm:$0x1]
        %v764 = vld [vmem:[%s234 + $0x42] sm:$0x1]
        %v765 = vld [vmem:[%s234 + $0x52] sm:$0x1]
        %v766 = vld [vmem:[%s234 + $0x62] sm:$0x1]
        %v767 = vld [vmem:[%s234 + $0x72] sm:$0x1]
        %v768 = vld [vmem:[%s234 + $0x82] sm:$0x1]
        %v769 = vld [vmem:[%s234 + $0x92] sm:$0x1]
        %v770 = vld [vmem:[%s234 + $0xa2] sm:$0x1]
        %v771 = vld [vmem:[%s234 + $0xb2] sm:$0x1]
        %v772 = vld [vmem:[%s234 + $0xc2] sm:$0x1]
        %v773 = vld [vmem:[%s234 + $0xd2] sm:$0x1]
        %v774 = vld [vmem:[%s234 + $0xe2] sm:$0x1]
        %v775 = vld [vmem:[%s234 + $0xf2] sm:$0x1]
        %v776 = vld [vmem:[%s234 + $0x3] sm:$0x1]
        %v777 = vld [vmem:[%s234 + $0x13] sm:$0x1]
        %v778 = vld [vmem:[%s234 + $0x23] sm:$0x1]
        %v779 = vld [vmem:[%s234 + $0x33] sm:$0x1]
        %v780 = vld [vmem:[%s234 + $0x43] sm:$0x1]
        %v781 = vld [vmem:[%s234 + $0x53] sm:$0x1]
        %v782 = vld [vmem:[%s234 + $0x63] sm:$0x1]
        %v783 = vld [vmem:[%s234 + $0x73] sm:$0x1]
        %v784 = vld [vmem:[%s234 + $0x83] sm:$0x1]
        %v785 = vld [vmem:[%s234 + $0x93] sm:$0x1]
        %v786 = vld [vmem:[%s234 + $0xa3] sm:$0x1]
        %v787 = vld [vmem:[%s234 + $0xb3] sm:$0x1]
        %v788 = vld [vmem:[%s234 + $0xc3] sm:$0x1]
        %v789 = vld [vmem:[%s234 + $0xd3] sm:$0x1]
        %v790 = vld [vmem:[%s234 + $0xe3] sm:$0x1]
        %v791 = vld [vmem:[%s234 + $0xf3] sm:$0x1]
        %v792 = vmul.f32 %v760, %v304
        %v793 = vmul.f32 %v761, %v309
        %v794 = vmul.f32 %v762, %v310
        %v795 = vmul.f32 %v763, %v311
        %v796 = vmul.f32 %v764, %v312
        %v797 = vmul.f32 %v765, %v313
        %v798 = vmul.f32 %v766, %v314
        %v799 = vmul.f32 %v767, %v315
        %v800 = vmul.f32 %v768, %v308
        %v801 = vmul.f32 %v769, %v316
        %v802 = vmul.f32 %v770, %v317
        %v803 = vmul.f32 %v771, %v318
        %v804 = vmul.f32 %v772, %v319
        %v805 = vmul.f32 %v773, %v320
        %v806 = vmul.f32 %v774, %v321
        %v807 = vmul.f32 %v775, %v322
        %v808 = vadd.f32 %v792, %v358
        %v809 = vadd.f32 %v793, %v363
        %v810 = vadd.f32 %v794, %v364
        %v811 = vadd.f32 %v795, %v365
        %v812 = vadd.f32 %v796, %v366
        %v813 = vadd.f32 %v797, %v367
        %v814 = vadd.f32 %v798, %v368
        %v815 = vadd.f32 %v799, %v369
        %v816 = vadd.f32 %v800, %v362
        %v817 = vadd.f32 %v801, %v370
        %v818 = vadd.f32 %v802, %v371
        %v819 = vadd.f32 %v803, %v372
        %v820 = vadd.f32 %v804, %v373
        %v821 = vadd.f32 %v805, %v374
        %v822 = vadd.f32 %v806, %v375
        %v823 = vadd.f32 %v807, %v376
        %v824 = vmax.f32 %v808, 0.0
        %v825 = vmax.f32 %v809, 0.0
        %v826 = vmax.f32 %v810, 0.0
        %v827 = vmax.f32 %v811, 0.0
        %v828 = vmax.f32 %v812, 0.0
        %v829 = vmax.f32 %v813, 0.0
        %v830 = vmax.f32 %v814, 0.0
        %v831 = vmax.f32 %v815, 0.0
        %v832 = vmax.f32 %v816, 0.0
        %v833 = vmax.f32 %v817, 0.0
        %v834 = vmax.f32 %v818, 0.0
        %v835 = vmax.f32 %v819, 0.0
        %v836 = vmax.f32 %v820, 0.0
        %v837 = vmax.f32 %v821, 0.0
        %v838 = vmax.f32 %v822, 0.0
        %v839 = vmax.f32 %v823, 0.0
        %v840 = vmul.f32 %v776, %v304
        %v841 = vmul.f32 %v777, %v309
        %v842 = vmul.f32 %v778, %v310
        %v843 = vmul.f32 %v779, %v311
        %v844 = vmul.f32 %v780, %v312
        %v845 = vmul.f32 %v781, %v313
        %v846 = vmul.f32 %v782, %v314
        %v847 = vmul.f32 %v783, %v315
        %v848 = vmul.f32 %v784, %v308
        %v849 = vmul.f32 %v785, %v316
        %v850 = vmul.f32 %v786, %v317
        %v851 = vmul.f32 %v787, %v318
        %v852 = vmul.f32 %v788, %v319
        %v853 = vmul.f32 %v789, %v320
        %v854 = vmul.f32 %v790, %v321
        %v855 = vmul.f32 %v791, %v322
        %v856 = vadd.f32 %v840, %v358
        %v857 = vadd.f32 %v841, %v363
        %v858 = vadd.f32 %v842, %v364
        %v859 = vadd.f32 %v843, %v365
        %v860 = vadd.f32 %v844, %v366
        %v861 = vadd.f32 %v845, %v367
        %v862 = vadd.f32 %v846, %v368
        %v863 = vadd.f32 %v847, %v369
        %v864 = vadd.f32 %v848, %v362
        %v865 = vadd.f32 %v849, %v370
        %v866 = vadd.f32 %v850, %v371
        %v867 = vadd.f32 %v851, %v372
        %v868 = vadd.f32 %v852, %v373
        %v869 = vadd.f32 %v853, %v374
        %v870 = vadd.f32 %v854, %v375
        %v871 = vadd.f32 %v855, %v376
        %v872 = vmax.f32 %v856, 0.0
        %v873 = vmax.f32 %v857, 0.0
        %v874 = vmax.f32 %v858, 0.0
        %v875 = vmax.f32 %v859, 0.0
        %v876 = vmax.f32 %v860, 0.0
        %v877 = vmax.f32 %v861, 0.0
        %v878 = vmax.f32 %v862, 0.0
        %v879 = vmax.f32 %v863, 0.0
        %v880 = vmax.f32 %v864, 0.0
        %v881 = vmax.f32 %v865, 0.0
        %v882 = vmax.f32 %v866, 0.0
        %v883 = vmax.f32 %v867, 0.0
        %v884 = vmax.f32 %v868, 0.0
        %v885 = vmax.f32 %v869, 0.0
        %v886 = vmax.f32 %v870, 0.0
        %v887 = vmax.f32 %v871, 0.0
        %v888 = vadd.f32 %v824, %v872
        %v889 = vadd.f32 %v825, %v873
        %v890 = vadd.f32 %v826, %v874
        %v891 = vadd.f32 %v827, %v875
        %v892 = vadd.f32 %v828, %v876
        %v893 = vadd.f32 %v829, %v877
        %v894 = vadd.f32 %v830, %v878
        %v895 = vadd.f32 %v831, %v879
        %v896 = vadd.f32 %v832, %v880
        %v897 = vadd.f32 %v833, %v881
        %v898 = vadd.f32 %v834, %v882
        %v899 = vadd.f32 %v835, %v883
        %v900 = vadd.f32 %v836, %v884
        %v901 = vadd.f32 %v837, %v885
        %v902 = vadd.f32 %v838, %v886
        %v903 = vadd.f32 %v839, %v887
        %v920 = vrot.slane %v889, 7
        %v921 = vsel %vm506, %v920, %v888
        %v922 = vrot.slane %v890, 6
        %v923 = vsel %vm509, %v922, %v921
        %v924 = vrot.slane %v891, 5
        %v925 = vsel %vm512, %v924, %v923
        %v926 = vrot.slane %v892, 4
        %v927 = vsel %vm515, %v926, %v925
        %v928 = vrot.slane %v893, 3
        %v929 = vsel %vm518, %v928, %v927
        %v930 = vrot.slane %v894, 2
        %v931 = vsel %vm521, %v930, %v929
        %v932 = vrot.slane %v895, 1
        %v933 = vsel %vm524, %v932, %v931
        %v934 = vrot.slane %v897, 7
        %v935 = vsel %vm506, %v934, %v896
        %v936 = vrot.slane %v898, 6
        %v937 = vsel %vm509, %v936, %v935
        %v938 = vrot.slane %v899, 5
        %v939 = vsel %vm512, %v938, %v937
        %v940 = vrot.slane %v900, 4
        %v941 = vsel %vm515, %v940, %v939
        %v942 = vrot.slane %v901, 3
        %v943 = vsel %vm518, %v942, %v941
        %v944 = vrot.slane %v902, 2
        %v945 = vsel %vm521, %v944, %v943
        %v946 = vrot.slane %v903, 1
        %v947 = vsel %vm524, %v946, %v945
        %v948 = vsel %vm540, %v933, 0
        %v950 = vsel %vm540, %v947, 0
        %952 = vmatprep.subr.mxu0 0.0
        %953 = vmatpush1.msra.mxu0 %v267
        %954 = vmatprep.subr.mxu0 0.0
        %955 = vmatpush1.msra.mxu0 %v268
        %956 = vmatprep.subr.mxu0 0.0
        %957 = vmatpush1.msra.mxu0 0.0
        %958 = vmatprep.subr.mxu0 0.0
        %959 = vmatpush1.msra.mxu0 0.0
        %960 = vmatprep.subr.mxu0 0.0
        %961 = vmatpush1.msra.mxu0 0.0
        %962 = vmatprep.subr.mxu0 0.0
        %963 = vmatpush1.msra.mxu0 0.0
        %964 = vmatprep.subr.mxu0 0.0
        %965 = vmatpush1.msra.mxu0 0.0
        %966 = vmatprep.subr.mxu0 0.0
        %967 = vmatpush1.msra.mxu0 0.0
        %968 = vmatprep.subr.mxu0 0.0
        %969 = vmatpush1.msra.mxu0 0.0
        %970 = vmatprep.subr.mxu0 0.0
        %971 = vmatpush1.msra.mxu0 0.0
        %972 = vmatprep.subr.mxu0 0.0
        %973 = vmatpush1.msra.mxu0 0.0
        %974 = vmatprep.subr.mxu0 0.0
        %975 = vmatpush1.msra.mxu0 0.0
        %976 = vmatprep.subr.mxu0 0.0
        %977 = vmatpush1.msra.mxu0 0.0
        %978 = vmatprep.subr.mxu0 0.0
        %979 = vmatpush1.msra.mxu0 0.0
        %980 = vmatprep.subr.mxu0 0.0
        %981 = vmatpush1.msra.mxu0 0.0
        %982 = vmatprep.subr.mxu0 0.0
        %983 = vmatpush1.msra.mxu0 0.0
        %984 = vmatprep.subr.mxu0 0.0
        %985 = vmatpush1.msra.mxu0 0.0
        %986 = vmatprep.subr.mxu0 0.0
        %987 = vmatpush1.msra.mxu0 0.0
        %988 = vmatprep.subr.mxu0 0.0
        %989 = vmatpush1.msra.mxu0 0.0
        %990 = vmatprep.subr.mxu0 0.0
        %991 = vmatpush1.msra.mxu0 0.0
        %992 = vmatprep.subr.mxu0 0.0
        %993 = vmatpush1.msra.mxu0 0.0
        %994 = vmatprep.subr.mxu0 0.0
        %995 = vmatpush1.msra.mxu0 0.0
        %996 = vmatprep.subr.mxu0 0.0
        %997 = vmatpush1.msra.mxu0 0.0
        %998 = vmatprep.subr.mxu0 0.0
        %999 = vmatpush1.msra.mxu0 0.0
        %1000 = vmatprep.subr.mxu0 0.0
        %1001 = vmatpush1.msra.mxu0 0.0
        %1002 = vmatprep.subr.mxu0 0.0
        %1003 = vmatpush1.msra.mxu0 0.0
        %1004 = vmatprep.subr.mxu0 0.0
        %1005 = vmatpush1.msra.mxu0 0.0
        %1006 = vmatprep.subr.mxu0 0.0
        %1007 = vmatpush1.msra.mxu0 0.0
        %1008 = vmatprep.subr.mxu0 0.0
        %1009 = vmatpush1.msra.mxu0 0.0
        %1010 = vmatprep.subr.mxu0 0.0
        %1011 = vmatpush1.msra.mxu0 0.0
        %1012 = vmatprep.subr.mxu0 0.0
        %1013 = vmatpush1.msra.mxu0 0.0
        %1014 = vmatprep.subr.mxu0 0.0
        %1015 = vmatpush1.msra.mxu0 0.0
        %1016 = vmatprep.mubr.f32.mxu0 0.0
        %1017 = vmatmul.mubr.f32.gmra.mrb[0].mxu0 %v948
        %v1018 = vpop.f32.mrb[0].mxu0
        %v1019 = vadd.f32 0.0, %v1018
        %v1020 = vpop.f32.mrb[0].mxu0
        %1021 = vmatprep.mubr.f32.mxu0 0.0
        %1022 = vmatmul.mubr.f32.gmra.mrb[0].mxu0 %v950
        %v1023 = vpop.f32.mrb[0].mxu0
        %v1024 = vadd.f32 0.0, %v1023
        %v1025 = vpop.f32.mrb[0].mxu0
        %1026 = vdwg.mxu0
        %1027 = vmatprep.subr.mxu0 0.0
        %1028 = vmatpush1.msra.mxu0 %v1019
        %1029 = vmatprep.subr.mxu0 0.0
        %1030 = vmatpush1.msra.mxu0 %v1024
        %1031 = vmatprep.subr.mxu0 0.0
        %1032 = vmatpush1.msra.mxu0 0.0
        %1033 = vmatprep.subr.mxu0 0.0
        %1034 = vmatpush1.msra.mxu0 0.0
        %1035 = vmatprep.subr.mxu0 0.0
        %1036 = vmatpush1.msra.mxu0 0.0
        %1037 = vmatprep.subr.mxu0 0.0
        %1038 = vmatpush1.msra.mxu0 0.0
        %1039 = vmatprep.subr.mxu0 0.0
        %1040 = vmatpush1.msra.mxu0 0.0
        %1041 = vmatprep.subr.mxu0 0.0
        %1042 = vmatpush1.msra.mxu0 0.0
        %1043 = vmatprep.subr.mxu0 0.0
        %1044 = vmatpush1.msra.mxu0 0.0
        %1045 = vmatprep.subr.mxu0 0.0
        %1046 = vmatpush1.msra.mxu0 0.0
        %1047 = vmatprep.subr.mxu0 0.0
        %1048 = vmatpush1.msra.mxu0 0.0
        %1049 = vmatprep.subr.mxu0 0.0
        %1050 = vmatpush1.msra.mxu0 0.0
        %1051 = vmatprep.subr.mxu0 0.0
        %1052 = vmatpush1.msra.mxu0 0.0
        %1053 = vmatprep.subr.mxu0 0.0
        %1054 = vmatpush1.msra.mxu0 0.0
        %1055 = vmatprep.subr.mxu0 0.0
        %1056 = vmatpush1.msra.mxu0 0.0
        %1057 = vmatprep.subr.mxu0 0.0
        %1058 = vmatpush1.msra.mxu0 0.0
        %1059 = vmatprep.subr.mxu0 0.0
        %1060 = vmatpush1.msra.mxu0 0.0
        %1061 = vmatprep.subr.mxu0 0.0
        %1062 = vmatpush1.msra.mxu0 0.0
        %1063 = vmatprep.subr.mxu0 0.0
        %1064 = vmatpush1.msra.mxu0 0.0
        %1065 = vmatprep.subr.mxu0 0.0
        %1066 = vmatpush1.msra.mxu0 0.0
        %1067 = vmatprep.subr.mxu0 0.0
        %1068 = vmatpush1.msra.mxu0 0.0
        %1069 = vmatprep.subr.mxu0 0.0
        %1070 = vmatpush1.msra.mxu0 0.0
        %1071 = vmatprep.subr.mxu0 0.0
        %1072 = vmatpush1.msra.mxu0 0.0
        %1073 = vmatprep.subr.mxu0 0.0
        %1074 = vmatpush1.msra.mxu0 0.0
        %1075 = vmatprep.subr.mxu0 0.0
        %1076 = vmatpush1.msra.mxu0 0.0
        %1077 = vmatprep.subr.mxu0 0.0
        %1078 = vmatpush1.msra.mxu0 0.0
        %1079 = vmatprep.subr.mxu0 0.0
        %1080 = vmatpush1.msra.mxu0 0.0
        %1081 = vmatprep.subr.mxu0 0.0
        %1082 = vmatpush1.msra.mxu0 0.0
        %1083 = vmatprep.subr.mxu0 0.0
        %1084 = vmatpush1.msra.mxu0 0.0
        %1085 = vmatprep.subr.mxu0 0.0
        %1086 = vmatpush1.msra.mxu0 0.0
        %1087 = vmatprep.subr.mxu0 0.0
        %1088 = vmatpush1.msra.mxu0 0.0
        %1089 = vmatprep.subr.mxu0 0.0
        %1090 = vmatpush1.msra.mxu0 0.0
        %1091 = vmatprep.mubr.f32.mxu0 0.0
        %1092 = vmatmul.mubr.f32.gmra.mrb[0].mxu0 %v621
        %v1093 = vpop.f32.mrb[0].mxu0
        %v1094 = vadd.f32 0.0, %v1093
        %v1095 = vpop.f32.mrb[0].mxu0
        %1096 = vdwg.mxu0
        %v1098 = vcombine.high %v1094, %v1094
        %v1100 = vunpack.c.l.s4 1966171168
        %v1101 = vunpack.c.0.s8 %v1100
        %v1102 = vlaneseq
        %v1103 = vshrl.u32 %v1102, 7
        %v1104 = vsub.s32 %v1101, %v1103
        %v1105 = vrot.slane %v1094, %v1104
        %v1107 = vunpack.c.l.s4 1966171168
        %v1108 = vunpack.c.0.s8 %v1107
        %v1109 = vlaneseq
        %v1110 = vshrl.u32 %v1109, 7
        %v1111 = vsub.s32 %v1108, %v1110
        %v1112 = vrot.slane %v1098, %v1111
        %v1113 = vcombine.high %v1105, %v1105
        %v1114 = vcombine.high %v1112, %v1112
        %v1116 = vunpack.c.l.s4 1966171168
        %v1117 = vunpack.c.0.s8 %v1116
        %v1118 = vlaneseq
        %v1119 = vshrl.u32 %v1118, 7
        %v1120 = vsub.s32 %v1117, %v1119
        %v1121 = vrot.slane %v1105, %v1120
        %v1123 = vunpack.c.l.s4 1966171168
        %v1124 = vunpack.c.0.s8 %v1123
        %v1125 = vlaneseq
        %v1126 = vshrl.u32 %v1125, 7
        %v1127 = vsub.s32 %v1124, %v1126
        %v1128 = vrot.slane %v1112, %v1127
        %v1130 = vunpack.c.l.s4 1966171168
        %v1131 = vunpack.c.0.s8 %v1130
        %v1132 = vlaneseq
        %v1133 = vshrl.u32 %v1132, 7
        %v1134 = vsub.s32 %v1131, %v1133
        %v1135 = vrot.slane %v1113, %v1134
        %v1137 = vunpack.c.l.s4 1966171168
        %v1138 = vunpack.c.0.s8 %v1137
        %v1139 = vlaneseq
        %v1140 = vshrl.u32 %v1139, 7
        %v1141 = vsub.s32 %v1138, %v1140
        %v1142 = vrot.slane %v1114, %v1141
        %v1143 = vcombine.high %v1121, %v1121
        %v1144 = vcombine.high %v1128, %v1128
        %v1145 = vcombine.high %v1135, %v1135
        %v1146 = vcombine.high %v1142, %v1142
        %1155 = vst.msk [vmem:[%s260 + $0x1] sm:$0x1] %vm751, %v1121
        %1156 = vst.msk [vmem:[%s260 + $0x9] sm:$0x1] %vm751, %v1135
        %1157 = vst.msk [vmem:[%s260 + $0x11] sm:$0x1] %vm751, %v1143
        %1158 = vst.msk [vmem:[%s260 + $0x19] sm:$0x1] %vm751, %v1145
        %1159 = vst.msk [vmem:[%s260 + $0x21] sm:$0x1] %vm751, %v1128
        %1160 = vst.msk [vmem:[%s260 + $0x29] sm:$0x1] %vm751, %v1142
        %1161 = vst.msk [vmem:[%s260 + $0x31] sm:$0x1] %vm751, %v1144
        %1162 = vst.msk [vmem:[%s260 + $0x39] sm:$0x1] %vm751, %v1146
        %v1163 = vld [vmem:[%s234 + $0x4] sm:$0x1]
        %v1164 = vld [vmem:[%s234 + $0x14] sm:$0x1]
        %v1165 = vld [vmem:[%s234 + $0x24] sm:$0x1]
        %v1166 = vld [vmem:[%s234 + $0x34] sm:$0x1]
        %v1167 = vld [vmem:[%s234 + $0x44] sm:$0x1]
        %v1168 = vld [vmem:[%s234 + $0x54] sm:$0x1]
        %v1169 = vld [vmem:[%s234 + $0x64] sm:$0x1]
        %v1170 = vld [vmem:[%s234 + $0x74] sm:$0x1]
        %v1171 = vld [vmem:[%s234 + $0x84] sm:$0x1]
        %v1172 = vld [vmem:[%s234 + $0x94] sm:$0x1]
        %v1173 = vld [vmem:[%s234 + $0xa4] sm:$0x1]
        %v1174 = vld [vmem:[%s234 + $0xb4] sm:$0x1]
        %v1175 = vld [vmem:[%s234 + $0xc4] sm:$0x1]
        %v1176 = vld [vmem:[%s234 + $0xd4] sm:$0x1]
        %v1177 = vld [vmem:[%s234 + $0xe4] sm:$0x1]
        %v1178 = vld [vmem:[%s234 + $0xf4] sm:$0x1]
        %v1179 = vld [vmem:[%s234 + $0x5] sm:$0x1]
        %v1180 = vld [vmem:[%s234 + $0x15] sm:$0x1]
        %v1181 = vld [vmem:[%s234 + $0x25] sm:$0x1]
        %v1182 = vld [vmem:[%s234 + $0x35] sm:$0x1]
        %v1183 = vld [vmem:[%s234 + $0x45] sm:$0x1]
        %v1184 = vld [vmem:[%s234 + $0x55] sm:$0x1]
        %v1185 = vld [vmem:[%s234 + $0x65] sm:$0x1]
        %v1186 = vld [vmem:[%s234 + $0x75] sm:$0x1]
        %v1187 = vld [vmem:[%s234 + $0x85] sm:$0x1]
        %v1188 = vld [vmem:[%s234 + $0x95] sm:$0x1]
        %v1189 = vld [vmem:[%s234 + $0xa5] sm:$0x1]
        %v1190 = vld [vmem:[%s234 + $0xb5] sm:$0x1]
        %v1191 = vld [vmem:[%s234 + $0xc5] sm:$0x1]
        %v1192 = vld [vmem:[%s234 + $0xd5] sm:$0x1]
        %v1193 = vld [vmem:[%s234 + $0xe5] sm:$0x1]
        %v1194 = vld [vmem:[%s234 + $0xf5] sm:$0x1]
        %v1195 = vmul.f32 %v1163, %v304
        %v1196 = vmul.f32 %v1164, %v309
        %v1197 = vmul.f32 %v1165, %v310
        %v1198 = vmul.f32 %v1166, %v311
        %v1199 = vmul.f32 %v1167, %v312
        %v1200 = vmul.f32 %v1168, %v313
        %v1201 = vmul.f32 %v1169, %v314
        %v1202 = vmul.f32 %v1170, %v315
        %v1203 = vmul.f32 %v1171, %v308
        %v1204 = vmul.f32 %v1172, %v316
        %v1205 = vmul.f32 %v1173, %v317
        %v1206 = vmul.f32 %v1174, %v318
        %v1207 = vmul.f32 %v1175, %v319
        %v1208 = vmul.f32 %v1176, %v320
        %v1209 = vmul.f32 %v1177, %v321
        %v1210 = vmul.f32 %v1178, %v322
        %v1211 = vadd.f32 %v1195, %v358
        %v1212 = vadd.f32 %v1196, %v363
        %v1213 = vadd.f32 %v1197, %v364
        %v1214 = vadd.f32 %v1198, %v365
        %v1215 = vadd.f32 %v1199, %v366
        %v1216 = vadd.f32 %v1200, %v367
        %v1217 = vadd.f32 %v1201, %v368
        %v1218 = vadd.f32 %v1202, %v369
        %v1219 = vadd.f32 %v1203, %v362
        %v1220 = vadd.f32 %v1204, %v370
        %v1221 = vadd.f32 %v1205, %v371
        %v1222 = vadd.f32 %v1206, %v372
        %v1223 = vadd.f32 %v1207, %v373
        %v1224 = vadd.f32 %v1208, %v374
        %v1225 = vadd.f32 %v1209, %v375
        %v1226 = vadd.f32 %v1210, %v376
        %v1227 = vmax.f32 %v1211, 0.0
        %v1228 = vmax.f32 %v1212, 0.0
        %v1229 = vmax.f32 %v1213, 0.0
        %v1230 = vmax.f32 %v1214, 0.0
        %v1231 = vmax.f32 %v1215, 0.0
        %v1232 = vmax.f32 %v1216, 0.0
        %v1233 = vmax.f32 %v1217, 0.0
        %v1234 = vmax.f32 %v1218, 0.0
        %v1235 = vmax.f32 %v1219, 0.0
        %v1236 = vmax.f32 %v1220, 0.0
        %v1237 = vmax.f32 %v1221, 0.0
        %v1238 = vmax.f32 %v1222, 0.0
        %v1239 = vmax.f32 %v1223, 0.0
        %v1240 = vmax.f32 %v1224, 0.0
        %v1241 = vmax.f32 %v1225, 0.0
        %v1242 = vmax.f32 %v1226, 0.0
        %v1243 = vmul.f32 %v1179, %v304
        %v1244 = vmul.f32 %v1180, %v309
        %v1245 = vmul.f32 %v1181, %v310
        %v1246 = vmul.f32 %v1182, %v311
        %v1247 = vmul.f32 %v1183, %v312
        %v1248 = vmul.f32 %v1184, %v313
        %v1249 = vmul.f32 %v1185, %v314
        %v1250 = vmul.f32 %v1186, %v315
        %v1251 = vmul.f32 %v1187, %v308
        %v1252 = vmul.f32 %v1188, %v316
        %v1253 = vmul.f32 %v1189, %v317
        %v1254 = vmul.f32 %v1190, %v318
        %v1255 = vmul.f32 %v1191, %v319
        %v1256 = vmul.f32 %v1192, %v320
        %v1257 = vmul.f32 %v1193, %v321
        %v1258 = vmul.f32 %v1194, %v322
        %v1259 = vadd.f32 %v1243, %v358
        %v1260 = vadd.f32 %v1244, %v363
        %v1261 = vadd.f32 %v1245, %v364
        %v1262 = vadd.f32 %v1246, %v365
        %v1263 = vadd.f32 %v1247, %v366
        %v1264 = vadd.f32 %v1248, %v367
        %v1265 = vadd.f32 %v1249, %v368
        %v1266 = vadd.f32 %v1250, %v369
        %v1267 = vadd.f32 %v1251, %v362
        %v1268 = vadd.f32 %v1252, %v370
        %v1269 = vadd.f32 %v1253, %v371
        %v1270 = vadd.f32 %v1254, %v372
        %v1271 = vadd.f32 %v1255, %v373
        %v1272 = vadd.f32 %v1256, %v374
        %v1273 = vadd.f32 %v1257, %v375
        %v1274 = vadd.f32 %v1258, %v376
        %v1275 = vmax.f32 %v1259, 0.0
        %v1276 = vmax.f32 %v1260, 0.0
        %v1277 = vmax.f32 %v1261, 0.0
        %v1278 = vmax.f32 %v1262, 0.0
        %v1279 = vmax.f32 %v1263, 0.0
        %v1280 = vmax.f32 %v1264, 0.0
        %v1281 = vmax.f32 %v1265, 0.0
        %v1282 = vmax.f32 %v1266, 0.0
        %v1283 = vmax.f32 %v1267, 0.0
        %v1284 = vmax.f32 %v1268, 0.0
        %v1285 = vmax.f32 %v1269, 0.0
        %v1286 = vmax.f32 %v1270, 0.0
        %v1287 = vmax.f32 %v1271, 0.0
        %v1288 = vmax.f32 %v1272, 0.0
        %v1289 = vmax.f32 %v1273, 0.0
        %v1290 = vmax.f32 %v1274, 0.0
        %v1291 = vadd.f32 %v1227, %v1275
        %v1292 = vadd.f32 %v1228, %v1276
        %v1293 = vadd.f32 %v1229, %v1277
        %v1294 = vadd.f32 %v1230, %v1278
        %v1295 = vadd.f32 %v1231, %v1279
        %v1296 = vadd.f32 %v1232, %v1280
        %v1297 = vadd.f32 %v1233, %v1281
        %v1298 = vadd.f32 %v1234, %v1282
        %v1299 = vadd.f32 %v1235, %v1283
        %v1300 = vadd.f32 %v1236, %v1284
        %v1301 = vadd.f32 %v1237, %v1285
        %v1302 = vadd.f32 %v1238, %v1286
        %v1303 = vadd.f32 %v1239, %v1287
        %v1304 = vadd.f32 %v1240, %v1288
        %v1305 = vadd.f32 %v1241, %v1289
        %v1306 = vadd.f32 %v1242, %v1290
        %v1323 = vrot.slane %v1292, 7
        %v1324 = vsel %vm506, %v1323, %v1291
        %v1325 = vrot.slane %v1293, 6
        %v1326 = vsel %vm509, %v1325, %v1324
        %v1327 = vrot.slane %v1294, 5
        %v1328 = vsel %vm512, %v1327, %v1326
        %v1329 = vrot.slane %v1295, 4
        %v1330 = vsel %vm515, %v1329, %v1328
        %v1331 = vrot.slane %v1296, 3
        %v1332 = vsel %vm518, %v1331, %v1330
        %v1333 = vrot.slane %v1297, 2
        %v1334 = vsel %vm521, %v1333, %v1332
        %v1335 = vrot.slane %v1298, 1
        %v1336 = vsel %vm524, %v1335, %v1334
        %v1337 = vrot.slane %v1300, 7
        %v1338 = vsel %vm506, %v1337, %v1299
        %v1339 = vrot.slane %v1301, 6
        %v1340 = vsel %vm509, %v1339, %v1338
        %v1341 = vrot.slane %v1302, 5
        %v1342 = vsel %vm512, %v1341, %v1340
        %v1343 = vrot.slane %v1303, 4
        %v1344 = vsel %vm515, %v1343, %v1342
        %v1345 = vrot.slane %v1304, 3
        %v1346 = vsel %vm518, %v1345, %v1344
        %v1347 = vrot.slane %v1305, 2
        %v1348 = vsel %vm521, %v1347, %v1346
        %v1349 = vrot.slane %v1306, 1
        %v1350 = vsel %vm524, %v1349, %v1348
        %v1351 = vsel %vm540, %v1336, 0
        %v1353 = vsel %vm540, %v1350, 0
        %1355 = vmatprep.subr.mxu0 0.0
        %1356 = vmatpush1.msra.mxu0 %v267
        %1357 = vmatprep.subr.mxu0 0.0
        %1358 = vmatpush1.msra.mxu0 %v268
        %1359 = vmatprep.subr.mxu0 0.0
        %1360 = vmatpush1.msra.mxu0 0.0
        %1361 = vmatprep.subr.mxu0 0.0
        %1362 = vmatpush1.msra.mxu0 0.0
        %1363 = vmatprep.subr.mxu0 0.0
        %1364 = vmatpush1.msra.mxu0 0.0
        %1365 = vmatprep.subr.mxu0 0.0
        %1366 = vmatpush1.msra.mxu0 0.0
        %1367 = vmatprep.subr.mxu0 0.0
        %1368 = vmatpush1.msra.mxu0 0.0
        %1369 = vmatprep.subr.mxu0 0.0
        %1370 = vmatpush1.msra.mxu0 0.0
        %1371 = vmatprep.subr.mxu0 0.0
        %1372 = vmatpush1.msra.mxu0 0.0
        %1373 = vmatprep.subr.mxu0 0.0
        %1374 = vmatpush1.msra.mxu0 0.0
        %1375 = vmatprep.subr.mxu0 0.0
        %1376 = vmatpush1.msra.mxu0 0.0
        %1377 = vmatprep.subr.mxu0 0.0
        %1378 = vmatpush1.msra.mxu0 0.0
        %1379 = vmatprep.subr.mxu0 0.0
        %1380 = vmatpush1.msra.mxu0 0.0
        %1381 = vmatprep.subr.mxu0 0.0
        %1382 = vmatpush1.msra.mxu0 0.0
        %1383 = vmatprep.subr.mxu0 0.0
        %1384 = vmatpush1.msra.mxu0 0.0
        %1385 = vmatprep.subr.mxu0 0.0
        %1386 = vmatpush1.msra.mxu0 0.0
        %1387 = vmatprep.subr.mxu0 0.0
        %1388 = vmatpush1.msra.mxu0 0.0
        %1389 = vmatprep.subr.mxu0 0.0
        %1390 = vmatpush1.msra.mxu0 0.0
        %1391 = vmatprep.subr.mxu0 0.0
        %1392 = vmatpush1.msra.mxu0 0.0
        %1393 = vmatprep.subr.mxu0 0.0
        %1394 = vmatpush1.msra.mxu0 0.0
        %1395 = vmatprep.subr.mxu0 0.0
        %1396 = vmatpush1.msra.mxu0 0.0
        %1397 = vmatprep.subr.mxu0 0.0
        %1398 = vmatpush1.msra.mxu0 0.0
        %1399 = vmatprep.subr.mxu0 0.0
        %1400 = vmatpush1.msra.mxu0 0.0
        %1401 = vmatprep.subr.mxu0 0.0
        %1402 = vmatpush1.msra.mxu0 0.0
        %1403 = vmatprep.subr.mxu0 0.0
        %1404 = vmatpush1.msra.mxu0 0.0
        %1405 = vmatprep.subr.mxu0 0.0
        %1406 = vmatpush1.msra.mxu0 0.0
        %1407 = vmatprep.subr.mxu0 0.0
        %1408 = vmatpush1.msra.mxu0 0.0
        %1409 = vmatprep.subr.mxu0 0.0
        %1410 = vmatpush1.msra.mxu0 0.0
        %1411 = vmatprep.subr.mxu0 0.0
        %1412 = vmatpush1.msra.mxu0 0.0
        %1413 = vmatprep.subr.mxu0 0.0
        %1414 = vmatpush1.msra.mxu0 0.0
        %1415 = vmatprep.subr.mxu0 0.0
        %1416 = vmatpush1.msra.mxu0 0.0
        %1417 = vmatprep.subr.mxu0 0.0
        %1418 = vmatpush1.msra.mxu0 0.0
        %1419 = vmatprep.mubr.f32.mxu0 0.0
        %1420 = vmatmul.mubr.f32.gmra.mrb[0].mxu0 %v1351
        %v1421 = vpop.f32.mrb[0].mxu0
        %v1422 = vadd.f32 0.0, %v1421
        %v1423 = vpop.f32.mrb[0].mxu0
        %1424 = vmatprep.mubr.f32.mxu0 0.0
        %1425 = vmatmul.mubr.f32.gmra.mrb[0].mxu0 %v1353
        %v1426 = vpop.f32.mrb[0].mxu0
        %v1427 = vadd.f32 0.0, %v1426
        %v1428 = vpop.f32.mrb[0].mxu0
        %1429 = vdwg.mxu0
        %1430 = vmatprep.subr.mxu0 0.0
        %1431 = vmatpush1.msra.mxu0 %v1422
        %1432 = vmatprep.subr.mxu0 0.0
        %1433 = vmatpush1.msra.mxu0 %v1427
        %1434 = vmatprep.subr.mxu0 0.0
        %1435 = vmatpush1.msra.mxu0 0.0
        %1436 = vmatprep.subr.mxu0 0.0
        %1437 = vmatpush1.msra.mxu0 0.0
        %1438 = vmatprep.subr.mxu0 0.0
        %1439 = vmatpush1.msra.mxu0 0.0
        %1440 = vmatprep.subr.mxu0 0.0
        %1441 = vmatpush1.msra.mxu0 0.0
        %1442 = vmatprep.subr.mxu0 0.0
        %1443 = vmatpush1.msra.mxu0 0.0
        %1444 = vmatprep.subr.mxu0 0.0
        %1445 = vmatpush1.msra.mxu0 0.0
        %1446 = vmatprep.subr.mxu0 0.0
        %1447 = vmatpush1.msra.mxu0 0.0
        %1448 = vmatprep.subr.mxu0 0.0
        %1449 = vmatpush1.msra.mxu0 0.0
        %1450 = vmatprep.subr.mxu0 0.0
        %1451 = vmatpush1.msra.mxu0 0.0
        %1452 = vmatprep.subr.mxu0 0.0
        %1453 = vmatpush1.msra.mxu0 0.0
        %1454 = vmatprep.subr.mxu0 0.0
        %1455 = vmatpush1.msra.mxu0 0.0
        %1456 = vmatprep.subr.mxu0 0.0
        %1457 = vmatpush1.msra.mxu0 0.0
        %1458 = vmatprep.subr.mxu0 0.0
        %1459 = vmatpush1.msra.mxu0 0.0
        %1460 = vmatprep.subr.mxu0 0.0
        %1461 = vmatpush1.msra.mxu0 0.0
        %1462 = vmatprep.subr.mxu0 0.0
        %1463 = vmatpush1.msra.mxu0 0.0
        %1464 = vmatprep.subr.mxu0 0.0
        %1465 = vmatpush1.msra.mxu0 0.0
        %1466 = vmatprep.subr.mxu0 0.0
        %1467 = vmatpush1.msra.mxu0 0.0
        %1468 = vmatprep.subr.mxu0 0.0
        %1469 = vmatpush1.msra.mxu0 0.0
        %1470 = vmatprep.subr.mxu0 0.0
        %1471 = vmatpush1.msra.mxu0 0.0
        %1472 = vmatprep.subr.mxu0 0.0
        %1473 = vmatpush1.msra.mxu0 0.0
        %1474 = vmatprep.subr.mxu0 0.0
        %1475 = vmatpush1.msra.mxu0 0.0
        %1476 = vmatprep.subr.mxu0 0.0
        %1477 = vmatpush1.msra.mxu0 0.0
        %1478 = vmatprep.subr.mxu0 0.0
        %1479 = vmatpush1.msra.mxu0 0.0
        %1480 = vmatprep.subr.mxu0 0.0
        %1481 = vmatpush1.msra.mxu0 0.0
        %1482 = vmatprep.subr.mxu0 0.0
        %1483 = vmatpush1.msra.mxu0 0.0
        %1484 = vmatprep.subr.mxu0 0.0
        %1485 = vmatpush1.msra.mxu0 0.0
        %1486 = vmatprep.subr.mxu0 0.0
        %1487 = vmatpush1.msra.mxu0 0.0
        %1488 = vmatprep.subr.mxu0 0.0
        %1489 = vmatpush1.msra.mxu0 0.0
        %1490 = vmatprep.subr.mxu0 0.0
        %1491 = vmatpush1.msra.mxu0 0.0
        %1492 = vmatprep.subr.mxu0 0.0
        %1493 = vmatpush1.msra.mxu0 0.0
        %1494 = vmatprep.mubr.f32.mxu0 0.0
        %1495 = vmatmul.mubr.f32.gmra.mrb[0].mxu0 %v621
        %v1496 = vpop.f32.mrb[0].mxu0
        %v1497 = vadd.f32 0.0, %v1496
        %v1498 = vpop.f32.mrb[0].mxu0
        %1499 = vdwg.mxu0
        %v1501 = vcombine.high %v1497, %v1497
        %v1503 = vunpack.c.l.s4 1966171168
        %v1504 = vunpack.c.0.s8 %v1503
        %v1505 = vlaneseq
        %v1506 = vshrl.u32 %v1505, 7
        %v1507 = vsub.s32 %v1504, %v1506
        %v1508 = vrot.slane %v1497, %v1507
        %v1510 = vunpack.c.l.s4 1966171168
        %v1511 = vunpack.c.0.s8 %v1510
        %v1512 = vlaneseq
        %v1513 = vshrl.u32 %v1512, 7
        %v1514 = vsub.s32 %v1511, %v1513
        %v1515 = vrot.slane %v1501, %v1514
        %v1516 = vcombine.high %v1508, %v1508
        %v1517 = vcombine.high %v1515, %v1515
        %v1519 = vunpack.c.l.s4 1966171168
        %v1520 = vunpack.c.0.s8 %v1519
        %v1521 = vlaneseq
        %v1522 = vshrl.u32 %v1521, 7
        %v1523 = vsub.s32 %v1520, %v1522
        %v1524 = vrot.slane %v1508, %v1523
        %v1526 = vunpack.c.l.s4 1966171168
        %v1527 = vunpack.c.0.s8 %v1526
        %v1528 = vlaneseq
        %v1529 = vshrl.u32 %v1528, 7
        %v1530 = vsub.s32 %v1527, %v1529
        %v1531 = vrot.slane %v1515, %v1530
        %v1533 = vunpack.c.l.s4 1966171168
        %v1534 = vunpack.c.0.s8 %v1533
        %v1535 = vlaneseq
        %v1536 = vshrl.u32 %v1535, 7
        %v1537 = vsub.s32 %v1534, %v1536
        %v1538 = vrot.slane %v1516, %v1537
        %v1540 = vunpack.c.l.s4 1966171168
        %v1541 = vunpack.c.0.s8 %v1540
        %v1542 = vlaneseq
        %v1543 = vshrl.u32 %v1542, 7
        %v1544 = vsub.s32 %v1541, %v1543
        %v1545 = vrot.slane %v1517, %v1544
        %v1546 = vcombine.high %v1524, %v1524
        %v1547 = vcombine.high %v1531, %v1531
        %v1548 = vcombine.high %v1538, %v1538
        %v1549 = vcombine.high %v1545, %v1545
        %1558 = vst.msk [vmem:[%s260 + $0x2] sm:$0x1] %vm751, %v1524
        %1559 = vst.msk [vmem:[%s260 + $0xa] sm:$0x1] %vm751, %v1538
        %1560 = vst.msk [vmem:[%s260 + $0x12] sm:$0x1] %vm751, %v1546
        %1561 = vst.msk [vmem:[%s260 + $0x1a] sm:$0x1] %vm751, %v1548
        %1562 = vst.msk [vmem:[%s260 + $0x22] sm:$0x1] %vm751, %v1531
        %1563 = vst.msk [vmem:[%s260 + $0x2a] sm:$0x1] %vm751, %v1545
        %1564 = vst.msk [vmem:[%s260 + $0x32] sm:$0x1] %vm751, %v1547
        %1565 = vst.msk [vmem:[%s260 + $0x3a] sm:$0x1] %vm751, %v1549
        %v1566 = vld [vmem:[%s234 + $0x6] sm:$0x1]
        %v1567 = vld [vmem:[%s234 + $0x16] sm:$0x1]
        %v1568 = vld [vmem:[%s234 + $0x26] sm:$0x1]
        %v1569 = vld [vmem:[%s234 + $0x36] sm:$0x1]
        %v1570 = vld [vmem:[%s234 + $0x46] sm:$0x1]
        %v1571 = vld [vmem:[%s234 + $0x56] sm:$0x1]
        %v1572 = vld [vmem:[%s234 + $0x66] sm:$0x1]
        %v1573 = vld [vmem:[%s234 + $0x76] sm:$0x1]
        %v1574 = vld [vmem:[%s234 + $0x86] sm:$0x1]
        %v1575 = vld [vmem:[%s234 + $0x96] sm:$0x1]
        %v1576 = vld [vmem:[%s234 + $0xa6] sm:$0x1]
        %v1577 = vld [vmem:[%s234 + $0xb6] sm:$0x1]
        %v1578 = vld [vmem:[%s234 + $0xc6] sm:$0x1]
        %v1579 = vld [vmem:[%s234 + $0xd6] sm:$0x1]
        %v1580 = vld [vmem:[%s234 + $0xe6] sm:$0x1]
        %v1581 = vld [vmem:[%s234 + $0xf6] sm:$0x1]
        %v1582 = vld [vmem:[%s234 + $0x7] sm:$0x1]
        %v1583 = vld [vmem:[%s234 + $0x17] sm:$0x1]
        %v1584 = vld [vmem:[%s234 + $0x27] sm:$0x1]
        %v1585 = vld [vmem:[%s234 + $0x37] sm:$0x1]
        %v1586 = vld [vmem:[%s234 + $0x47] sm:$0x1]
        %v1587 = vld [vmem:[%s234 + $0x57] sm:$0x1]
        %v1588 = vld [vmem:[%s234 + $0x67] sm:$0x1]
        %v1589 = vld [vmem:[%s234 + $0x77] sm:$0x1]
        %v1590 = vld [vmem:[%s234 + $0x87] sm:$0x1]
        %v1591 = vld [vmem:[%s234 + $0x97] sm:$0x1]
        %v1592 = vld [vmem:[%s234 + $0xa7] sm:$0x1]
        %v1593 = vld [vmem:[%s234 + $0xb7] sm:$0x1]
        %v1594 = vld [vmem:[%s234 + $0xc7] sm:$0x1]
        %v1595 = vld [vmem:[%s234 + $0xd7] sm:$0x1]
        %v1596 = vld [vmem:[%s234 + $0xe7] sm:$0x1]
        %v1597 = vld [vmem:[%s234 + $0xf7] sm:$0x1]
        %v1598 = vmul.f32 %v1566, %v304
        %v1599 = vmul.f32 %v1567, %v309
        %v1600 = vmul.f32 %v1568, %v310
        %v1601 = vmul.f32 %v1569, %v311
        %v1602 = vmul.f32 %v1570, %v312
        %v1603 = vmul.f32 %v1571, %v313
        %v1604 = vmul.f32 %v1572, %v314
        %v1605 = vmul.f32 %v1573, %v315
        %v1606 = vmul.f32 %v1574, %v308
        %v1607 = vmul.f32 %v1575, %v316
        %v1608 = vmul.f32 %v1576, %v317
        %v1609 = vmul.f32 %v1577, %v318
        %v1610 = vmul.f32 %v1578, %v319
        %v1611 = vmul.f32 %v1579, %v320
        %v1612 = vmul.f32 %v1580, %v321
        %v1613 = vmul.f32 %v1581, %v322
        %v1614 = vadd.f32 %v1598, %v358
        %v1615 = vadd.f32 %v1599, %v363
        %v1616 = vadd.f32 %v1600, %v364
        %v1617 = vadd.f32 %v1601, %v365
        %v1618 = vadd.f32 %v1602, %v366
        %v1619 = vadd.f32 %v1603, %v367
        %v1620 = vadd.f32 %v1604, %v368
        %v1621 = vadd.f32 %v1605, %v369
        %v1622 = vadd.f32 %v1606, %v362
        %v1623 = vadd.f32 %v1607, %v370
        %v1624 = vadd.f32 %v1608, %v371
        %v1625 = vadd.f32 %v1609, %v372
        %v1626 = vadd.f32 %v1610, %v373
        %v1627 = vadd.f32 %v1611, %v374
        %v1628 = vadd.f32 %v1612, %v375
        %v1629 = vadd.f32 %v1613, %v376
        %v1630 = vmax.f32 %v1614, 0.0
        %v1631 = vmax.f32 %v1615, 0.0
        %v1632 = vmax.f32 %v1616, 0.0
        %v1633 = vmax.f32 %v1617, 0.0
        %v1634 = vmax.f32 %v1618, 0.0
        %v1635 = vmax.f32 %v1619, 0.0
        %v1636 = vmax.f32 %v1620, 0.0
        %v1637 = vmax.f32 %v1621, 0.0
        %v1638 = vmax.f32 %v1622, 0.0
        %v1639 = vmax.f32 %v1623, 0.0
        %v1640 = vmax.f32 %v1624, 0.0
        %v1641 = vmax.f32 %v1625, 0.0
        %v1642 = vmax.f32 %v1626, 0.0
        %v1643 = vmax.f32 %v1627, 0.0
        %v1644 = vmax.f32 %v1628, 0.0
        %v1645 = vmax.f32 %v1629, 0.0
        %v1646 = vmul.f32 %v1582, %v304
        %v1647 = vmul.f32 %v1583, %v309
        %v1648 = vmul.f32 %v1584, %v310
        %v1649 = vmul.f32 %v1585, %v311
        %v1650 = vmul.f32 %v1586, %v312
        %v1651 = vmul.f32 %v1587, %v313
        %v1652 = vmul.f32 %v1588, %v314
        %v1653 = vmul.f32 %v1589, %v315
        %v1654 = vmul.f32 %v1590, %v308
        %v1655 = vmul.f32 %v1591, %v316
        %v1656 = vmul.f32 %v1592, %v317
        %v1657 = vmul.f32 %v1593, %v318
        %v1658 = vmul.f32 %v1594, %v319
        %v1659 = vmul.f32 %v1595, %v320
        %v1660 = vmul.f32 %v1596, %v321
        %v1661 = vmul.f32 %v1597, %v322
        %v1662 = vadd.f32 %v1646, %v358
        %v1663 = vadd.f32 %v1647, %v363
        %v1664 = vadd.f32 %v1648, %v364
        %v1665 = vadd.f32 %v1649, %v365
        %v1666 = vadd.f32 %v1650, %v366
        %v1667 = vadd.f32 %v1651, %v367
        %v1668 = vadd.f32 %v1652, %v368
        %v1669 = vadd.f32 %v1653, %v369
        %v1670 = vadd.f32 %v1654, %v362
        %v1671 = vadd.f32 %v1655, %v370
        %v1672 = vadd.f32 %v1656, %v371
        %v1673 = vadd.f32 %v1657, %v372
        %v1674 = vadd.f32 %v1658, %v373
        %v1675 = vadd.f32 %v1659, %v374
        %v1676 = vadd.f32 %v1660, %v375
        %v1677 = vadd.f32 %v1661, %v376
        %v1678 = vmax.f32 %v1662, 0.0
        %v1679 = vmax.f32 %v1663, 0.0
        %v1680 = vmax.f32 %v1664, 0.0
        %v1681 = vmax.f32 %v1665, 0.0
        %v1682 = vmax.f32 %v1666, 0.0
        %v1683 = vmax.f32 %v1667, 0.0
        %v1684 = vmax.f32 %v1668, 0.0
        %v1685 = vmax.f32 %v1669, 0.0
        %v1686 = vmax.f32 %v1670, 0.0
        %v1687 = vmax.f32 %v1671, 0.0
        %v1688 = vmax.f32 %v1672, 0.0
        %v1689 = vmax.f32 %v1673, 0.0
        %v1690 = vmax.f32 %v1674, 0.0
        %v1691 = vmax.f32 %v1675, 0.0
        %v1692 = vmax.f32 %v1676, 0.0
        %v1693 = vmax.f32 %v1677, 0.0
        %v1694 = vadd.f32 %v1630, %v1678
        %v1695 = vadd.f32 %v1631, %v1679
        %v1696 = vadd.f32 %v1632, %v1680
        %v1697 = vadd.f32 %v1633, %v1681
        %v1698 = vadd.f32 %v1634, %v1682
        %v1699 = vadd.f32 %v1635, %v1683
        %v1700 = vadd.f32 %v1636, %v1684
        %v1701 = vadd.f32 %v1637, %v1685
        %v1702 = vadd.f32 %v1638, %v1686
        %v1703 = vadd.f32 %v1639, %v1687
        %v1704 = vadd.f32 %v1640, %v1688
        %v1705 = vadd.f32 %v1641, %v1689
        %v1706 = vadd.f32 %v1642, %v1690
        %v1707 = vadd.f32 %v1643, %v1691
        %v1708 = vadd.f32 %v1644, %v1692
        %v1709 = vadd.f32 %v1645, %v1693
        %v1726 = vrot.slane %v1695, 7
        %v1727 = vsel %vm506, %v1726, %v1694
        %v1728 = vrot.slane %v1696, 6
        %v1729 = vsel %vm509, %v1728, %v1727
        %v1730 = vrot.slane %v1697, 5
        %v1731 = vsel %vm512, %v1730, %v1729
        %v1732 = vrot.slane %v1698, 4
        %v1733 = vsel %vm515, %v1732, %v1731
        %v1734 = vrot.slane %v1699, 3
        %v1735 = vsel %vm518, %v1734, %v1733
        %v1736 = vrot.slane %v1700, 2
        %v1737 = vsel %vm521, %v1736, %v1735
        %v1738 = vrot.slane %v1701, 1
        %v1739 = vsel %vm524, %v1738, %v1737
        %v1740 = vrot.slane %v1703, 7
        %v1741 = vsel %vm506, %v1740, %v1702
        %v1742 = vrot.slane %v1704, 6
        %v1743 = vsel %vm509, %v1742, %v1741
        %v1744 = vrot.slane %v1705, 5
        %v1745 = vsel %vm512, %v1744, %v1743
        %v1746 = vrot.slane %v1706, 4
        %v1747 = vsel %vm515, %v1746, %v1745
        %v1748 = vrot.slane %v1707, 3
        %v1749 = vsel %vm518, %v1748, %v1747
        %v1750 = vrot.slane %v1708, 2
        %v1751 = vsel %vm521, %v1750, %v1749
        %v1752 = vrot.slane %v1709, 1
        %v1753 = vsel %vm524, %v1752, %v1751
        %v1754 = vsel %vm540, %v1739, 0
        %v1756 = vsel %vm540, %v1753, 0
        %1758 = vmatprep.subr.mxu0 0.0
        %1759 = vmatpush1.msra.mxu0 %v267
        %1760 = vmatprep.subr.mxu0 0.0
        %1761 = vmatpush1.msra.mxu0 %v268
        %1762 = vmatprep.subr.mxu0 0.0
        %1763 = vmatpush1.msra.mxu0 0.0
        %1764 = vmatprep.subr.mxu0 0.0
        %1765 = vmatpush1.msra.mxu0 0.0
        %1766 = vmatprep.subr.mxu0 0.0
        %1767 = vmatpush1.msra.mxu0 0.0
        %1768 = vmatprep.subr.mxu0 0.0
        %1769 = vmatpush1.msra.mxu0 0.0
        %1770 = vmatprep.subr.mxu0 0.0
        %1771 = vmatpush1.msra.mxu0 0.0
        %1772 = vmatprep.subr.mxu0 0.0
        %1773 = vmatpush1.msra.mxu0 0.0
        %1774 = vmatprep.subr.mxu0 0.0
        %1775 = vmatpush1.msra.mxu0 0.0
        %1776 = vmatprep.subr.mxu0 0.0
        %1777 = vmatpush1.msra.mxu0 0.0
        %1778 = vmatprep.subr.mxu0 0.0
        %1779 = vmatpush1.msra.mxu0 0.0
        %1780 = vmatprep.subr.mxu0 0.0
        %1781 = vmatpush1.msra.mxu0 0.0
        %1782 = vmatprep.subr.mxu0 0.0
        %1783 = vmatpush1.msra.mxu0 0.0
        %1784 = vmatprep.subr.mxu0 0.0
        %1785 = vmatpush1.msra.mxu0 0.0
        %1786 = vmatprep.subr.mxu0 0.0
        %1787 = vmatpush1.msra.mxu0 0.0
        %1788 = vmatprep.subr.mxu0 0.0
        %1789 = vmatpush1.msra.mxu0 0.0
        %1790 = vmatprep.subr.mxu0 0.0
        %1791 = vmatpush1.msra.mxu0 0.0
        %1792 = vmatprep.subr.mxu0 0.0
        %1793 = vmatpush1.msra.mxu0 0.0
        %1794 = vmatprep.subr.mxu0 0.0
        %1795 = vmatpush1.msra.mxu0 0.0
        %1796 = vmatprep.subr.mxu0 0.0
        %1797 = vmatpush1.msra.mxu0 0.0
        %1798 = vmatprep.subr.mxu0 0.0
        %1799 = vmatpush1.msra.mxu0 0.0
        %1800 = vmatprep.subr.mxu0 0.0
        %1801 = vmatpush1.msra.mxu0 0.0
        %1802 = vmatprep.subr.mxu0 0.0
        %1803 = vmatpush1.msra.mxu0 0.0
        %1804 = vmatprep.subr.mxu0 0.0
        %1805 = vmatpush1.msra.mxu0 0.0
        %1806 = vmatprep.subr.mxu0 0.0
        %1807 = vmatpush1.msra.mxu0 0.0
        %1808 = vmatprep.subr.mxu0 0.0
        %1809 = vmatpush1.msra.mxu0 0.0
        %1810 = vmatprep.subr.mxu0 0.0
        %1811 = vmatpush1.msra.mxu0 0.0
        %1812 = vmatprep.subr.mxu0 0.0
        %1813 = vmatpush1.msra.mxu0 0.0
        %1814 = vmatprep.subr.mxu0 0.0
        %1815 = vmatpush1.msra.mxu0 0.0
        %1816 = vmatprep.subr.mxu0 0.0
        %1817 = vmatpush1.msra.mxu0 0.0
        %1818 = vmatprep.subr.mxu0 0.0
        %1819 = vmatpush1.msra.mxu0 0.0
        %1820 = vmatprep.subr.mxu0 0.0
        %1821 = vmatpush1.msra.mxu0 0.0
        %1822 = vmatprep.mubr.f32.mxu0 0.0
        %1823 = vmatmul.mubr.f32.gmra.mrb[0].mxu0 %v1754
        %v1824 = vpop.f32.mrb[0].mxu0
        %v1825 = vadd.f32 0.0, %v1824
        %v1826 = vpop.f32.mrb[0].mxu0
        %1827 = vmatprep.mubr.f32.mxu0 0.0
        %1828 = vmatmul.mubr.f32.gmra.mrb[0].mxu0 %v1756
        %v1829 = vpop.f32.mrb[0].mxu0
        %v1830 = vadd.f32 0.0, %v1829
        %v1831 = vpop.f32.mrb[0].mxu0
        %1832 = vdwg.mxu0
        %1833 = vmatprep.subr.mxu0 0.0
        %1834 = vmatpush1.msra.mxu0 %v1825
        %1835 = vmatprep.subr.mxu0 0.0
        %1836 = vmatpush1.msra.mxu0 %v1830
        %1837 = vmatprep.subr.mxu0 0.0
        %1838 = vmatpush1.msra.mxu0 0.0
        %1839 = vmatprep.subr.mxu0 0.0
        %1840 = vmatpush1.msra.mxu0 0.0
        %1841 = vmatprep.subr.mxu0 0.0
        %1842 = vmatpush1.msra.mxu0 0.0
        %1843 = vmatprep.subr.mxu0 0.0
        %1844 = vmatpush1.msra.mxu0 0.0
        %1845 = vmatprep.subr.mxu0 0.0
        %1846 = vmatpush1.msra.mxu0 0.0
        %1847 = vmatprep.subr.mxu0 0.0
        %1848 = vmatpush1.msra.mxu0 0.0
        %1849 = vmatprep.subr.mxu0 0.0
        %1850 = vmatpush1.msra.mxu0 0.0
        %1851 = vmatprep.subr.mxu0 0.0
        %1852 = vmatpush1.msra.mxu0 0.0
        %1853 = vmatprep.subr.mxu0 0.0
        %1854 = vmatpush1.msra.mxu0 0.0
        %1855 = vmatprep.subr.mxu0 0.0
        %1856 = vmatpush1.msra.mxu0 0.0
        %1857 = vmatprep.subr.mxu0 0.0
        %1858 = vmatpush1.msra.mxu0 0.0
        %1859 = vmatprep.subr.mxu0 0.0
        %1860 = vmatpush1.msra.mxu0 0.0
        %1861 = vmatprep.subr.mxu0 0.0
        %1862 = vmatpush1.msra.mxu0 0.0
        %1863 = vmatprep.subr.mxu0 0.0
        %1864 = vmatpush1.msra.mxu0 0.0
        %1865 = vmatprep.subr.mxu0 0.0
        %1866 = vmatpush1.msra.mxu0 0.0
        %1867 = vmatprep.subr.mxu0 0.0
        %1868 = vmatpush1.msra.mxu0 0.0
        %1869 = vmatprep.subr.mxu0 0.0
        %1870 = vmatpush1.msra.mxu0 0.0
        %1871 = vmatprep.subr.mxu0 0.0
        %1872 = vmatpush1.msra.mxu0 0.0
        %1873 = vmatprep.subr.mxu0 0.0
        %1874 = vmatpush1.msra.mxu0 0.0
        %1875 = vmatprep.subr.mxu0 0.0
        %1876 = vmatpush1.msra.mxu0 0.0
        %1877 = vmatprep.subr.mxu0 0.0
        %1878 = vmatpush1.msra.mxu0 0.0
        %1879 = vmatprep.subr.mxu0 0.0
        %1880 = vmatpush1.msra.mxu0 0.0
        %1881 = vmatprep.subr.mxu0 0.0
        %1882 = vmatpush1.msra.mxu0 0.0
        %1883 = vmatprep.subr.mxu0 0.0
        %1884 = vmatpush1.msra.mxu0 0.0
        %1885 = vmatprep.subr.mxu0 0.0
        %1886 = vmatpush1.msra.mxu0 0.0
        %1887 = vmatprep.subr.mxu0 0.0
        %1888 = vmatpush1.msra.mxu0 0.0
        %1889 = vmatprep.subr.mxu0 0.0
        %1890 = vmatpush1.msra.mxu0 0.0
        %1891 = vmatprep.subr.mxu0 0.0
        %1892 = vmatpush1.msra.mxu0 0.0
        %1893 = vmatprep.subr.mxu0 0.0
        %1894 = vmatpush1.msra.mxu0 0.0
        %1895 = vmatprep.subr.mxu0 0.0
        %1896 = vmatpush1.msra.mxu0 0.0
        %1897 = vmatprep.mubr.f32.mxu0 0.0
        %1898 = vmatmul.mubr.f32.gmra.mrb[0].mxu0 %v621
        %v1899 = vpop.f32.mrb[0].mxu0
        %v1900 = vadd.f32 0.0, %v1899
        %v1901 = vpop.f32.mrb[0].mxu0
        %1902 = vdwg.mxu0
        %v1904 = vcombine.high %v1900, %v1900
        %v1906 = vunpack.c.l.s4 1966171168
        %v1907 = vunpack.c.0.s8 %v1906
        %v1908 = vlaneseq
        %v1909 = vshrl.u32 %v1908, 7
        %v1910 = vsub.s32 %v1907, %v1909
        %v1911 = vrot.slane %v1900, %v1910
        %v1913 = vunpack.c.l.s4 1966171168
        %v1914 = vunpack.c.0.s8 %v1913
        %v1915 = vlaneseq
        %v1916 = vshrl.u32 %v1915, 7
        %v1917 = vsub.s32 %v1914, %v1916
        %v1918 = vrot.slane %v1904, %v1917
        %v1919 = vcombine.high %v1911, %v1911
        %v1920 = vcombine.high %v1918, %v1918
        %v1922 = vunpack.c.l.s4 1966171168
        %v1923 = vunpack.c.0.s8 %v1922
        %v1924 = vlaneseq
        %v1925 = vshrl.u32 %v1924, 7
        %v1926 = vsub.s32 %v1923, %v1925
        %v1927 = vrot.slane %v1911, %v1926
        %v1929 = vunpack.c.l.s4 1966171168
        %v1930 = vunpack.c.0.s8 %v1929
        %v1931 = vlaneseq
        %v1932 = vshrl.u32 %v1931, 7
        %v1933 = vsub.s32 %v1930, %v1932
        %v1934 = vrot.slane %v1918, %v1933
        %v1936 = vunpack.c.l.s4 1966171168
        %v1937 = vunpack.c.0.s8 %v1936
        %v1938 = vlaneseq
        %v1939 = vshrl.u32 %v1938, 7
        %v1940 = vsub.s32 %v1937, %v1939
        %v1941 = vrot.slane %v1919, %v1940
        %v1943 = vunpack.c.l.s4 1966171168
        %v1944 = vunpack.c.0.s8 %v1943
        %v1945 = vlaneseq
        %v1946 = vshrl.u32 %v1945, 7
        %v1947 = vsub.s32 %v1944, %v1946
        %v1948 = vrot.slane %v1920, %v1947
        %v1949 = vcombine.high %v1927, %v1927
        %v1950 = vcombine.high %v1934, %v1934
        %v1951 = vcombine.high %v1941, %v1941
        %v1952 = vcombine.high %v1948, %v1948
        %1961 = vst.msk [vmem:[%s260 + $0x3] sm:$0x1] %vm751, %v1927
        %1962 = vst.msk [vmem:[%s260 + $0xb] sm:$0x1] %vm751, %v1941
        %1963 = vst.msk [vmem:[%s260 + $0x13] sm:$0x1] %vm751, %v1949
        %1964 = vst.msk [vmem:[%s260 + $0x1b] sm:$0x1] %vm751, %v1951
        %1965 = vst.msk [vmem:[%s260 + $0x23] sm:$0x1] %vm751, %v1934
        %1966 = vst.msk [vmem:[%s260 + $0x2b] sm:$0x1] %vm751, %v1948
        %1967 = vst.msk [vmem:[%s260 + $0x33] sm:$0x1] %vm751, %v1950
        %1968 = vst.msk [vmem:[%s260 + $0x3b] sm:$0x1] %vm751, %v1952
        %v1969 = vld [vmem:[%s234 + $0x8] sm:$0x1]
        %v1970 = vld [vmem:[%s234 + $0x18] sm:$0x1]
        %v1971 = vld [vmem:[%s234 + $0x28] sm:$0x1]
        %v1972 = vld [vmem:[%s234 + $0x38] sm:$0x1]
        %v1973 = vld [vmem:[%s234 + $0x48] sm:$0x1]
        %v1974 = vld [vmem:[%s234 + $0x58] sm:$0x1]
        %v1975 = vld [vmem:[%s234 + $0x68] sm:$0x1]
        %v1976 = vld [vmem:[%s234 + $0x78] sm:$0x1]
        %v1977 = vld [vmem:[%s234 + $0x88] sm:$0x1]
        %v1978 = vld [vmem:[%s234 + $0x98] sm:$0x1]
        %v1979 = vld [vmem:[%s234 + $0xa8] sm:$0x1]
        %v1980 = vld [vmem:[%s234 + $0xb8] sm:$0x1]
        %v1981 = vld [vmem:[%s234 + $0xc8] sm:$0x1]
        %v1982 = vld [vmem:[%s234 + $0xd8] sm:$0x1]
        %v1983 = vld [vmem:[%s234 + $0xe8] sm:$0x1]
        %v1984 = vld [vmem:[%s234 + $0xf8] sm:$0x1]
        %v1985 = vld [vmem:[%s234 + $0x9] sm:$0x1]
        %v1986 = vld [vmem:[%s234 + $0x19] sm:$0x1]
        %v1987 = vld [vmem:[%s234 + $0x29] sm:$0x1]
        %v1988 = vld [vmem:[%s234 + $0x39] sm:$0x1]
        %v1989 = vld [vmem:[%s234 + $0x49] sm:$0x1]
        %v1990 = vld [vmem:[%s234 + $0x59] sm:$0x1]
        %v1991 = vld [vmem:[%s234 + $0x69] sm:$0x1]
        %v1992 = vld [vmem:[%s234 + $0x79] sm:$0x1]
        %v1993 = vld [vmem:[%s234 + $0x89] sm:$0x1]
        %v1994 = vld [vmem:[%s234 + $0x99] sm:$0x1]
        %v1995 = vld [vmem:[%s234 + $0xa9] sm:$0x1]
        %v1996 = vld [vmem:[%s234 + $0xb9] sm:$0x1]
        %v1997 = vld [vmem:[%s234 + $0xc9] sm:$0x1]
        %v1998 = vld [vmem:[%s234 + $0xd9] sm:$0x1]
        %v1999 = vld [vmem:[%s234 + $0xe9] sm:$0x1]
        %v2000 = vld [vmem:[%s234 + $0xf9] sm:$0x1]
        %v2001 = vmul.f32 %v1969, %v304
        %v2002 = vmul.f32 %v1970, %v309
        %v2003 = vmul.f32 %v1971, %v310
        %v2004 = vmul.f32 %v1972, %v311
        %v2005 = vmul.f32 %v1973, %v312
        %v2006 = vmul.f32 %v1974, %v313
        %v2007 = vmul.f32 %v1975, %v314
        %v2008 = vmul.f32 %v1976, %v315
        %v2009 = vmul.f32 %v1977, %v308
        %v2010 = vmul.f32 %v1978, %v316
        %v2011 = vmul.f32 %v1979, %v317
        %v2012 = vmul.f32 %v1980, %v318
        %v2013 = vmul.f32 %v1981, %v319
        %v2014 = vmul.f32 %v1982, %v320
        %v2015 = vmul.f32 %v1983, %v321
        %v2016 = vmul.f32 %v1984, %v322
        %v2017 = vadd.f32 %v2001, %v358
        %v2018 = vadd.f32 %v2002, %v363
        %v2019 = vadd.f32 %v2003, %v364
        %v2020 = vadd.f32 %v2004, %v365
        %v2021 = vadd.f32 %v2005, %v366
        %v2022 = vadd.f32 %v2006, %v367
        %v2023 = vadd.f32 %v2007, %v368
        %v2024 = vadd.f32 %v2008, %v369
        %v2025 = vadd.f32 %v2009, %v362
        %v2026 = vadd.f32 %v2010, %v370
        %v2027 = vadd.f32 %v2011, %v371
        %v2028 = vadd.f32 %v2012, %v372
        %v2029 = vadd.f32 %v2013, %v373
        %v2030 = vadd.f32 %v2014, %v374
        %v2031 = vadd.f32 %v2015, %v375
        %v2032 = vadd.f32 %v2016, %v376
        %v2033 = vmax.f32 %v2017, 0.0
        %v2034 = vmax.f32 %v2018, 0.0
        %v2035 = vmax.f32 %v2019, 0.0
        %v2036 = vmax.f32 %v2020, 0.0
        %v2037 = vmax.f32 %v2021, 0.0
        %v2038 = vmax.f32 %v2022, 0.0
        %v2039 = vmax.f32 %v2023, 0.0
        %v2040 = vmax.f32 %v2024, 0.0
        %v2041 = vmax.f32 %v2025, 0.0
        %v2042 = vmax.f32 %v2026, 0.0
        %v2043 = vmax.f32 %v2027, 0.0
        %v2044 = vmax.f32 %v2028, 0.0
        %v2045 = vmax.f32 %v2029, 0.0
        %v2046 = vmax.f32 %v2030, 0.0
        %v2047 = vmax.f32 %v2031, 0.0
        %v2048 = vmax.f32 %v2032, 0.0
        %v2049 = vmul.f32 %v1985, %v304
        %v2050 = vmul.f32 %v1986, %v309
        %v2051 = vmul.f32 %v1987, %v310
        %v2052 = vmul.f32 %v1988, %v311
        %v2053 = vmul.f32 %v1989, %v312
        %v2054 = vmul.f32 %v1990, %v313
        %v2055 = vmul.f32 %v1991, %v314
        %v2056 = vmul.f32 %v1992, %v315
        %v2057 = vmul.f32 %v1993, %v308
        %v2058 = vmul.f32 %v1994, %v316
        %v2059 = vmul.f32 %v1995, %v317
        %v2060 = vmul.f32 %v1996, %v318
        %v2061 = vmul.f32 %v1997, %v319
        %v2062 = vmul.f32 %v1998, %v320
        %v2063 = vmul.f32 %v1999, %v321
        %v2064 = vmul.f32 %v2000, %v322
        %v2065 = vadd.f32 %v2049, %v358
        %v2066 = vadd.f32 %v2050, %v363
        %v2067 = vadd.f32 %v2051, %v364
        %v2068 = vadd.f32 %v2052, %v365
        %v2069 = vadd.f32 %v2053, %v366
        %v2070 = vadd.f32 %v2054, %v367
        %v2071 = vadd.f32 %v2055, %v368
        %v2072 = vadd.f32 %v2056, %v369
        %v2073 = vadd.f32 %v2057, %v362
        %v2074 = vadd.f32 %v2058, %v370
        %v2075 = vadd.f32 %v2059, %v371
        %v2076 = vadd.f32 %v2060, %v372
        %v2077 = vadd.f32 %v2061, %v373
        %v2078 = vadd.f32 %v2062, %v374
        %v2079 = vadd.f32 %v2063, %v375
        %v2080 = vadd.f32 %v2064, %v376
        %v2081 = vmax.f32 %v2065, 0.0
        %v2082 = vmax.f32 %v2066, 0.0
        %v2083 = vmax.f32 %v2067, 0.0
        %v2084 = vmax.f32 %v2068, 0.0
        %v2085 = vmax.f32 %v2069, 0.0
        %v2086 = vmax.f32 %v2070, 0.0
        %v2087 = vmax.f32 %v2071, 0.0
        %v2088 = vmax.f32 %v2072, 0.0
        %v2089 = vmax.f32 %v2073, 0.0
        %v2090 = vmax.f32 %v2074, 0.0
        %v2091 = vmax.f32 %v2075, 0.0
        %v2092 = vmax.f32 %v2076, 0.0
        %v2093 = vmax.f32 %v2077, 0.0
        %v2094 = vmax.f32 %v2078, 0.0
        %v2095 = vmax.f32 %v2079, 0.0
        %v2096 = vmax.f32 %v2080, 0.0
        %v2097 = vadd.f32 %v2033, %v2081
        %v2098 = vadd.f32 %v2034, %v2082
        %v2099 = vadd.f32 %v2035, %v2083
        %v2100 = vadd.f32 %v2036, %v2084
        %v2101 = vadd.f32 %v2037, %v2085
        %v2102 = vadd.f32 %v2038, %v2086
        %v2103 = vadd.f32 %v2039, %v2087
        %v2104 = vadd.f32 %v2040, %v2088
        %v2105 = vadd.f32 %v2041, %v2089
        %v2106 = vadd.f32 %v2042, %v2090
        %v2107 = vadd.f32 %v2043, %v2091
        %v2108 = vadd.f32 %v2044, %v2092
        %v2109 = vadd.f32 %v2045, %v2093
        %v2110 = vadd.f32 %v2046, %v2094
        %v2111 = vadd.f32 %v2047, %v2095
        %v2112 = vadd.f32 %v2048, %v2096
        %v2129 = vrot.slane %v2098, 7
        %v2130 = vsel %vm506, %v2129, %v2097
        %v2131 = vrot.slane %v2099, 6
        %v2132 = vsel %vm509, %v2131, %v2130
        %v2133 = vrot.slane %v2100, 5
        %v2134 = vsel %vm512, %v2133, %v2132
        %v2135 = vrot.slane %v2101, 4
        %v2136 = vsel %vm515, %v2135, %v2134
        %v2137 = vrot.slane %v2102, 3
        %v2138 = vsel %vm518, %v2137, %v2136
        %v2139 = vrot.slane %v2103, 2
        %v2140 = vsel %vm521, %v2139, %v2138
        %v2141 = vrot.slane %v2104, 1
        %v2142 = vsel %vm524, %v2141, %v2140
        %v2143 = vrot.slane %v2106, 7
        %v2144 = vsel %vm506, %v2143, %v2105
        %v2145 = vrot.slane %v2107, 6
        %v2146 = vsel %vm509, %v2145, %v2144
        %v2147 = vrot.slane %v2108, 5
        %v2148 = vsel %vm512, %v2147, %v2146
        %v2149 = vrot.slane %v2109, 4
        %v2150 = vsel %vm515, %v2149, %v2148
        %v2151 = vrot.slane %v2110, 3
        %v2152 = vsel %vm518, %v2151, %v2150
        %v2153 = vrot.slane %v2111, 2
        %v2154 = vsel %vm521, %v2153, %v2152
        %v2155 = vrot.slane %v2112, 1
        %v2156 = vsel %vm524, %v2155, %v2154
        %v2157 = vsel %vm540, %v2142, 0
        %v2159 = vsel %vm540, %v2156, 0
        %2161 = vmatprep.subr.mxu0 0.0
        %2162 = vmatpush1.msra.mxu0 %v267
        %2163 = vmatprep.subr.mxu0 0.0
        %2164 = vmatpush1.msra.mxu0 %v268
        %2165 = vmatprep.subr.mxu0 0.0
        %2166 = vmatpush1.msra.mxu0 0.0
        %2167 = vmatprep.subr.mxu0 0.0
        %2168 = vmatpush1.msra.mxu0 0.0
        %2169 = vmatprep.subr.mxu0 0.0
        %2170 = vmatpush1.msra.mxu0 0.0
        %2171 = vmatprep.subr.mxu0 0.0
        %2172 = vmatpush1.msra.mxu0 0.0
        %2173 = vmatprep.subr.mxu0 0.0
        %2174 = vmatpush1.msra.mxu0 0.0
        %2175 = vmatprep.subr.mxu0 0.0
        %2176 = vmatpush1.msra.mxu0 0.0
        %2177 = vmatprep.subr.mxu0 0.0
        %2178 = vmatpush1.msra.mxu0 0.0
        %2179 = vmatprep.subr.mxu0 0.0
        %2180 = vmatpush1.msra.mxu0 0.0
        %2181 = vmatprep.subr.mxu0 0.0
        %2182 = vmatpush1.msra.mxu0 0.0
        %2183 = vmatprep.subr.mxu0 0.0
        %2184 = vmatpush1.msra.mxu0 0.0
        %2185 = vmatprep.subr.mxu0 0.0
        %2186 = vmatpush1.msra.mxu0 0.0
        %2187 = vmatprep.subr.mxu0 0.0
        %2188 = vmatpush1.msra.mxu0 0.0
        %2189 = vmatprep.subr.mxu0 0.0
        %2190 = vmatpush1.msra.mxu0 0.0
        %2191 = vmatprep.subr.mxu0 0.0
        %2192 = vmatpush1.msra.mxu0 0.0
        %2193 = vmatprep.subr.mxu0 0.0
        %2194 = vmatpush1.msra.mxu0 0.0
        %2195 = vmatprep.subr.mxu0 0.0
        %2196 = vmatpush1.msra.mxu0 0.0
        %2197 = vmatprep.subr.mxu0 0.0
        %2198 = vmatpush1.msra.mxu0 0.0
        %2199 = vmatprep.subr.mxu0 0.0
        %2200 = vmatpush1.msra.mxu0 0.0
        %2201 = vmatprep.subr.mxu0 0.0
        %2202 = vmatpush1.msra.mxu0 0.0
        %2203 = vmatprep.subr.mxu0 0.0
        %2204 = vmatpush1.msra.mxu0 0.0
        %2205 = vmatprep.subr.mxu0 0.0
        %2206 = vmatpush1.msra.mxu0 0.0
        %2207 = vmatprep.subr.mxu0 0.0
        %2208 = vmatpush1.msra.mxu0 0.0
        %2209 = vmatprep.subr.mxu0 0.0
        %2210 = vmatpush1.msra.mxu0 0.0
        %2211 = vmatprep.subr.mxu0 0.0
        %2212 = vmatpush1.msra.mxu0 0.0
        %2213 = vmatprep.subr.mxu0 0.0
        %2214 = vmatpush1.msra.mxu0 0.0
        %2215 = vmatprep.subr.mxu0 0.0
        %2216 = vmatpush1.msra.mxu0 0.0
        %2217 = vmatprep.subr.mxu0 0.0
        %2218 = vmatpush1.msra.mxu0 0.0
        %2219 = vmatprep.subr.mxu0 0.0
        %2220 = vmatpush1.msra.mxu0 0.0
        %2221 = vmatprep.subr.mxu0 0.0
        %2222 = vmatpush1.msra.mxu0 0.0
        %2223 = vmatprep.subr.mxu0 0.0
        %2224 = vmatpush1.msra.mxu0 0.0
        %2225 = vmatprep.mubr.f32.mxu0 0.0
        %2226 = vmatmul.mubr.f32.gmra.mrb[0].mxu0 %v2157
        %v2227 = vpop.f32.mrb[0].mxu0
        %v2228 = vadd.f32 0.0, %v2227
        %v2229 = vpop.f32.mrb[0].mxu0
        %2230 = vmatprep.mubr.f32.mxu0 0.0
        %2231 = vmatmul.mubr.f32.gmra.mrb[0].mxu0 %v2159
        %v2232 = vpop.f32.mrb[0].mxu0
        %v2233 = vadd.f32 0.0, %v2232
        %v2234 = vpop.f32.mrb[0].mxu0
        %2235 = vdwg.mxu0
        %2236 = vmatprep.subr.mxu0 0.0
        %2237 = vmatpush1.msra.mxu0 %v2228
        %2238 = vmatprep.subr.mxu0 0.0
        %2239 = vmatpush1.msra.mxu0 %v2233
        %2240 = vmatprep.subr.mxu0 0.0
        %2241 = vmatpush1.msra.mxu0 0.0
        %2242 = vmatprep.subr.mxu0 0.0
        %2243 = vmatpush1.msra.mxu0 0.0
        %2244 = vmatprep.subr.mxu0 0.0
        %2245 = vmatpush1.msra.mxu0 0.0
        %2246 = vmatprep.subr.mxu0 0.0
        %2247 = vmatpush1.msra.mxu0 0.0
        %2248 = vmatprep.subr.mxu0 0.0
        %2249 = vmatpush1.msra.mxu0 0.0
        %2250 = vmatprep.subr.mxu0 0.0
        %2251 = vmatpush1.msra.mxu0 0.0
        %2252 = vmatprep.subr.mxu0 0.0
        %2253 = vmatpush1.msra.mxu0 0.0
        %2254 = vmatprep.subr.mxu0 0.0
        %2255 = vmatpush1.msra.mxu0 0.0
        %2256 = vmatprep.subr.mxu0 0.0
        %2257 = vmatpush1.msra.mxu0 0.0
        %2258 = vmatprep.subr.mxu0 0.0
        %2259 = vmatpush1.msra.mxu0 0.0
        %2260 = vmatprep.subr.mxu0 0.0
        %2261 = vmatpush1.msra.mxu0 0.0
        %2262 = vmatprep.subr.mxu0 0.0
        %2263 = vmatpush1.msra.mxu0 0.0
        %2264 = vmatprep.subr.mxu0 0.0
        %2265 = vmatpush1.msra.mxu0 0.0
        %2266 = vmatprep.subr.mxu0 0.0
        %2267 = vmatpush1.msra.mxu0 0.0
        %2268 = vmatprep.subr.mxu0 0.0
        %2269 = vmatpush1.msra.mxu0 0.0
        %2270 = vmatprep.subr.mxu0 0.0
        %2271 = vmatpush1.msra.mxu0 0.0
        %2272 = vmatprep.subr.mxu0 0.0
        %2273 = vmatpush1.msra.mxu0 0.0
        %2274 = vmatprep.subr.mxu0 0.0
        %2275 = vmatpush1.msra.mxu0 0.0
        %2276 = vmatprep.subr.mxu0 0.0
        %2277 = vmatpush1.msra.mxu0 0.0
        %2278 = vmatprep.subr.mxu0 0.0
        %2279 = vmatpush1.msra.mxu0 0.0
        %2280 = vmatprep.subr.mxu0 0.0
        %2281 = vmatpush1.msra.mxu0 0.0
        %2282 = vmatprep.subr.mxu0 0.0
        %2283 = vmatpush1.msra.mxu0 0.0
        %2284 = vmatprep.subr.mxu0 0.0
        %2285 = vmatpush1.msra.mxu0 0.0
        %2286 = vmatprep.subr.mxu0 0.0
        %2287 = vmatpush1.msra.mxu0 0.0
        %2288 = vmatprep.subr.mxu0 0.0
        %2289 = vmatpush1.msra.mxu0 0.0
        %2290 = vmatprep.subr.mxu0 0.0
        %2291 = vmatpush1.msra.mxu0 0.0
        %2292 = vmatprep.subr.mxu0 0.0
        %2293 = vmatpush1.msra.mxu0 0.0
        %2294 = vmatprep.subr.mxu0 0.0
        %2295 = vmatpush1.msra.mxu0 0.0
        %2296 = vmatprep.subr.mxu0 0.0
        %2297 = vmatpush1.msra.mxu0 0.0
        %2298 = vmatprep.subr.mxu0 0.0
        %2299 = vmatpush1.msra.mxu0 0.0
        %2300 = vmatprep.mubr.f32.mxu0 0.0
        %2301 = vmatmul.mubr.f32.gmra.mrb[0].mxu0 %v621
        %v2302 = vpop.f32.mrb[0].mxu0
        %v2303 = vadd.f32 0.0, %v2302
        %v2304 = vpop.f32.mrb[0].mxu0
        %2305 = vdwg.mxu0
        %v2307 = vcombine.high %v2303, %v2303
        %v2309 = vunpack.c.l.s4 1966171168
        %v2310 = vunpack.c.0.s8 %v2309
        %v2311 = vlaneseq
        %v2312 = vshrl.u32 %v2311, 7
        %v2313 = vsub.s32 %v2310, %v2312
        %v2314 = vrot.slane %v2303, %v2313
        %v2316 = vunpack.c.l.s4 1966171168
        %v2317 = vunpack.c.0.s8 %v2316
        %v2318 = vlaneseq
        %v2319 = vshrl.u32 %v2318, 7
        %v2320 = vsub.s32 %v2317, %v2319
        %v2321 = vrot.slane %v2307, %v2320
        %v2322 = vcombine.high %v2314, %v2314
        %v2323 = vcombine.high %v2321, %v2321
        %v2325 = vunpack.c.l.s4 1966171168
        %v2326 = vunpack.c.0.s8 %v2325
        %v2327 = vlaneseq
        %v2328 = vshrl.u32 %v2327, 7
        %v2329 = vsub.s32 %v2326, %v2328
        %v2330 = vrot.slane %v2314, %v2329
        %v2332 = vunpack.c.l.s4 1966171168
        %v2333 = vunpack.c.0.s8 %v2332
        %v2334 = vlaneseq
        %v2335 = vshrl.u32 %v2334, 7
        %v2336 = vsub.s32 %v2333, %v2335
        %v2337 = vrot.slane %v2321, %v2336
        %v2339 = vunpack.c.l.s4 1966171168
        %v2340 = vunpack.c.0.s8 %v2339
        %v2341 = vlaneseq
        %v2342 = vshrl.u32 %v2341, 7
        %v2343 = vsub.s32 %v2340, %v2342
        %v2344 = vrot.slane %v2322, %v2343
        %v2346 = vunpack.c.l.s4 1966171168
        %v2347 = vunpack.c.0.s8 %v2346
        %v2348 = vlaneseq
        %v2349 = vshrl.u32 %v2348, 7
        %v2350 = vsub.s32 %v2347, %v2349
        %v2351 = vrot.slane %v2323, %v2350
        %v2352 = vcombine.high %v2330, %v2330
        %v2353 = vcombine.high %v2337, %v2337
        %v2354 = vcombine.high %v2344, %v2344
        %v2355 = vcombine.high %v2351, %v2351
        %2364 = vst.msk [vmem:[%s260 + $0x4] sm:$0x1] %vm751, %v2330
        %2365 = vst.msk [vmem:[%s260 + $0xc] sm:$0x1] %vm751, %v2344
        %2366 = vst.msk [vmem:[%s260 + $0x14] sm:$0x1] %vm751, %v2352
        %2367 = vst.msk [vmem:[%s260 + $0x1c] sm:$0x1] %vm751, %v2354
        %2368 = vst.msk [vmem:[%s260 + $0x24] sm:$0x1] %vm751, %v2337
        %2369 = vst.msk [vmem:[%s260 + $0x2c] sm:$0x1] %vm751, %v2351
        %2370 = vst.msk [vmem:[%s260 + $0x34] sm:$0x1] %vm751, %v2353
        %2371 = vst.msk [vmem:[%s260 + $0x3c] sm:$0x1] %vm751, %v2355
        %v2372 = vld [vmem:[%s234 + $0xa] sm:$0x1]
        %v2373 = vld [vmem:[%s234 + $0x1a] sm:$0x1]
        %v2374 = vld [vmem:[%s234 + $0x2a] sm:$0x1]
        %v2375 = vld [vmem:[%s234 + $0x3a] sm:$0x1]
        %v2376 = vld [vmem:[%s234 + $0x4a] sm:$0x1]
        %v2377 = vld [vmem:[%s234 + $0x5a] sm:$0x1]
        %v2378 = vld [vmem:[%s234 + $0x6a] sm:$0x1]
        %v2379 = vld [vmem:[%s234 + $0x7a] sm:$0x1]
        %v2380 = vld [vmem:[%s234 + $0x8a] sm:$0x1]
        %v2381 = vld [vmem:[%s234 + $0x9a] sm:$0x1]
        %v2382 = vld [vmem:[%s234 + $0xaa] sm:$0x1]
        %v2383 = vld [vmem:[%s234 + $0xba] sm:$0x1]
        %v2384 = vld [vmem:[%s234 + $0xca] sm:$0x1]
        %v2385 = vld [vmem:[%s234 + $0xda] sm:$0x1]
        %v2386 = vld [vmem:[%s234 + $0xea] sm:$0x1]
        %v2387 = vld [vmem:[%s234 + $0xfa] sm:$0x1]
        %v2388 = vld [vmem:[%s234 + $0xb] sm:$0x1]
        %v2389 = vld [vmem:[%s234 + $0x1b] sm:$0x1]
        %v2390 = vld [vmem:[%s234 + $0x2b] sm:$0x1]
        %v2391 = vld [vmem:[%s234 + $0x3b] sm:$0x1]
        %v2392 = vld [vmem:[%s234 + $0x4b] sm:$0x1]
        %v2393 = vld [vmem:[%s234 + $0x5b] sm:$0x1]
        %v2394 = vld [vmem:[%s234 + $0x6b] sm:$0x1]
        %v2395 = vld [vmem:[%s234 + $0x7b] sm:$0x1]
        %v2396 = vld [vmem:[%s234 + $0x8b] sm:$0x1]
        %v2397 = vld [vmem:[%s234 + $0x9b] sm:$0x1]
        %v2398 = vld [vmem:[%s234 + $0xab] sm:$0x1]
        %v2399 = vld [vmem:[%s234 + $0xbb] sm:$0x1]
        %v2400 = vld [vmem:[%s234 + $0xcb] sm:$0x1]
        %v2401 = vld [vmem:[%s234 + $0xdb] sm:$0x1]
        %v2402 = vld [vmem:[%s234 + $0xeb] sm:$0x1]
        %v2403 = vld [vmem:[%s234 + $0xfb] sm:$0x1]
        %v2404 = vmul.f32 %v2372, %v304
        %v2405 = vmul.f32 %v2373, %v309
        %v2406 = vmul.f32 %v2374, %v310
        %v2407 = vmul.f32 %v2375, %v311
        %v2408 = vmul.f32 %v2376, %v312
        %v2409 = vmul.f32 %v2377, %v313
        %v2410 = vmul.f32 %v2378, %v314
        %v2411 = vmul.f32 %v2379, %v315
        %v2412 = vmul.f32 %v2380, %v308
        %v2413 = vmul.f32 %v2381, %v316
        %v2414 = vmul.f32 %v2382, %v317
        %v2415 = vmul.f32 %v2383, %v318
        %v2416 = vmul.f32 %v2384, %v319
        %v2417 = vmul.f32 %v2385, %v320
        %v2418 = vmul.f32 %v2386, %v321
        %v2419 = vmul.f32 %v2387, %v322
        %v2420 = vadd.f32 %v2404, %v358
        %v2421 = vadd.f32 %v2405, %v363
        %v2422 = vadd.f32 %v2406, %v364
        %v2423 = vadd.f32 %v2407, %v365
        %v2424 = vadd.f32 %v2408, %v366
        %v2425 = vadd.f32 %v2409, %v367
        %v2426 = vadd.f32 %v2410, %v368
        %v2427 = vadd.f32 %v2411, %v369
        %v2428 = vadd.f32 %v2412, %v362
        %v2429 = vadd.f32 %v2413, %v370
        %v2430 = vadd.f32 %v2414, %v371
        %v2431 = vadd.f32 %v2415, %v372
        %v2432 = vadd.f32 %v2416, %v373
        %v2433 = vadd.f32 %v2417, %v374
        %v2434 = vadd.f32 %v2418, %v375
        %v2435 = vadd.f32 %v2419, %v376
        %v2436 = vmax.f32 %v2420, 0.0
        %v2437 = vmax.f32 %v2421, 0.0
        %v2438 = vmax.f32 %v2422, 0.0
        %v2439 = vmax.f32 %v2423, 0.0
        %v2440 = vmax.f32 %v2424, 0.0
        %v2441 = vmax.f32 %v2425, 0.0
        %v2442 = vmax.f32 %v2426, 0.0
        %v2443 = vmax.f32 %v2427, 0.0
        %v2444 = vmax.f32 %v2428, 0.0
        %v2445 = vmax.f32 %v2429, 0.0
        %v2446 = vmax.f32 %v2430, 0.0
        %v2447 = vmax.f32 %v2431, 0.0
        %v2448 = vmax.f32 %v2432, 0.0
        %v2449 = vmax.f32 %v2433, 0.0
        %v2450 = vmax.f32 %v2434, 0.0
        %v2451 = vmax.f32 %v2435, 0.0
        %v2452 = vmul.f32 %v2388, %v304
        %v2453 = vmul.f32 %v2389, %v309
        %v2454 = vmul.f32 %v2390, %v310
        %v2455 = vmul.f32 %v2391, %v311
        %v2456 = vmul.f32 %v2392, %v312
        %v2457 = vmul.f32 %v2393, %v313
        %v2458 = vmul.f32 %v2394, %v314
        %v2459 = vmul.f32 %v2395, %v315
        %v2460 = vmul.f32 %v2396, %v308
        %v2461 = vmul.f32 %v2397, %v316
        %v2462 = vmul.f32 %v2398, %v317
        %v2463 = vmul.f32 %v2399, %v318
        %v2464 = vmul.f32 %v2400, %v319
        %v2465 = vmul.f32 %v2401, %v320
        %v2466 = vmul.f32 %v2402, %v321
        %v2467 = vmul.f32 %v2403, %v322
        %v2468 = vadd.f32 %v2452, %v358
        %v2469 = vadd.f32 %v2453, %v363
        %v2470 = vadd.f32 %v2454, %v364
        %v2471 = vadd.f32 %v2455, %v365
        %v2472 = vadd.f32 %v2456, %v366
        %v2473 = vadd.f32 %v2457, %v367
        %v2474 = vadd.f32 %v2458, %v368
        %v2475 = vadd.f32 %v2459, %v369
        %v2476 = vadd.f32 %v2460, %v362
        %v2477 = vadd.f32 %v2461, %v370
        %v2478 = vadd.f32 %v2462, %v371
        %v2479 = vadd.f32 %v2463, %v372
        %v2480 = vadd.f32 %v2464, %v373
        %v2481 = vadd.f32 %v2465, %v374
        %v2482 = vadd.f32 %v2466, %v375
        %v2483 = vadd.f32 %v2467, %v376
        %v2484 = vmax.f32 %v2468, 0.0
        %v2485 = vmax.f32 %v2469, 0.0
        %v2486 = vmax.f32 %v2470, 0.0
        %v2487 = vmax.f32 %v2471, 0.0
        %v2488 = vmax.f32 %v2472, 0.0
        %v2489 = vmax.f32 %v2473, 0.0
        %v2490 = vmax.f32 %v2474, 0.0
        %v2491 = vmax.f32 %v2475, 0.0
        %v2492 = vmax.f32 %v2476, 0.0
        %v2493 = vmax.f32 %v2477, 0.0
        %v2494 = vmax.f32 %v2478, 0.0
        %v2495 = vmax.f32 %v2479, 0.0
        %v2496 = vmax.f32 %v2480, 0.0
        %v2497 = vmax.f32 %v2481, 0.0
        %v2498 = vmax.f32 %v2482, 0.0
        %v2499 = vmax.f32 %v2483, 0.0
        %v2500 = vadd.f32 %v2436, %v2484
        %v2501 = vadd.f32 %v2437, %v2485
        %v2502 = vadd.f32 %v2438, %v2486
        %v2503 = vadd.f32 %v2439, %v2487
        %v2504 = vadd.f32 %v2440, %v2488
        %v2505 = vadd.f32 %v2441, %v2489
        %v2506 = vadd.f32 %v2442, %v2490
        %v2507 = vadd.f32 %v2443, %v2491
        %v2508 = vadd.f32 %v2444, %v2492
        %v2509 = vadd.f32 %v2445, %v2493
        %v2510 = vadd.f32 %v2446, %v2494
        %v2511 = vadd.f32 %v2447, %v2495
        %v2512 = vadd.f32 %v2448, %v2496
        %v2513 = vadd.f32 %v2449, %v2497
        %v2514 = vadd.f32 %v2450, %v2498
        %v2515 = vadd.f32 %v2451, %v2499
        %v2532 = vrot.slane %v2501, 7
        %v2533 = vsel %vm506, %v2532, %v2500
        %v2534 = vrot.slane %v2502, 6
        %v2535 = vsel %vm509, %v2534, %v2533
        %v2536 = vrot.slane %v2503, 5
        %v2537 = vsel %vm512, %v2536, %v2535
        %v2538 = vrot.slane %v2504, 4
        %v2539 = vsel %vm515, %v2538, %v2537
        %v2540 = vrot.slane %v2505, 3
        %v2541 = vsel %vm518, %v2540, %v2539
        %v2542 = vrot.slane %v2506, 2
        %v2543 = vsel %vm521, %v2542, %v2541
        %v2544 = vrot.slane %v2507, 1
        %v2545 = vsel %vm524, %v2544, %v2543
        %v2546 = vrot.slane %v2509, 7
        %v2547 = vsel %vm506, %v2546, %v2508
        %v2548 = vrot.slane %v2510, 6
        %v2549 = vsel %vm509, %v2548, %v2547
        %v2550 = vrot.slane %v2511, 5
        %v2551 = vsel %vm512, %v2550, %v2549
        %v2552 = vrot.slane %v2512, 4
        %v2553 = vsel %vm515, %v2552, %v2551
        %v2554 = vrot.slane %v2513, 3
        %v2555 = vsel %vm518, %v2554, %v2553
        %v2556 = vrot.slane %v2514, 2
        %v2557 = vsel %vm521, %v2556, %v2555
        %v2558 = vrot.slane %v2515, 1
        %v2559 = vsel %vm524, %v2558, %v2557
        %v2560 = vsel %vm540, %v2545, 0
        %v2562 = vsel %vm540, %v2559, 0
        %2564 = vmatprep.subr.mxu0 0.0
        %2565 = vmatpush1.msra.mxu0 %v267
        %2566 = vmatprep.subr.mxu0 0.0
        %2567 = vmatpush1.msra.mxu0 %v268
        %2568 = vmatprep.subr.mxu0 0.0
        %2569 = vmatpush1.msra.mxu0 0.0
        %2570 = vmatprep.subr.mxu0 0.0
        %2571 = vmatpush1.msra.mxu0 0.0
        %2572 = vmatprep.subr.mxu0 0.0
        %2573 = vmatpush1.msra.mxu0 0.0
        %2574 = vmatprep.subr.mxu0 0.0
        %2575 = vmatpush1.msra.mxu0 0.0
        %2576 = vmatprep.subr.mxu0 0.0
        %2577 = vmatpush1.msra.mxu0 0.0
        %2578 = vmatprep.subr.mxu0 0.0
        %2579 = vmatpush1.msra.mxu0 0.0
        %2580 = vmatprep.subr.mxu0 0.0
        %2581 = vmatpush1.msra.mxu0 0.0
        %2582 = vmatprep.subr.mxu0 0.0
        %2583 = vmatpush1.msra.mxu0 0.0
        %2584 = vmatprep.subr.mxu0 0.0
        %2585 = vmatpush1.msra.mxu0 0.0
        %2586 = vmatprep.subr.mxu0 0.0
        %2587 = vmatpush1.msra.mxu0 0.0
        %2588 = vmatprep.subr.mxu0 0.0
        %2589 = vmatpush1.msra.mxu0 0.0
        %2590 = vmatprep.subr.mxu0 0.0
        %2591 = vmatpush1.msra.mxu0 0.0
        %2592 = vmatprep.subr.mxu0 0.0
        %2593 = vmatpush1.msra.mxu0 0.0
        %2594 = vmatprep.subr.mxu0 0.0
        %2595 = vmatpush1.msra.mxu0 0.0
        %2596 = vmatprep.subr.mxu0 0.0
        %2597 = vmatpush1.msra.mxu0 0.0
        %2598 = vmatprep.subr.mxu0 0.0
        %2599 = vmatpush1.msra.mxu0 0.0
        %2600 = vmatprep.subr.mxu0 0.0
        %2601 = vmatpush1.msra.mxu0 0.0
        %2602 = vmatprep.subr.mxu0 0.0
        %2603 = vmatpush1.msra.mxu0 0.0
        %2604 = vmatprep.subr.mxu0 0.0
        %2605 = vmatpush1.msra.mxu0 0.0
        %2606 = vmatprep.subr.mxu0 0.0
        %2607 = vmatpush1.msra.mxu0 0.0
        %2608 = vmatprep.subr.mxu0 0.0
        %2609 = vmatpush1.msra.mxu0 0.0
        %2610 = vmatprep.subr.mxu0 0.0
        %2611 = vmatpush1.msra.mxu0 0.0
        %2612 = vmatprep.subr.mxu0 0.0
        %2613 = vmatpush1.msra.mxu0 0.0
        %2614 = vmatprep.subr.mxu0 0.0
        %2615 = vmatpush1.msra.mxu0 0.0
        %2616 = vmatprep.subr.mxu0 0.0
        %2617 = vmatpush1.msra.mxu0 0.0
        %2618 = vmatprep.subr.mxu0 0.0
        %2619 = vmatpush1.msra.mxu0 0.0
        %2620 = vmatprep.subr.mxu0 0.0
        %2621 = vmatpush1.msra.mxu0 0.0
        %2622 = vmatprep.subr.mxu0 0.0
        %2623 = vmatpush1.msra.mxu0 0.0
        %2624 = vmatprep.subr.mxu0 0.0
        %2625 = vmatpush1.msra.mxu0 0.0
        %2626 = vmatprep.subr.mxu0 0.0
        %2627 = vmatpush1.msra.mxu0 0.0
        %2628 = vmatprep.mubr.f32.mxu0 0.0
        %2629 = vmatmul.mubr.f32.gmra.mrb[0].mxu0 %v2560
        %v2630 = vpop.f32.mrb[0].mxu0
        %v2631 = vadd.f32 0.0, %v2630
        %v2632 = vpop.f32.mrb[0].mxu0
        %2633 = vmatprep.mubr.f32.mxu0 0.0
        %2634 = vmatmul.mubr.f32.gmra.mrb[0].mxu0 %v2562
        %v2635 = vpop.f32.mrb[0].mxu0
        %v2636 = vadd.f32 0.0, %v2635
        %v2637 = vpop.f32.mrb[0].mxu0
        %2638 = vdwg.mxu0
        %2639 = vmatprep.subr.mxu0 0.0
        %2640 = vmatpush1.msra.mxu0 %v2631
        %2641 = vmatprep.subr.mxu0 0.0
        %2642 = vmatpush1.msra.mxu0 %v2636
        %2643 = vmatprep.subr.mxu0 0.0
        %2644 = vmatpush1.msra.mxu0 0.0
        %2645 = vmatprep.subr.mxu0 0.0
        %2646 = vmatpush1.msra.mxu0 0.0
        %2647 = vmatprep.subr.mxu0 0.0
        %2648 = vmatpush1.msra.mxu0 0.0
        %2649 = vmatprep.subr.mxu0 0.0
        %2650 = vmatpush1.msra.mxu0 0.0
        %2651 = vmatprep.subr.mxu0 0.0
        %2652 = vmatpush1.msra.mxu0 0.0
        %2653 = vmatprep.subr.mxu0 0.0
        %2654 = vmatpush1.msra.mxu0 0.0
        %2655 = vmatprep.subr.mxu0 0.0
        %2656 = vmatpush1.msra.mxu0 0.0
        %2657 = vmatprep.subr.mxu0 0.0
        %2658 = vmatpush1.msra.mxu0 0.0
        %2659 = vmatprep.subr.mxu0 0.0
        %2660 = vmatpush1.msra.mxu0 0.0
        %2661 = vmatprep.subr.mxu0 0.0
        %2662 = vmatpush1.msra.mxu0 0.0
        %2663 = vmatprep.subr.mxu0 0.0
        %2664 = vmatpush1.msra.mxu0 0.0
        %2665 = vmatprep.subr.mxu0 0.0
        %2666 = vmatpush1.msra.mxu0 0.0
        %2667 = vmatprep.subr.mxu0 0.0
        %2668 = vmatpush1.msra.mxu0 0.0
        %2669 = vmatprep.subr.mxu0 0.0
        %2670 = vmatpush1.msra.mxu0 0.0
        %2671 = vmatprep.subr.mxu0 0.0
        %2672 = vmatpush1.msra.mxu0 0.0
        %2673 = vmatprep.subr.mxu0 0.0
        %2674 = vmatpush1.msra.mxu0 0.0
        %2675 = vmatprep.subr.mxu0 0.0
        %2676 = vmatpush1.msra.mxu0 0.0
        %2677 = vmatprep.subr.mxu0 0.0
        %2678 = vmatpush1.msra.mxu0 0.0
        %2679 = vmatprep.subr.mxu0 0.0
        %2680 = vmatpush1.msra.mxu0 0.0
        %2681 = vmatprep.subr.mxu0 0.0
        %2682 = vmatpush1.msra.mxu0 0.0
        %2683 = vmatprep.subr.mxu0 0.0
        %2684 = vmatpush1.msra.mxu0 0.0
        %2685 = vmatprep.subr.mxu0 0.0
        %2686 = vmatpush1.msra.mxu0 0.0
        %2687 = vmatprep.subr.mxu0 0.0
        %2688 = vmatpush1.msra.mxu0 0.0
        %2689 = vmatprep.subr.mxu0 0.0
        %2690 = vmatpush1.msra.mxu0 0.0
        %2691 = vmatprep.subr.mxu0 0.0
        %2692 = vmatpush1.msra.mxu0 0.0
        %2693 = vmatprep.subr.mxu0 0.0
        %2694 = vmatpush1.msra.mxu0 0.0
        %2695 = vmatprep.subr.mxu0 0.0
        %2696 = vmatpush1.msra.mxu0 0.0
        %2697 = vmatprep.subr.mxu0 0.0
        %2698 = vmatpush1.msra.mxu0 0.0
        %2699 = vmatprep.subr.mxu0 0.0
        %2700 = vmatpush1.msra.mxu0 0.0
        %2701 = vmatprep.subr.mxu0 0.0
        %2702 = vmatpush1.msra.mxu0 0.0
        %2703 = vmatprep.mubr.f32.mxu0 0.0
        %2704 = vmatmul.mubr.f32.gmra.mrb[0].mxu0 %v621
        %v2705 = vpop.f32.mrb[0].mxu0
        %v2706 = vadd.f32 0.0, %v2705
        %v2707 = vpop.f32.mrb[0].mxu0
        %2708 = vdwg.mxu0
        %v2710 = vcombine.high %v2706, %v2706
        %v2712 = vunpack.c.l.s4 1966171168
        %v2713 = vunpack.c.0.s8 %v2712
        %v2714 = vlaneseq
        %v2715 = vshrl.u32 %v2714, 7
        %v2716 = vsub.s32 %v2713, %v2715
        %v2717 = vrot.slane %v2706, %v2716
        %v2719 = vunpack.c.l.s4 1966171168
        %v2720 = vunpack.c.0.s8 %v2719
        %v2721 = vlaneseq
        %v2722 = vshrl.u32 %v2721, 7
        %v2723 = vsub.s32 %v2720, %v2722
        %v2724 = vrot.slane %v2710, %v2723
        %v2725 = vcombine.high %v2717, %v2717
        %v2726 = vcombine.high %v2724, %v2724
        %v2728 = vunpack.c.l.s4 1966171168
        %v2729 = vunpack.c.0.s8 %v2728
        %v2730 = vlaneseq
        %v2731 = vshrl.u32 %v2730, 7
        %v2732 = vsub.s32 %v2729, %v2731
        %v2733 = vrot.slane %v2717, %v2732
        %v2735 = vunpack.c.l.s4 1966171168
        %v2736 = vunpack.c.0.s8 %v2735
        %v2737 = vlaneseq
        %v2738 = vshrl.u32 %v2737, 7
        %v2739 = vsub.s32 %v2736, %v2738
        %v2740 = vrot.slane %v2724, %v2739
        %v2742 = vunpack.c.l.s4 1966171168
        %v2743 = vunpack.c.0.s8 %v2742
        %v2744 = vlaneseq
        %v2745 = vshrl.u32 %v2744, 7
        %v2746 = vsub.s32 %v2743, %v2745
        %v2747 = vrot.slane %v2725, %v2746
        %v2749 = vunpack.c.l.s4 1966171168
        %v2750 = vunpack.c.0.s8 %v2749
        %v2751 = vlaneseq
        %v2752 = vshrl.u32 %v2751, 7
        %v2753 = vsub.s32 %v2750, %v2752
        %v2754 = vrot.slane %v2726, %v2753
        %v2755 = vcombine.high %v2733, %v2733
        %v2756 = vcombine.high %v2740, %v2740
        %v2757 = vcombine.high %v2747, %v2747
        %v2758 = vcombine.high %v2754, %v2754
        %2767 = vst.msk [vmem:[%s260 + $0x5] sm:$0x1] %vm751, %v2733
        %2768 = vst.msk [vmem:[%s260 + $0xd] sm:$0x1] %vm751, %v2747
        %2769 = vst.msk [vmem:[%s260 + $0x15] sm:$0x1] %vm751, %v2755
        %2770 = vst.msk [vmem:[%s260 + $0x1d] sm:$0x1] %vm751, %v2757
        %2771 = vst.msk [vmem:[%s260 + $0x25] sm:$0x1] %vm751, %v2740
        %2772 = vst.msk [vmem:[%s260 + $0x2d] sm:$0x1] %vm751, %v2754
        %2773 = vst.msk [vmem:[%s260 + $0x35] sm:$0x1] %vm751, %v2756
        %2774 = vst.msk [vmem:[%s260 + $0x3d] sm:$0x1] %vm751, %v2758
        %v2775 = vld [vmem:[%s234 + $0xc] sm:$0x1]
        %v2776 = vld [vmem:[%s234 + $0x1c] sm:$0x1]
        %v2777 = vld [vmem:[%s234 + $0x2c] sm:$0x1]
        %v2778 = vld [vmem:[%s234 + $0x3c] sm:$0x1]
        %v2779 = vld [vmem:[%s234 + $0x4c] sm:$0x1]
        %v2780 = vld [vmem:[%s234 + $0x5c] sm:$0x1]
        %v2781 = vld [vmem:[%s234 + $0x6c] sm:$0x1]
        %v2782 = vld [vmem:[%s234 + $0x7c] sm:$0x1]
        %v2783 = vld [vmem:[%s234 + $0x8c] sm:$0x1]
        %v2784 = vld [vmem:[%s234 + $0x9c] sm:$0x1]
        %v2785 = vld [vmem:[%s234 + $0xac] sm:$0x1]
        %v2786 = vld [vmem:[%s234 + $0xbc] sm:$0x1]
        %v2787 = vld [vmem:[%s234 + $0xcc] sm:$0x1]
        %v2788 = vld [vmem:[%s234 + $0xdc] sm:$0x1]
        %v2789 = vld [vmem:[%s234 + $0xec] sm:$0x1]
        %v2790 = vld [vmem:[%s234 + $0xfc] sm:$0x1]
        %v2791 = vld [vmem:[%s234 + $0xd] sm:$0x1]
        %v2792 = vld [vmem:[%s234 + $0x1d] sm:$0x1]
        %v2793 = vld [vmem:[%s234 + $0x2d] sm:$0x1]
        %v2794 = vld [vmem:[%s234 + $0x3d] sm:$0x1]
        %v2795 = vld [vmem:[%s234 + $0x4d] sm:$0x1]
        %v2796 = vld [vmem:[%s234 + $0x5d] sm:$0x1]
        %v2797 = vld [vmem:[%s234 + $0x6d] sm:$0x1]
        %v2798 = vld [vmem:[%s234 + $0x7d] sm:$0x1]
        %v2799 = vld [vmem:[%s234 + $0x8d] sm:$0x1]
        %v2800 = vld [vmem:[%s234 + $0x9d] sm:$0x1]
        %v2801 = vld [vmem:[%s234 + $0xad] sm:$0x1]
        %v2802 = vld [vmem:[%s234 + $0xbd] sm:$0x1]
        %v2803 = vld [vmem:[%s234 + $0xcd] sm:$0x1]
        %v2804 = vld [vmem:[%s234 + $0xdd] sm:$0x1]
        %v2805 = vld [vmem:[%s234 + $0xed] sm:$0x1]
        %v2806 = vld [vmem:[%s234 + $0xfd] sm:$0x1]
        %v2807 = vmul.f32 %v2775, %v304
        %v2808 = vmul.f32 %v2776, %v309
        %v2809 = vmul.f32 %v2777, %v310
        %v2810 = vmul.f32 %v2778, %v311
        %v2811 = vmul.f32 %v2779, %v312
        %v2812 = vmul.f32 %v2780, %v313
        %v2813 = vmul.f32 %v2781, %v314
        %v2814 = vmul.f32 %v2782, %v315
        %v2815 = vmul.f32 %v2783, %v308
        %v2816 = vmul.f32 %v2784, %v316
        %v2817 = vmul.f32 %v2785, %v317
        %v2818 = vmul.f32 %v2786, %v318
        %v2819 = vmul.f32 %v2787, %v319
        %v2820 = vmul.f32 %v2788, %v320
        %v2821 = vmul.f32 %v2789, %v321
        %v2822 = vmul.f32 %v2790, %v322
        %v2823 = vadd.f32 %v2807, %v358
        %v2824 = vadd.f32 %v2808, %v363
        %v2825 = vadd.f32 %v2809, %v364
        %v2826 = vadd.f32 %v2810, %v365
        %v2827 = vadd.f32 %v2811, %v366
        %v2828 = vadd.f32 %v2812, %v367
        %v2829 = vadd.f32 %v2813, %v368
        %v2830 = vadd.f32 %v2814, %v369
        %v2831 = vadd.f32 %v2815, %v362
        %v2832 = vadd.f32 %v2816, %v370
        %v2833 = vadd.f32 %v2817, %v371
        %v2834 = vadd.f32 %v2818, %v372
        %v2835 = vadd.f32 %v2819, %v373
        %v2836 = vadd.f32 %v2820, %v374
        %v2837 = vadd.f32 %v2821, %v375
        %v2838 = vadd.f32 %v2822, %v376
        %v2839 = vmax.f32 %v2823, 0.0
        %v2840 = vmax.f32 %v2824, 0.0
        %v2841 = vmax.f32 %v2825, 0.0
        %v2842 = vmax.f32 %v2826, 0.0
        %v2843 = vmax.f32 %v2827, 0.0
        %v2844 = vmax.f32 %v2828, 0.0
        %v2845 = vmax.f32 %v2829, 0.0
        %v2846 = vmax.f32 %v2830, 0.0
        %v2847 = vmax.f32 %v2831, 0.0
        %v2848 = vmax.f32 %v2832, 0.0
        %v2849 = vmax.f32 %v2833, 0.0
        %v2850 = vmax.f32 %v2834, 0.0
        %v2851 = vmax.f32 %v2835, 0.0
        %v2852 = vmax.f32 %v2836, 0.0
        %v2853 = vmax.f32 %v2837, 0.0
        %v2854 = vmax.f32 %v2838, 0.0
        %v2855 = vmul.f32 %v2791, %v304
        %v2856 = vmul.f32 %v2792, %v309
        %v2857 = vmul.f32 %v2793, %v310
        %v2858 = vmul.f32 %v2794, %v311
        %v2859 = vmul.f32 %v2795, %v312
        %v2860 = vmul.f32 %v2796, %v313
        %v2861 = vmul.f32 %v2797, %v314
        %v2862 = vmul.f32 %v2798, %v315
        %v2863 = vmul.f32 %v2799, %v308
        %v2864 = vmul.f32 %v2800, %v316
        %v2865 = vmul.f32 %v2801, %v317
        %v2866 = vmul.f32 %v2802, %v318
        %v2867 = vmul.f32 %v2803, %v319
        %v2868 = vmul.f32 %v2804, %v320
        %v2869 = vmul.f32 %v2805, %v321
        %v2870 = vmul.f32 %v2806, %v322
        %v2871 = vadd.f32 %v2855, %v358
        %v2872 = vadd.f32 %v2856, %v363
        %v2873 = vadd.f32 %v2857, %v364
        %v2874 = vadd.f32 %v2858, %v365
        %v2875 = vadd.f32 %v2859, %v366
        %v2876 = vadd.f32 %v2860, %v367
        %v2877 = vadd.f32 %v2861, %v368
        %v2878 = vadd.f32 %v2862, %v369
        %v2879 = vadd.f32 %v2863, %v362
        %v2880 = vadd.f32 %v2864, %v370
        %v2881 = vadd.f32 %v2865, %v371
        %v2882 = vadd.f32 %v2866, %v372
        %v2883 = vadd.f32 %v2867, %v373
        %v2884 = vadd.f32 %v2868, %v374
        %v2885 = vadd.f32 %v2869, %v375
        %v2886 = vadd.f32 %v2870, %v376
        %v2887 = vmax.f32 %v2871, 0.0
        %v2888 = vmax.f32 %v2872, 0.0
        %v2889 = vmax.f32 %v2873, 0.0
        %v2890 = vmax.f32 %v2874, 0.0
        %v2891 = vmax.f32 %v2875, 0.0
        %v2892 = vmax.f32 %v2876, 0.0
        %v2893 = vmax.f32 %v2877, 0.0
        %v2894 = vmax.f32 %v2878, 0.0
        %v2895 = vmax.f32 %v2879, 0.0
        %v2896 = vmax.f32 %v2880, 0.0
        %v2897 = vmax.f32 %v2881, 0.0
        %v2898 = vmax.f32 %v2882, 0.0
        %v2899 = vmax.f32 %v2883, 0.0
        %v2900 = vmax.f32 %v2884, 0.0
        %v2901 = vmax.f32 %v2885, 0.0
        %v2902 = vmax.f32 %v2886, 0.0
        %v2903 = vadd.f32 %v2839, %v2887
        %v2904 = vadd.f32 %v2840, %v2888
        %v2905 = vadd.f32 %v2841, %v2889
        %v2906 = vadd.f32 %v2842, %v2890
        %v2907 = vadd.f32 %v2843, %v2891
        %v2908 = vadd.f32 %v2844, %v2892
        %v2909 = vadd.f32 %v2845, %v2893
        %v2910 = vadd.f32 %v2846, %v2894
        %v2911 = vadd.f32 %v2847, %v2895
        %v2912 = vadd.f32 %v2848, %v2896
        %v2913 = vadd.f32 %v2849, %v2897
        %v2914 = vadd.f32 %v2850, %v2898
        %v2915 = vadd.f32 %v2851, %v2899
        %v2916 = vadd.f32 %v2852, %v2900
        %v2917 = vadd.f32 %v2853, %v2901
        %v2918 = vadd.f32 %v2854, %v2902
        %v2935 = vrot.slane %v2904, 7
        %v2936 = vsel %vm506, %v2935, %v2903
        %v2937 = vrot.slane %v2905, 6
        %v2938 = vsel %vm509, %v2937, %v2936
        %v2939 = vrot.slane %v2906, 5
        %v2940 = vsel %vm512, %v2939, %v2938
        %v2941 = vrot.slane %v2907, 4
        %v2942 = vsel %vm515, %v2941, %v2940
        %v2943 = vrot.slane %v2908, 3
        %v2944 = vsel %vm518, %v2943, %v2942
        %v2945 = vrot.slane %v2909, 2
        %v2946 = vsel %vm521, %v2945, %v2944
        %v2947 = vrot.slane %v2910, 1
        %v2948 = vsel %vm524, %v2947, %v2946
        %v2949 = vrot.slane %v2912, 7
        %v2950 = vsel %vm506, %v2949, %v2911
        %v2951 = vrot.slane %v2913, 6
        %v2952 = vsel %vm509, %v2951, %v2950
        %v2953 = vrot.slane %v2914, 5
        %v2954 = vsel %vm512, %v2953, %v2952
        %v2955 = vrot.slane %v2915, 4
        %v2956 = vsel %vm515, %v2955, %v2954
        %v2957 = vrot.slane %v2916, 3
        %v2958 = vsel %vm518, %v2957, %v2956
        %v2959 = vrot.slane %v2917, 2
        %v2960 = vsel %vm521, %v2959, %v2958
        %v2961 = vrot.slane %v2918, 1
        %v2962 = vsel %vm524, %v2961, %v2960
        %v2963 = vsel %vm540, %v2948, 0
        %v2965 = vsel %vm540, %v2962, 0
        %2967 = vmatprep.subr.mxu0 0.0
        %2968 = vmatpush1.msra.mxu0 %v267
        %2969 = vmatprep.subr.mxu0 0.0
        %2970 = vmatpush1.msra.mxu0 %v268
        %2971 = vmatprep.subr.mxu0 0.0
        %2972 = vmatpush1.msra.mxu0 0.0
        %2973 = vmatprep.subr.mxu0 0.0
        %2974 = vmatpush1.msra.mxu0 0.0
        %2975 = vmatprep.subr.mxu0 0.0
        %2976 = vmatpush1.msra.mxu0 0.0
        %2977 = vmatprep.subr.mxu0 0.0
        %2978 = vmatpush1.msra.mxu0 0.0
        %2979 = vmatprep.subr.mxu0 0.0
        %2980 = vmatpush1.msra.mxu0 0.0
        %2981 = vmatprep.subr.mxu0 0.0
        %2982 = vmatpush1.msra.mxu0 0.0
        %2983 = vmatprep.subr.mxu0 0.0
        %2984 = vmatpush1.msra.mxu0 0.0
        %2985 = vmatprep.subr.mxu0 0.0
        %2986 = vmatpush1.msra.mxu0 0.0
        %2987 = vmatprep.subr.mxu0 0.0
        %2988 = vmatpush1.msra.mxu0 0.0
        %2989 = vmatprep.subr.mxu0 0.0
        %2990 = vmatpush1.msra.mxu0 0.0
        %2991 = vmatprep.subr.mxu0 0.0
        %2992 = vmatpush1.msra.mxu0 0.0
        %2993 = vmatprep.subr.mxu0 0.0
        %2994 = vmatpush1.msra.mxu0 0.0
        %2995 = vmatprep.subr.mxu0 0.0
        %2996 = vmatpush1.msra.mxu0 0.0
        %2997 = vmatprep.subr.mxu0 0.0
        %2998 = vmatpush1.msra.mxu0 0.0
        %2999 = vmatprep.subr.mxu0 0.0
        %3000 = vmatpush1.msra.mxu0 0.0
        %3001 = vmatprep.subr.mxu0 0.0
        %3002 = vmatpush1.msra.mxu0 0.0
        %3003 = vmatprep.subr.mxu0 0.0
        %3004 = vmatpush1.msra.mxu0 0.0
        %3005 = vmatprep.subr.mxu0 0.0
        %3006 = vmatpush1.msra.mxu0 0.0
        %3007 = vmatprep.subr.mxu0 0.0
        %3008 = vmatpush1.msra.mxu0 0.0
        %3009 = vmatprep.subr.mxu0 0.0
        %3010 = vmatpush1.msra.mxu0 0.0
        %3011 = vmatprep.subr.mxu0 0.0
        %3012 = vmatpush1.msra.mxu0 0.0
        %3013 = vmatprep.subr.mxu0 0.0
        %3014 = vmatpush1.msra.mxu0 0.0
        %3015 = vmatprep.subr.mxu0 0.0
        %3016 = vmatpush1.msra.mxu0 0.0
        %3017 = vmatprep.subr.mxu0 0.0
        %3018 = vmatpush1.msra.mxu0 0.0
        %3019 = vmatprep.subr.mxu0 0.0
        %3020 = vmatpush1.msra.mxu0 0.0
        %3021 = vmatprep.subr.mxu0 0.0
        %3022 = vmatpush1.msra.mxu0 0.0
        %3023 = vmatprep.subr.mxu0 0.0
        %3024 = vmatpush1.msra.mxu0 0.0
        %3025 = vmatprep.subr.mxu0 0.0
        %3026 = vmatpush1.msra.mxu0 0.0
        %3027 = vmatprep.subr.mxu0 0.0
        %3028 = vmatpush1.msra.mxu0 0.0
        %3029 = vmatprep.subr.mxu0 0.0
        %3030 = vmatpush1.msra.mxu0 0.0
        %3031 = vmatprep.mubr.f32.mxu0 0.0
        %3032 = vmatmul.mubr.f32.gmra.mrb[0].mxu0 %v2963
        %v3033 = vpop.f32.mrb[0].mxu0
        %v3034 = vadd.f32 0.0, %v3033
        %v3035 = vpop.f32.mrb[0].mxu0
        %3036 = vmatprep.mubr.f32.mxu0 0.0
        %3037 = vmatmul.mubr.f32.gmra.mrb[0].mxu0 %v2965
        %v3038 = vpop.f32.mrb[0].mxu0
        %v3039 = vadd.f32 0.0, %v3038
        %v3040 = vpop.f32.mrb[0].mxu0
        %3041 = vdwg.mxu0
        %3042 = vmatprep.subr.mxu0 0.0
        %3043 = vmatpush1.msra.mxu0 %v3034
        %3044 = vmatprep.subr.mxu0 0.0
        %3045 = vmatpush1.msra.mxu0 %v3039
        %3046 = vmatprep.subr.mxu0 0.0
        %3047 = vmatpush1.msra.mxu0 0.0
        %3048 = vmatprep.subr.mxu0 0.0
        %3049 = vmatpush1.msra.mxu0 0.0
        %3050 = vmatprep.subr.mxu0 0.0
        %3051 = vmatpush1.msra.mxu0 0.0
        %3052 = vmatprep.subr.mxu0 0.0
        %3053 = vmatpush1.msra.mxu0 0.0
        %3054 = vmatprep.subr.mxu0 0.0
        %3055 = vmatpush1.msra.mxu0 0.0
        %3056 = vmatprep.subr.mxu0 0.0
        %3057 = vmatpush1.msra.mxu0 0.0
        %3058 = vmatprep.subr.mxu0 0.0
        %3059 = vmatpush1.msra.mxu0 0.0
        %3060 = vmatprep.subr.mxu0 0.0
        %3061 = vmatpush1.msra.mxu0 0.0
        %3062 = vmatprep.subr.mxu0 0.0
        %3063 = vmatpush1.msra.mxu0 0.0
        %3064 = vmatprep.subr.mxu0 0.0
        %3065 = vmatpush1.msra.mxu0 0.0
        %3066 = vmatprep.subr.mxu0 0.0
        %3067 = vmatpush1.msra.mxu0 0.0
        %3068 = vmatprep.subr.mxu0 0.0
        %3069 = vmatpush1.msra.mxu0 0.0
        %3070 = vmatprep.subr.mxu0 0.0
        %3071 = vmatpush1.msra.mxu0 0.0
        %3072 = vmatprep.subr.mxu0 0.0
        %3073 = vmatpush1.msra.mxu0 0.0
        %3074 = vmatprep.subr.mxu0 0.0
        %3075 = vmatpush1.msra.mxu0 0.0
        %3076 = vmatprep.subr.mxu0 0.0
        %3077 = vmatpush1.msra.mxu0 0.0
        %3078 = vmatprep.subr.mxu0 0.0
        %3079 = vmatpush1.msra.mxu0 0.0
        %3080 = vmatprep.subr.mxu0 0.0
        %3081 = vmatpush1.msra.mxu0 0.0
        %3082 = vmatprep.subr.mxu0 0.0
        %3083 = vmatpush1.msra.mxu0 0.0
        %3084 = vmatprep.subr.mxu0 0.0
        %3085 = vmatpush1.msra.mxu0 0.0
        %3086 = vmatprep.subr.mxu0 0.0
        %3087 = vmatpush1.msra.mxu0 0.0
        %3088 = vmatprep.subr.mxu0 0.0
        %3089 = vmatpush1.msra.mxu0 0.0
        %3090 = vmatprep.subr.mxu0 0.0
        %3091 = vmatpush1.msra.mxu0 0.0
        %3092 = vmatprep.subr.mxu0 0.0
        %3093 = vmatpush1.msra.mxu0 0.0
        %3094 = vmatprep.subr.mxu0 0.0
        %3095 = vmatpush1.msra.mxu0 0.0
        %3096 = vmatprep.subr.mxu0 0.0
        %3097 = vmatpush1.msra.mxu0 0.0
        %3098 = vmatprep.subr.mxu0 0.0
        %3099 = vmatpush1.msra.mxu0 0.0
        %3100 = vmatprep.subr.mxu0 0.0
        %3101 = vmatpush1.msra.mxu0 0.0
        %3102 = vmatprep.subr.mxu0 0.0
        %3103 = vmatpush1.msra.mxu0 0.0
        %3104 = vmatprep.subr.mxu0 0.0
        %3105 = vmatpush1.msra.mxu0 0.0
        %3106 = vmatprep.mubr.f32.mxu0 0.0
        %3107 = vmatmul.mubr.f32.gmra.mrb[0].mxu0 %v621
        %v3108 = vpop.f32.mrb[0].mxu0
        %v3109 = vadd.f32 0.0, %v3108
        %v3110 = vpop.f32.mrb[0].mxu0
        %3111 = vdwg.mxu0
        %v3113 = vcombine.high %v3109, %v3109
        %v3115 = vunpack.c.l.s4 1966171168
        %v3116 = vunpack.c.0.s8 %v3115
        %v3117 = vlaneseq
        %v3118 = vshrl.u32 %v3117, 7
        %v3119 = vsub.s32 %v3116, %v3118
        %v3120 = vrot.slane %v3109, %v3119
        %v3122 = vunpack.c.l.s4 1966171168
        %v3123 = vunpack.c.0.s8 %v3122
        %v3124 = vlaneseq
        %v3125 = vshrl.u32 %v3124, 7
        %v3126 = vsub.s32 %v3123, %v3125
        %v3127 = vrot.slane %v3113, %v3126
        %v3128 = vcombine.high %v3120, %v3120
        %v3129 = vcombine.high %v3127, %v3127
        %v3131 = vunpack.c.l.s4 1966171168
        %v3132 = vunpack.c.0.s8 %v3131
        %v3133 = vlaneseq
        %v3134 = vshrl.u32 %v3133, 7
        %v3135 = vsub.s32 %v3132, %v3134
        %v3136 = vrot.slane %v3120, %v3135
        %v3138 = vunpack.c.l.s4 1966171168
        %v3139 = vunpack.c.0.s8 %v3138
        %v3140 = vlaneseq
        %v3141 = vshrl.u32 %v3140, 7
        %v3142 = vsub.s32 %v3139, %v3141
        %v3143 = vrot.slane %v3127, %v3142
        %v3145 = vunpack.c.l.s4 1966171168
        %v3146 = vunpack.c.0.s8 %v3145
        %v3147 = vlaneseq
        %v3148 = vshrl.u32 %v3147, 7
        %v3149 = vsub.s32 %v3146, %v3148
        %v3150 = vrot.slane %v3128, %v3149
        %v3152 = vunpack.c.l.s4 1966171168
        %v3153 = vunpack.c.0.s8 %v3152
        %v3154 = vlaneseq
        %v3155 = vshrl.u32 %v3154, 7
        %v3156 = vsub.s32 %v3153, %v3155
        %v3157 = vrot.slane %v3129, %v3156
        %v3158 = vcombine.high %v3136, %v3136
        %v3159 = vcombine.high %v3143, %v3143
        %v3160 = vcombine.high %v3150, %v3150
        %v3161 = vcombine.high %v3157, %v3157
        %3170 = vst.msk [vmem:[%s260 + $0x6] sm:$0x1] %vm751, %v3136
        %3171 = vst.msk [vmem:[%s260 + $0xe] sm:$0x1] %vm751, %v3150
        %3172 = vst.msk [vmem:[%s260 + $0x16] sm:$0x1] %vm751, %v3158
        %3173 = vst.msk [vmem:[%s260 + $0x1e] sm:$0x1] %vm751, %v3160
        %3174 = vst.msk [vmem:[%s260 + $0x26] sm:$0x1] %vm751, %v3143
        %3175 = vst.msk [vmem:[%s260 + $0x2e] sm:$0x1] %vm751, %v3157
        %3176 = vst.msk [vmem:[%s260 + $0x36] sm:$0x1] %vm751, %v3159
        %3177 = vst.msk [vmem:[%s260 + $0x3e] sm:$0x1] %vm751, %v3161
        %v3178 = vld [vmem:[%s234 + $0xe] sm:$0x1]
        %v3179 = vld [vmem:[%s234 + $0x1e] sm:$0x1]
        %v3180 = vld [vmem:[%s234 + $0x2e] sm:$0x1]
        %v3181 = vld [vmem:[%s234 + $0x3e] sm:$0x1]
        %v3182 = vld [vmem:[%s234 + $0x4e] sm:$0x1]
        %v3183 = vld [vmem:[%s234 + $0x5e] sm:$0x1]
        %v3184 = vld [vmem:[%s234 + $0x6e] sm:$0x1]
        %v3185 = vld [vmem:[%s234 + $0x7e] sm:$0x1]
        %v3186 = vld [vmem:[%s234 + $0x8e] sm:$0x1]
        %v3187 = vld [vmem:[%s234 + $0x9e] sm:$0x1]
        %v3188 = vld [vmem:[%s234 + $0xae] sm:$0x1]
        %v3189 = vld [vmem:[%s234 + $0xbe] sm:$0x1]
        %v3190 = vld [vmem:[%s234 + $0xce] sm:$0x1]
        %v3191 = vld [vmem:[%s234 + $0xde] sm:$0x1]
        %v3192 = vld [vmem:[%s234 + $0xee] sm:$0x1]
        %v3193 = vld [vmem:[%s234 + $0xfe] sm:$0x1]
        %v3194 = vld [vmem:[%s234 + $0xf] sm:$0x1]
        %v3195 = vld [vmem:[%s234 + $0x1f] sm:$0x1]
        %v3196 = vld [vmem:[%s234 + $0x2f] sm:$0x1]
        %v3197 = vld [vmem:[%s234 + $0x3f] sm:$0x1]
        %v3198 = vld [vmem:[%s234 + $0x4f] sm:$0x1]
        %v3199 = vld [vmem:[%s234 + $0x5f] sm:$0x1]
        %v3200 = vld [vmem:[%s234 + $0x6f] sm:$0x1]
        %v3201 = vld [vmem:[%s234 + $0x7f] sm:$0x1]
        %v3202 = vld [vmem:[%s234 + $0x8f] sm:$0x1]
        %v3203 = vld [vmem:[%s234 + $0x9f] sm:$0x1]
        %v3204 = vld [vmem:[%s234 + $0xaf] sm:$0x1]
        %v3205 = vld [vmem:[%s234 + $0xbf] sm:$0x1]
        %v3206 = vld [vmem:[%s234 + $0xcf] sm:$0x1]
        %v3207 = vld [vmem:[%s234 + $0xdf] sm:$0x1]
        %v3208 = vld [vmem:[%s234 + $0xef] sm:$0x1]
        %v3209 = vld [vmem:[%s234 + $0xff] sm:$0x1]
        %v3210 = vmul.f32 %v3178, %v304
        %v3211 = vmul.f32 %v3179, %v309
        %v3212 = vmul.f32 %v3180, %v310
        %v3213 = vmul.f32 %v3181, %v311
        %v3214 = vmul.f32 %v3182, %v312
        %v3215 = vmul.f32 %v3183, %v313
        %v3216 = vmul.f32 %v3184, %v314
        %v3217 = vmul.f32 %v3185, %v315
        %v3218 = vmul.f32 %v3186, %v308
        %v3219 = vmul.f32 %v3187, %v316
        %v3220 = vmul.f32 %v3188, %v317
        %v3221 = vmul.f32 %v3189, %v318
        %v3222 = vmul.f32 %v3190, %v319
        %v3223 = vmul.f32 %v3191, %v320
        %v3224 = vmul.f32 %v3192, %v321
        %v3225 = vmul.f32 %v3193, %v322
        %v3226 = vadd.f32 %v3210, %v358
        %v3227 = vadd.f32 %v3211, %v363
        %v3228 = vadd.f32 %v3212, %v364
        %v3229 = vadd.f32 %v3213, %v365
        %v3230 = vadd.f32 %v3214, %v366
        %v3231 = vadd.f32 %v3215, %v367
        %v3232 = vadd.f32 %v3216, %v368
        %v3233 = vadd.f32 %v3217, %v369
        %v3234 = vadd.f32 %v3218, %v362
        %v3235 = vadd.f32 %v3219, %v370
        %v3236 = vadd.f32 %v3220, %v371
        %v3237 = vadd.f32 %v3221, %v372
        %v3238 = vadd.f32 %v3222, %v373
        %v3239 = vadd.f32 %v3223, %v374
        %v3240 = vadd.f32 %v3224, %v375
        %v3241 = vadd.f32 %v3225, %v376
        %v3242 = vmax.f32 %v3226, 0.0
        %v3243 = vmax.f32 %v3227, 0.0
        %v3244 = vmax.f32 %v3228, 0.0
        %v3245 = vmax.f32 %v3229, 0.0
        %v3246 = vmax.f32 %v3230, 0.0
        %v3247 = vmax.f32 %v3231, 0.0
        %v3248 = vmax.f32 %v3232, 0.0
        %v3249 = vmax.f32 %v3233, 0.0
        %v3250 = vmax.f32 %v3234, 0.0
        %v3251 = vmax.f32 %v3235, 0.0
        %v3252 = vmax.f32 %v3236, 0.0
        %v3253 = vmax.f32 %v3237, 0.0
        %v3254 = vmax.f32 %v3238, 0.0
        %v3255 = vmax.f32 %v3239, 0.0
        %v3256 = vmax.f32 %v3240, 0.0
        %v3257 = vmax.f32 %v3241, 0.0
        %v3258 = vmul.f32 %v3194, %v304
        %v3259 = vmul.f32 %v3195, %v309
        %v3260 = vmul.f32 %v3196, %v310
        %v3261 = vmul.f32 %v3197, %v311
        %v3262 = vmul.f32 %v3198, %v312
        %v3263 = vmul.f32 %v3199, %v313
        %v3264 = vmul.f32 %v3200, %v314
        %v3265 = vmul.f32 %v3201, %v315
        %v3266 = vmul.f32 %v3202, %v308
        %v3267 = vmul.f32 %v3203, %v316
        %v3268 = vmul.f32 %v3204, %v317
        %v3269 = vmul.f32 %v3205, %v318
        %v3270 = vmul.f32 %v3206, %v319
        %v3271 = vmul.f32 %v3207, %v320
        %v3272 = vmul.f32 %v3208, %v321
        %v3273 = vmul.f32 %v3209, %v322
        %v3274 = vadd.f32 %v3258, %v358
        %v3275 = vadd.f32 %v3259, %v363
        %v3276 = vadd.f32 %v3260, %v364
        %v3277 = vadd.f32 %v3261, %v365
        %v3278 = vadd.f32 %v3262, %v366
        %v3279 = vadd.f32 %v3263, %v367
        %v3280 = vadd.f32 %v3264, %v368
        %v3281 = vadd.f32 %v3265, %v369
        %v3282 = vadd.f32 %v3266, %v362
        %v3283 = vadd.f32 %v3267, %v370
        %v3284 = vadd.f32 %v3268, %v371
        %v3285 = vadd.f32 %v3269, %v372
        %v3286 = vadd.f32 %v3270, %v373
        %v3287 = vadd.f32 %v3271, %v374
        %v3288 = vadd.f32 %v3272, %v375
        %v3289 = vadd.f32 %v3273, %v376
        %v3290 = vmax.f32 %v3274, 0.0
        %v3291 = vmax.f32 %v3275, 0.0
        %v3292 = vmax.f32 %v3276, 0.0
        %v3293 = vmax.f32 %v3277, 0.0
        %v3294 = vmax.f32 %v3278, 0.0
        %v3295 = vmax.f32 %v3279, 0.0
        %v3296 = vmax.f32 %v3280, 0.0
        %v3297 = vmax.f32 %v3281, 0.0
        %v3298 = vmax.f32 %v3282, 0.0
        %v3299 = vmax.f32 %v3283, 0.0
        %v3300 = vmax.f32 %v3284, 0.0
        %v3301 = vmax.f32 %v3285, 0.0
        %v3302 = vmax.f32 %v3286, 0.0
        %v3303 = vmax.f32 %v3287, 0.0
        %v3304 = vmax.f32 %v3288, 0.0
        %v3305 = vmax.f32 %v3289, 0.0
        %v3306 = vadd.f32 %v3242, %v3290
        %v3307 = vadd.f32 %v3243, %v3291
        %v3308 = vadd.f32 %v3244, %v3292
        %v3309 = vadd.f32 %v3245, %v3293
        %v3310 = vadd.f32 %v3246, %v3294
        %v3311 = vadd.f32 %v3247, %v3295
        %v3312 = vadd.f32 %v3248, %v3296
        %v3313 = vadd.f32 %v3249, %v3297
        %v3314 = vadd.f32 %v3250, %v3298
        %v3315 = vadd.f32 %v3251, %v3299
        %v3316 = vadd.f32 %v3252, %v3300
        %v3317 = vadd.f32 %v3253, %v3301
        %v3318 = vadd.f32 %v3254, %v3302
        %v3319 = vadd.f32 %v3255, %v3303
        %v3320 = vadd.f32 %v3256, %v3304
        %v3321 = vadd.f32 %v3257, %v3305
        %v3338 = vrot.slane %v3307, 7
        %v3339 = vsel %vm506, %v3338, %v3306
        %v3340 = vrot.slane %v3308, 6
        %v3341 = vsel %vm509, %v3340, %v3339
        %v3342 = vrot.slane %v3309, 5
        %v3343 = vsel %vm512, %v3342, %v3341
        %v3344 = vrot.slane %v3310, 4
        %v3345 = vsel %vm515, %v3344, %v3343
        %v3346 = vrot.slane %v3311, 3
        %v3347 = vsel %vm518, %v3346, %v3345
        %v3348 = vrot.slane %v3312, 2
        %v3349 = vsel %vm521, %v3348, %v3347
        %v3350 = vrot.slane %v3313, 1
        %v3351 = vsel %vm524, %v3350, %v3349
        %v3352 = vrot.slane %v3315, 7
        %v3353 = vsel %vm506, %v3352, %v3314
        %v3354 = vrot.slane %v3316, 6
        %v3355 = vsel %vm509, %v3354, %v3353
        %v3356 = vrot.slane %v3317, 5
        %v3357 = vsel %vm512, %v3356, %v3355
        %v3358 = vrot.slane %v3318, 4
        %v3359 = vsel %vm515, %v3358, %v3357
        %v3360 = vrot.slane %v3319, 3
        %v3361 = vsel %vm518, %v3360, %v3359
        %v3362 = vrot.slane %v3320, 2
        %v3363 = vsel %vm521, %v3362, %v3361
        %v3364 = vrot.slane %v3321, 1
        %v3365 = vsel %vm524, %v3364, %v3363
        %v3366 = vsel %vm540, %v3351, 0
        %v3368 = vsel %vm540, %v3365, 0
        %3370 = vmatprep.subr.mxu0 0.0
        %3371 = vmatpush1.msra.mxu0 %v267
        %3372 = vmatprep.subr.mxu0 0.0
        %3373 = vmatpush1.msra.mxu0 %v268
        %3374 = vmatprep.subr.mxu0 0.0
        %3375 = vmatpush1.msra.mxu0 0.0
        %3376 = vmatprep.subr.mxu0 0.0
        %3377 = vmatpush1.msra.mxu0 0.0
        %3378 = vmatprep.subr.mxu0 0.0
        %3379 = vmatpush1.msra.mxu0 0.0
        %3380 = vmatprep.subr.mxu0 0.0
        %3381 = vmatpush1.msra.mxu0 0.0
        %3382 = vmatprep.subr.mxu0 0.0
        %3383 = vmatpush1.msra.mxu0 0.0
        %3384 = vmatprep.subr.mxu0 0.0
        %3385 = vmatpush1.msra.mxu0 0.0
        %3386 = vmatprep.subr.mxu0 0.0
        %3387 = vmatpush1.msra.mxu0 0.0
        %3388 = vmatprep.subr.mxu0 0.0
        %3389 = vmatpush1.msra.mxu0 0.0
        %3390 = vmatprep.subr.mxu0 0.0
        %3391 = vmatpush1.msra.mxu0 0.0
        %3392 = vmatprep.subr.mxu0 0.0
        %3393 = vmatpush1.msra.mxu0 0.0
        %3394 = vmatprep.subr.mxu0 0.0
        %3395 = vmatpush1.msra.mxu0 0.0
        %3396 = vmatprep.subr.mxu0 0.0
        %3397 = vmatpush1.msra.mxu0 0.0
        %3398 = vmatprep.subr.mxu0 0.0
        %3399 = vmatpush1.msra.mxu0 0.0
        %3400 = vmatprep.subr.mxu0 0.0
        %3401 = vmatpush1.msra.mxu0 0.0
        %3402 = vmatprep.subr.mxu0 0.0
        %3403 = vmatpush1.msra.mxu0 0.0
        %3404 = vmatprep.subr.mxu0 0.0
        %3405 = vmatpush1.msra.mxu0 0.0
        %3406 = vmatprep.subr.mxu0 0.0
        %3407 = vmatpush1.msra.mxu0 0.0
        %3408 = vmatprep.subr.mxu0 0.0
        %3409 = vmatpush1.msra.mxu0 0.0
        %3410 = vmatprep.subr.mxu0 0.0
        %3411 = vmatpush1.msra.mxu0 0.0
        %3412 = vmatprep.subr.mxu0 0.0
        %3413 = vmatpush1.msra.mxu0 0.0
        %3414 = vmatprep.subr.mxu0 0.0
        %3415 = vmatpush1.msra.mxu0 0.0
        %3416 = vmatprep.subr.mxu0 0.0
        %3417 = vmatpush1.msra.mxu0 0.0
        %3418 = vmatprep.subr.mxu0 0.0
        %3419 = vmatpush1.msra.mxu0 0.0
        %3420 = vmatprep.subr.mxu0 0.0
        %3421 = vmatpush1.msra.mxu0 0.0
        %3422 = vmatprep.subr.mxu0 0.0
        %3423 = vmatpush1.msra.mxu0 0.0
        %3424 = vmatprep.subr.mxu0 0.0
        %3425 = vmatpush1.msra.mxu0 0.0
        %3426 = vmatprep.subr.mxu0 0.0
        %3427 = vmatpush1.msra.mxu0 0.0
        %3428 = vmatprep.subr.mxu0 0.0
        %3429 = vmatpush1.msra.mxu0 0.0
        %3430 = vmatprep.subr.mxu0 0.0
        %3431 = vmatpush1.msra.mxu0 0.0
        %3432 = vmatprep.subr.mxu0 0.0
        %3433 = vmatpush1.msra.mxu0 0.0
        %3434 = vmatprep.mubr.f32.mxu0 0.0
        %3435 = vmatmul.mubr.f32.gmra.mrb[0].mxu0 %v3366
        %v3436 = vpop.f32.mrb[0].mxu0
        %v3437 = vadd.f32 0.0, %v3436
        %v3438 = vpop.f32.mrb[0].mxu0
        %3439 = vmatprep.mubr.f32.mxu0 0.0
        %3440 = vmatmul.mubr.f32.gmra.mrb[0].mxu0 %v3368
        %v3441 = vpop.f32.mrb[0].mxu0
        %v3442 = vadd.f32 0.0, %v3441
        %v3443 = vpop.f32.mrb[0].mxu0
        %3444 = vdwg.mxu0
        %3445 = vmatprep.subr.mxu0 0.0
        %3446 = vmatpush1.msra.mxu0 %v3437
        %3447 = vmatprep.subr.mxu0 0.0
        %3448 = vmatpush1.msra.mxu0 %v3442
        %3449 = vmatprep.subr.mxu0 0.0
        %3450 = vmatpush1.msra.mxu0 0.0
        %3451 = vmatprep.subr.mxu0 0.0
        %3452 = vmatpush1.msra.mxu0 0.0
        %3453 = vmatprep.subr.mxu0 0.0
        %3454 = vmatpush1.msra.mxu0 0.0
        %3455 = vmatprep.subr.mxu0 0.0
        %3456 = vmatpush1.msra.mxu0 0.0
        %3457 = vmatprep.subr.mxu0 0.0
        %3458 = vmatpush1.msra.mxu0 0.0
        %3459 = vmatprep.subr.mxu0 0.0
        %3460 = vmatpush1.msra.mxu0 0.0
        %3461 = vmatprep.subr.mxu0 0.0
        %3462 = vmatpush1.msra.mxu0 0.0
        %3463 = vmatprep.subr.mxu0 0.0
        %3464 = vmatpush1.msra.mxu0 0.0
        %3465 = vmatprep.subr.mxu0 0.0
        %3466 = vmatpush1.msra.mxu0 0.0
        %3467 = vmatprep.subr.mxu0 0.0
        %3468 = vmatpush1.msra.mxu0 0.0
        %3469 = vmatprep.subr.mxu0 0.0
        %3470 = vmatpush1.msra.mxu0 0.0
        %3471 = vmatprep.subr.mxu0 0.0
        %3472 = vmatpush1.msra.mxu0 0.0
        %3473 = vmatprep.subr.mxu0 0.0
        %3474 = vmatpush1.msra.mxu0 0.0
        %3475 = vmatprep.subr.mxu0 0.0
        %3476 = vmatpush1.msra.mxu0 0.0
        %3477 = vmatprep.subr.mxu0 0.0
        %3478 = vmatpush1.msra.mxu0 0.0
        %3479 = vmatprep.subr.mxu0 0.0
        %3480 = vmatpush1.msra.mxu0 0.0
        %3481 = vmatprep.subr.mxu0 0.0
        %3482 = vmatpush1.msra.mxu0 0.0
        %3483 = vmatprep.subr.mxu0 0.0
        %3484 = vmatpush1.msra.mxu0 0.0
        %3485 = vmatprep.subr.mxu0 0.0
        %3486 = vmatpush1.msra.mxu0 0.0
        %3487 = vmatprep.subr.mxu0 0.0
        %3488 = vmatpush1.msra.mxu0 0.0
        %3489 = vmatprep.subr.mxu0 0.0
        %3490 = vmatpush1.msra.mxu0 0.0
        %3491 = vmatprep.subr.mxu0 0.0
        %3492 = vmatpush1.msra.mxu0 0.0
        %3493 = vmatprep.subr.mxu0 0.0
        %3494 = vmatpush1.msra.mxu0 0.0
        %3495 = vmatprep.subr.mxu0 0.0
        %3496 = vmatpush1.msra.mxu0 0.0
        %3497 = vmatprep.subr.mxu0 0.0
        %3498 = vmatpush1.msra.mxu0 0.0
        %3499 = vmatprep.subr.mxu0 0.0
        %3500 = vmatpush1.msra.mxu0 0.0
        %3501 = vmatprep.subr.mxu0 0.0
        %3502 = vmatpush1.msra.mxu0 0.0
        %3503 = vmatprep.subr.mxu0 0.0
        %3504 = vmatpush1.msra.mxu0 0.0
        %3505 = vmatprep.subr.mxu0 0.0
        %3506 = vmatpush1.msra.mxu0 0.0
        %3507 = vmatprep.subr.mxu0 0.0
        %3508 = vmatpush1.msra.mxu0 0.0
        %3509 = vmatprep.mubr.f32.mxu0 0.0
        %3510 = vmatmul.mubr.f32.gmra.mrb[0].mxu0 %v621
        %v3511 = vpop.f32.mrb[0].mxu0
        %v3512 = vadd.f32 0.0, %v3511
        %v3513 = vpop.f32.mrb[0].mxu0
        %3514 = vdwg.mxu0
        %v3516 = vcombine.high %v3512, %v3512
        %v3518 = vunpack.c.l.s4 1966171168
        %v3519 = vunpack.c.0.s8 %v3518
        %v3520 = vlaneseq
        %v3521 = vshrl.u32 %v3520, 7
        %v3522 = vsub.s32 %v3519, %v3521
        %v3523 = vrot.slane %v3512, %v3522
        %v3525 = vunpack.c.l.s4 1966171168
        %v3526 = vunpack.c.0.s8 %v3525
        %v3527 = vlaneseq
        %v3528 = vshrl.u32 %v3527, 7
        %v3529 = vsub.s32 %v3526, %v3528
        %v3530 = vrot.slane %v3516, %v3529
        %v3531 = vcombine.high %v3523, %v3523
        %v3532 = vcombine.high %v3530, %v3530
        %v3534 = vunpack.c.l.s4 1966171168
        %v3535 = vunpack.c.0.s8 %v3534
        %v3536 = vlaneseq
        %v3537 = vshrl.u32 %v3536, 7
        %v3538 = vsub.s32 %v3535, %v3537
        %v3539 = vrot.slane %v3523, %v3538
        %v3541 = vunpack.c.l.s4 1966171168
        %v3542 = vunpack.c.0.s8 %v3541
        %v3543 = vlaneseq
        %v3544 = vshrl.u32 %v3543, 7
        %v3545 = vsub.s32 %v3542, %v3544
        %v3546 = vrot.slane %v3530, %v3545
        %v3548 = vunpack.c.l.s4 1966171168
        %v3549 = vunpack.c.0.s8 %v3548
        %v3550 = vlaneseq
        %v3551 = vshrl.u32 %v3550, 7
        %v3552 = vsub.s32 %v3549, %v3551
        %v3553 = vrot.slane %v3531, %v3552
        %v3555 = vunpack.c.l.s4 1966171168
        %v3556 = vunpack.c.0.s8 %v3555
        %v3557 = vlaneseq
        %v3558 = vshrl.u32 %v3557, 7
        %v3559 = vsub.s32 %v3556, %v3558
        %v3560 = vrot.slane %v3532, %v3559
        %v3561 = vcombine.high %v3539, %v3539
        %v3562 = vcombine.high %v3546, %v3546
        %v3563 = vcombine.high %v3553, %v3553
        %v3564 = vcombine.high %v3560, %v3560
        %3573 = vst.msk [vmem:[%s260 + $0x7] sm:$0x1] %vm751, %v3539
        %3574 = vst.msk [vmem:[%s260 + $0xf] sm:$0x1] %vm751, %v3553
        %3575 = vst.msk [vmem:[%s260 + $0x17] sm:$0x1] %vm751, %v3561
        %3576 = vst.msk [vmem:[%s260 + $0x1f] sm:$0x1] %vm751, %v3563
        %3577 = vst.msk [vmem:[%s260 + $0x27] sm:$0x1] %vm751, %v3546
        %3578 = vst.msk [vmem:[%s260 + $0x2f] sm:$0x1] %vm751, %v3560
        %3579 = vst.msk [vmem:[%s260 + $0x37] sm:$0x1] %vm751, %v3562
        %3580 = vst.msk [vmem:[%s260 + $0x3f] sm:$0x1] %vm751, %v3564
        %s3581 = sand.u32 %s156, 1
        %s3582 = scalar_lea.sflag [#allocation4], %s3581
        %s3583 = sand.u32 %s156, 1
        %s3584 = smul.addr %s3583, 64
        %s3585 = scalar_lea.vmem [#allocation5], %s3584
        // Predicated region
        $region45: #{tpu_custom_call.1} parent=39 // pred_check
          %p3586 = pneg %p166
        $region46: #{tpu_custom_call.1} parent=39 // pred_check_branch
          %3588 = sbr.rel (%p3586) target = $region48
        $region47: #{tpu_custom_call.1} parent=39 // pred_region
          %s3590 = ssub.s32 1024, 1024
          %3591 = vsyncadd %s3582, %s3590
          %s3592 = smul.addr %s26, 8
          %s3593 = sadd.s32 %s27, %s3592
          %s3594 = smul.addr %s3593, 128
          %s3595 = scalar_lea.hbm %s5, %s3594
          %s3596 = sshll.u32 %s3585, 4
          %s3597 = int_to_ptr.vmem [resolvable:$true] %s3596
          %3602 = dma.vmem_to_hbm [thread:$0]  %s3597, 1024, %s3595, %s3582, 128, 128, 8
        $region48: #{tpu_custom_call.1} parent=39 // pred_fallthru
          _
      $region40: #{tpu_custom_call.1} parent=5 // pred_fallthru
        _
      %p3603 = scmp.le.s32.totalorder 2, %s17
      // Predicated region
      $region49: #{tpu_custom_call.1} parent=5 // pred_check
        %p3604 = pneg %p3603
      $region50: #{tpu_custom_call.1} parent=5 // pred_check_branch
        %3606 = sbr.rel (%p3604) target = $region52
      $region51: #{tpu_custom_call.1} parent=5 // pred_region
        %s3607 = ssub.s32 %s17, 2
        // Predicated region
        $region53: #{tpu_custom_call.1} parent=51 // pred_check
          %p3608 = pneg %p172
        $region54: #{tpu_custom_call.1} parent=51 // pred_check_branch
          %3610 = sbr.rel (%p3608) target = $region56
        $region55: #{tpu_custom_call.1} parent=51 // pred_region
          %s3611 = sand.u32 %s157, 1
          %s3612 = scalar_lea.sflag [#allocation4], %s3611
          %s3613 = sand.u32 %s157, 1
          %s3614 = smul.addr %s3613, 64
          %s3615 = scalar_lea.vmem [#allocation5], %s3614
          %3616 = dma.done %s3612, 1024
        $region56: #{tpu_custom_call.1} parent=51 // pred_fallthru
          _
      $region52: #{tpu_custom_call.1} parent=5 // pred_fallthru
        _
    $region6: #{tpu_custom_call.1} parent=1 // loop_footer
      %s21 = sadd.s32 1, %s17
    $region7: #{tpu_custom_call.1} parent=1 // loop_footer_branch
      %16 = sbr.rel target = $region3
    $region8: #{tpu_custom_call.1} parent=1 // loop_exit
      _
    %3617 = vsyncpa [#allocation3], 1
    %s3618 = scalar_lea.sflag [#allocation3], 1
    %3619 = vsyncpa %s3618, 1
    %3620 = vsyncpa [#allocation4], 1
    %s3621 = scalar_lea.sflag [#allocation4], 1
    %3622 = vsyncpa %s3621, 1

</llo_original>
